<compile_context>
chip_gen: v7x
topology: tpu7x:2x2x1
jax: 0.10.0
libtpu: 0.0.40
codegen_flags: <defaults>
</compile_context>

<pallas_src>
import functools

import numpy as np
import jax
import jax.numpy as jnp
from jax.experimental import pallas as pl
from jax.experimental.pallas import tpu as pltpu

VMEM = pltpu.MemorySpace.VMEM
EPS = 1e-5


# ----------------------------------------------------------------------------
# In-kernel helpers
# ----------------------------------------------------------------------------
def _bn_train(x, gamma, beta):
    """BatchNorm (training mode): per-column batch stats, biased variance."""
    inv_m = 1.0 / x.shape[0]
    mean = jnp.sum(x, axis=0, keepdims=True) * inv_m
    xc = x - mean
    var = jnp.sum(xc * xc, axis=0, keepdims=True) * inv_m
    return xc * jax.lax.rsqrt(var + EPS) * gamma + beta


# ----------------------------------------------------------------------------
# The single fused Pallas kernel
# ----------------------------------------------------------------------------
def cell_kernel(mo, ho, wo,
                x_ref, wp_ref, gp_ref, bp_ref,
                w1a_ref, w1b_ref, w1c_ref,
                w2a_ref, w2b_ref, w2c_ref,
                g1_ref, b1_ref, w3_ref, g2_ref, b2_ref,
                gm_ref, bm_ref, o_ref):
    """Whole GDAS reduction cell.

    x_ref : (4*mo, Cin)  preprocess inputs, rows ordered
            (w-parity, h-parity, n, hv, wv); Cin packs [x0 | x1 | s1] channels.
    wp    : (Cin, 2C)    block-diag preprocess 1x1 conv (both branches)
    w1a/b/c : (2C, 2C)   grouped (1,3) conv, one per horizontal tap
    w2a/b/c : (2C, 2C)   grouped (3,1) conv, one per vertical tap
    w3    : (2C, 2C)     block-diag 1x1 conv
    o_ref : (mo, 4C)     [X0 | X1 | X2 | X3]
    """
    c2 = o_ref.shape[1] // 2   # = 2*C (both preprocessed branches packed)

    # ---- preprocess0 + preprocess1: ReLU -> block-diag 1x1 conv -> BN ----
    x = jnp.maximum(x_ref[...], 0.0)
    s = jnp.dot(x, wp_ref[...], preferred_element_type=jnp.float32)
    s = _bn_train(s, gp_ref[...], bp_ref[...])          # (4*mo, 2C)

    xe = s[:2 * mo, :]        # values at w = 2*wv     (even columns)
    xo = s[2 * mo:, :]        # values at w = 2*wv + 1 (odd columns)

    # w = 2*wv - 1 tap: roll the odd-column block down one output column and
    # mask wv == 0 (where the original op reads padding).
    rows2 = jax.lax.broadcasted_iota(jnp.int32, (2 * mo, 1), 0)
    wvalid = (rows2 % wo) != 0                          # wv >= 1
    xo_sh = pltpu.roll(xo, shift=1, axis=0)

    # ---- ops1 (both branches): ReLU -> grouped (1,3) stride (1,2) conv ----
    re = jnp.maximum(xe, 0.0)
    ro = jnp.maximum(xo, 0.0)
    ro_sh = jnp.where(wvalid, jnp.maximum(xo_sh, 0.0), 0.0)
    y1 = (jnp.dot(ro_sh, w1a_ref[...], preferred_element_type=jnp.float32)
          + jnp.dot(re, w1b_ref[...], preferred_element_type=jnp.float32)
          + jnp.dot(ro, w1c_ref[...], preferred_element_type=jnp.float32))

    # ---- grouped (3,1) stride (2,1) conv via h-parity row blocks ----
    even = y1[:mo, :]          # rows h = 2*hv      -> tap kh = 1
    odd = y1[mo:, :]           # rows h = 2*hv + 1  -> tap kh = 2
    rows1 = jax.lax.broadcasted_iota(jnp.int32, (mo, 1), 0)
    hvalid = (rows1 % (ho * wo)) >= wo                  # hv >= 1
    odd_sh = jnp.where(hvalid, pltpu.roll(odd, shift=wo, axis=0), 0.0)
    y2 = (jnp.dot(odd_sh, w2a_ref[...], preferred_element_type=jnp.float32)
          + jnp.dot(even, w2b_ref[...], preferred_element_type=jnp.float32)
          + jnp.dot(odd, w2c_ref[...], preferred_element_type=jnp.float32))

    # ---- BN -> ReLU -> 1x1 conv -> BN ----
    z = jnp.maximum(_bn_train(y2, g1_ref[...], b1_ref[...]), 0.0)
    z = jnp.dot(z, w3_ref[...], preferred_element_type=jnp.float32)
    x01 = _bn_train(z, g2_ref[...], b2_ref[...])

    # ---- ops2 (both branches): MaxPool2d(3, stride=2, pad=1) -> BN ----
    # Horizontal max over the same three stride-2 column taps (un-ReLU'd),
    # then vertical max over the same three stride-2 row taps.
    hm = jnp.maximum(xe, xo)
    hm = jnp.maximum(hm, jnp.where(wvalid, xo_sh, hm))  # padding tap excluded
    hme = hm[:mo, :]
    hmo = hm[mo:, :]
    m = jnp.maximum(hme, hmo)
    m = jnp.maximum(m, jnp.where(hvalid,
                                 pltpu.roll(hmo, shift=wo, axis=0), m))
    x23 = _bn_train(m, gm_ref[...], bm_ref[...])

    o_ref[:, :c2] = x01
    o_ref[:, c2:] = x23


def cell_call(xr, params, mo, ho, wo):
    kern = functools.partial(cell_kernel, mo, ho, wo)
    c2 = params["w_pre"].shape[1]
    args = [xr, params["w_pre"], params["g_pre"], params["b_pre"],
            params["w1k"][0], params["w1k"][1], params["w1k"][2],
            params["w2k"][0], params["w2k"][1], params["w2k"][2],
            params["g1c"], params["b1c"], params["w3p"],
            params["g2c"], params["b2c"], params["gmc"], params["bmc"]]
    return pl.pallas_call(
        kern,
        out_shape=jax.ShapeDtypeStruct((mo, 2 * c2), jnp.float32),
        in_specs=[pl.BlockSpec(memory_space=VMEM)] * len(args),
        out_specs=pl.BlockSpec(memory_space=VMEM),
    )(*args)


# ----------------------------------------------------------------------------
# Parameter setup (deterministic, synthetic), packed for the fused kernel
# ----------------------------------------------------------------------------
def expand_grouped(w, groups):
    """torch grouped-conv weight (Cout, Cg, KH, KW) -> per-tap dense
    block-diagonal matmul weights of shape (KH*KW, Cin, Cout)."""
    Cout, Cg, KH, KW = w.shape
    Cin = Cg * groups
    Cog = Cout // groups
    wf = w.reshape(Cout, Cg, KH * KW)
    dense = np.zeros((KH * KW, Cin, Cout), np.float32)
    for g in range(groups):
        for k in range(KH * KW):
            dense[k, g * Cg:(g + 1) * Cg, g * Cog:(g + 1) * Cog] = \
                wf[g * Cog:(g + 1) * Cog, :, k].T
    return dense


def init_params(key, C_pp, C_p, C, reduction_prev):
    keys = iter(jax.random.split(key, 64))

    def nk():
        return next(keys)

    def conv_w(shape):
        fan_in = int(np.prod(shape[1:]))
        return np.asarray(jax.random.normal(nk(), shape, jnp.float32),
                          np.float32) / np.float32(np.sqrt(fan_in))

    def bn(c):
        g = np.asarray(jax.random.uniform(nk(), (1, c), jnp.float32, 0.5, 1.5),
                       np.float32)
        b = np.asarray(0.1 * jax.random.normal(nk(), (1, c), jnp.float32),
                       np.float32)
        return g, b

    C2 = 2 * C
    p = {}

    # ---- preprocess0 + preprocess1, packed block-diagonal ----
    if reduction_prev:
        c0, c1 = C // 2, C - C // 2
        w0 = conv_w((c0, C_pp, 1, 1))[:, :, 0, 0].T       # (C_pp, c0)
        w1 = conv_w((c1, C_pp, 1, 1))[:, :, 0, 0].T       # (C_pp, c1)
        wp1 = conv_w((C, C_p, 1, 1))[:, :, 0, 0].T        # (C_p, C)
        W = np.zeros((2 * C_pp + C_p, C2), np.float32)
        W[:C_pp, :c0] = w0
        W[C_pp:2 * C_pp, c0:C] = w1
        W[2 * C_pp:, C:] = wp1
    else:
        w0 = conv_w((C, C_pp, 1, 1))[:, :, 0, 0].T
        wp1 = conv_w((C, C_p, 1, 1))[:, :, 0, 0].T
        W = np.zeros((C_pp + C_p, C2), np.float32)
        W[:C_pp, :C] = w0
        W[C_pp:, C:] = wp1
    g0, b0 = bn(C)
    g1, b1 = bn(C)
    p["w_pre"] = jnp.asarray(W)
    p["g_pre"] = jnp.asarray(np.concatenate([g0, g1], axis=1))
    p["b_pre"] = jnp.asarray(np.concatenate([b0, b1], axis=1))

    # ---- ops1 branches, packed across branches (block-diagonal per tap) ----
    w1k = [np.zeros((C2, C2), np.float32) for _ in range(3)]
    w2k = [np.zeros((C2, C2), np.float32) for _ in range(3)]
    w3p = np.zeros((C2, C2), np.float32)
    g1c = np.zeros((1, C2), np.float32)
    b1c = np.zeros((1, C2), np.float32)
    g2c = np.zeros((1, C2), np.float32)
    b2c = np.zeros((1, C2), np.float32)
    for br in range(2):
        d1 = expand_grouped(conv_w((C, C // 8, 1, 3)), 8)   # (3, C, C)
        d2 = expand_grouped(conv_w((C, C // 8, 3, 1)), 8)   # (3, C, C)
        w3 = conv_w((C, C, 1, 1))[:, :, 0, 0].T
        ga, ba = bn(C)
        gb, bb = bn(C)
        lo, hi = br * C, (br + 1) * C
        for k in range(3):
            w1k[k][lo:hi, lo:hi] = d1[k]
            w2k[k][lo:hi, lo:hi] = d2[k]
        w3p[lo:hi, lo:hi] = w3
        g1c[:, lo:hi] = ga
        b1c[:, lo:hi] = ba
        g2c[:, lo:hi] = gb
        b2c[:, lo:hi] = bb
    p["w1k"] = [jnp.asarray(m) for m in w1k]
    p["w2k"] = [jnp.asarray(m) for m in w2k]
    p["w3p"] = jnp.asarray(w3p)
    p["g1c"] = jnp.asarray(g1c)
    p["b1c"] = jnp.asarray(b1c)
    p["g2c"] = jnp.asarray(g2c)
    p["b2c"] = jnp.asarray(b2c)

    # ---- ops2 (maxpool + BN) ----
    gm0, bm0 = bn(C)
    gm1, bm1 = bn(C)
    p["gmc"] = jnp.asarray(np.concatenate([gm0, gm1], axis=1))
    p["bmc"] = jnp.asarray(np.concatenate([bm0, bm1], axis=1))
    return p


# ----------------------------------------------------------------------------
# Forward pass (only tiny layout glue in plain JAX; all compute in 1 kernel)
# ----------------------------------------------------------------------------
def gdas_reduction_cell(s0_nchw, s1_nchw, params, reduction_prev=True):
    s0 = jnp.transpose(s0_nchw, (0, 2, 3, 1)).astype(jnp.float32)  # NHWC
    s1 = jnp.transpose(s1_nchw, (0, 2, 3, 1)).astype(jnp.float32)

    # ---- pack preprocess inputs (ReLU commutes with subsample/zero-pad) ----
    if reduction_prev:
        x0 = s0[:, ::2, ::2, :]
        x1 = jnp.pad(s0, ((0, 0), (0, 1), (0, 1), (0, 0)))[:, 1::2, 1::2, :]
        pre_in = jnp.concatenate([x0, x1, s1], axis=-1)
    else:
        pre_in = jnp.concatenate([s0, s1], axis=-1)
    N, H, W, Cin = pre_in.shape
    assert H % 2 == 0 and W % 2 == 0, "even spatial dims expected"
    Ho, Wo = H // 2, W // 2
    Mo = N * Ho * Wo

    # Reorder rows to (w-parity, h-parity, n, hv, wv) so every stride-2 access
    # inside the kernel is a static Mo-aligned sub-block + sublane roll.
    # (Row permutations do not affect the per-channel BatchNorm statistics.)
    xr = pre_in.reshape(N, Ho, 2, Wo, 2, Cin).transpose(4, 2, 0, 1, 3, 5)
    xr = xr.reshape(4 * Mo, Cin)

    out = cell_call(xr, params, Mo, Ho, Wo)              # (Mo, 4*C)
    out = out.reshape(N, Ho, Wo, out.shape[-1])
    return jnp.transpose(out, (0, 3, 1, 2))              # back to NCHW


# ----------------------------------------------------------------------------
if __name__ == "__main__":
    key = jax.random.PRNGKey(0)
    k0, k1, kp = jax.random.split(key, 3)

    N, C_pp, C_p, C = 2, 16, 16, 32
    H = W = 16
    reduction_prev = True   # exercises FactorizedReduce; s0 is at 2x spatial

    s0 = jax.random.normal(k0, (N, C_pp, 2 * H, 2 * W), jnp.float32)  # NCHW
    s1 = jax.random.normal(k1, (N, C_p, H, W), jnp.float32)           # NCHW
    params = init_params(kp, C_pp, C_p, C, reduction_prev)

    fwd = jax.jit(functools.partial(gdas_reduction_cell,
                                    reduction_prev=reduction_prev))
    out = jax.block_until_ready(fwd(s0, s1, params))

    assert out.shape == (N, 4 * C, H // 2, W // 2), out.shape
    assert bool(jnp.all(jnp.isfinite(out)))
    print("KERNEL_OK")
</pallas_src>

<mosaic_0001>
module attributes {stable_mosaic.version = 11 : i64} {
  func.func @cell_kernel(%arg0: memref<512x48xf32, #tpu.memory_space<vmem>>, %arg1: memref<48x64xf32, #tpu.memory_space<vmem>>, %arg2: memref<1x64xf32, #tpu.memory_space<vmem>>, %arg3: memref<1x64xf32, #tpu.memory_space<vmem>>, %arg4: memref<64x64xf32, #tpu.memory_space<vmem>>, %arg5: memref<64x64xf32, #tpu.memory_space<vmem>>, %arg6: memref<64x64xf32, #tpu.memory_space<vmem>>, %arg7: memref<64x64xf32, #tpu.memory_space<vmem>>, %arg8: memref<64x64xf32, #tpu.memory_space<vmem>>, %arg9: memref<64x64xf32, #tpu.memory_space<vmem>>, %arg10: memref<1x64xf32, #tpu.memory_space<vmem>>, %arg11: memref<1x64xf32, #tpu.memory_space<vmem>>, %arg12: memref<64x64xf32, #tpu.memory_space<vmem>>, %arg13: memref<1x64xf32, #tpu.memory_space<vmem>>, %arg14: memref<1x64xf32, #tpu.memory_space<vmem>>, %arg15: memref<1x64xf32, #tpu.memory_space<vmem>>, %arg16: memref<1x64xf32, #tpu.memory_space<vmem>>, %arg17: memref<128x128xf32, #tpu.memory_space<vmem>>) attributes {dimension_semantics = [], scalar_prefetch = 0 : i64, scratch_operands = 0 : i64, tpu.core_type = #tpu.core_type<tc>} {
    %c0 = arith.constant 0 : index
    %c0_0 = arith.constant 0 : index
    %0 = vector.load %arg0[%c0, %c0_0] : memref<512x48xf32, #tpu.memory_space<vmem>>, vector<512x48xf32>
    %cst = arith.constant 0.000000e+00 : f32
    %1 = vector.broadcast %cst : f32 to vector<512x48xf32>
    %2 = arith.maximumf %0, %1 : vector<512x48xf32>
    %c0_1 = arith.constant 0 : index
    %c0_2 = arith.constant 0 : index
    %3 = vector.load %arg1[%c0_1, %c0_2] : memref<48x64xf32, #tpu.memory_space<vmem>>, vector<48x64xf32>
    %cst_3 = arith.constant dense<0.000000e+00> : vector<512x64xf32>
    %4 = tpu.matmul %2, %3, %cst_3 {dimension_numbers = #tpu.dot_dimension_numbers<[1], [0], [0], [1], [0, 0, 1, 1], [], []>} : vector<512x48xf32>, vector<48x64xf32>, vector<512x64xf32> -> vector<512x64xf32>
    %c0_4 = arith.constant 0 : index
    %c0_5 = arith.constant 0 : index
    %5 = vector.load %arg2[%c0_4, %c0_5] : memref<1x64xf32, #tpu.memory_space<vmem>>, vector<1x64xf32>
    %c0_6 = arith.constant 0 : index
    %c0_7 = arith.constant 0 : index
    %6 = vector.load %arg3[%c0_6, %c0_7] : memref<1x64xf32, #tpu.memory_space<vmem>>, vector<1x64xf32>
    %cst_8 = arith.constant dense<0.000000e+00> : vector<64xf32>
    %7 = vector.multi_reduction <add>, %4, %cst_8 [0] : vector<512x64xf32> to vector<64xf32>
    %8 = vector.shape_cast %7 : vector<64xf32> to vector<1x64xf32>
    %cst_9 = arith.constant 0.001953125 : f32
    %9 = vector.broadcast %cst_9 : f32 to vector<1x64xf32>
    %10 = arith.mulf %8, %9 : vector<1x64xf32>
    %11 = vector.broadcast %10 : vector<1x64xf32> to vector<512x64xf32>
    %12 = arith.subf %4, %11 : vector<512x64xf32>
    %13 = arith.mulf %12, %12 : vector<512x64xf32>
    %cst_10 = arith.constant dense<0.000000e+00> : vector<64xf32>
    %14 = vector.multi_reduction <add>, %13, %cst_10 [0] : vector<512x64xf32> to vector<64xf32>
    %15 = vector.shape_cast %14 : vector<64xf32> to vector<1x64xf32>
    %cst_11 = arith.constant 0.001953125 : f32
    %16 = vector.broadcast %cst_11 : f32 to vector<1x64xf32>
    %17 = arith.mulf %15, %16 : vector<1x64xf32>
    %cst_12 = arith.constant 9.99999974E-6 : f32
    %18 = vector.broadcast %cst_12 : f32 to vector<1x64xf32>
    %19 = arith.addf %17, %18 : vector<1x64xf32>
    %20 = math.rsqrt %19 : vector<1x64xf32>
    %21 = vector.broadcast %20 : vector<1x64xf32> to vector<512x64xf32>
    %22 = arith.mulf %12, %21 : vector<512x64xf32>
    %23 = vector.broadcast %5 : vector<1x64xf32> to vector<512x64xf32>
    %24 = arith.mulf %22, %23 : vector<512x64xf32>
    %25 = vector.broadcast %6 : vector<1x64xf32> to vector<512x64xf32>
    %26 = arith.addf %24, %25 : vector<512x64xf32>
    %27 = vector.extract_strided_slice %26 {offsets = [0, 0], sizes = [256, 64], strides = [1, 1]} : vector<512x64xf32> to vector<256x64xf32>
    %28 = vector.extract_strided_slice %26 {offsets = [256, 0], sizes = [256, 64], strides = [1, 1]} : vector<512x64xf32> to vector<256x64xf32>
    %29 = tpu.iota {dimensions = array<i32: 0>} : vector<256x1xi32>
    %c8_i32 = arith.constant 8 : i32
    %c0_i32 = arith.constant 0 : i32
    %30 = arith.cmpi eq, %c8_i32, %c0_i32 : i32
    %c1_i32 = arith.constant 1 : i32
    %31 = arith.select %30, %c1_i32, %c8_i32 : i32
    %32 = vector.broadcast %31 : i32 to vector<256x1xi32>
    %33 = arith.remsi %29, %32 : vector<256x1xi32>
    %c0_i32_13 = arith.constant 0 : i32
    %34 = vector.broadcast %c0_i32_13 : i32 to vector<256x1xi32>
    %35 = arith.cmpi ne, %33, %34 : vector<256x1xi32>
    %c0_i32_14 = arith.constant 0 : i32
    %36 = vector.broadcast %c0_i32_14 : i32 to vector<256x1xi32>
    %37 = arith.cmpi slt, %33, %36 : vector<256x1xi32>
    %c0_i32_15 = arith.constant 0 : i32
    %38 = arith.cmpi slt, %31, %c0_i32_15 : i32
    %39 = vector.broadcast %38 : i1 to vector<256x1xi1>
    %40 = vector.broadcast %39 : vector<256x1xi1> to vector<256x1xi1>
    %41 = arith.xori %37, %40 : vector<256x1xi1>
    %42 = arith.andi %41, %35 : vector<256x1xi1>
    %43 = vector.broadcast %31 : i32 to vector<256x1xi32>
    %44 = arith.addi %33, %43 : vector<256x1xi32>
    %45 = arith.select %42, %44, %33 : vector<256x1xi1>, vector<256x1xi32>
    %c0_i32_16 = arith.constant 0 : i32
    %46 = vector.broadcast %c0_i32_16 : i32 to vector<256x1xi32>
    %47 = arith.cmpi ne, %45, %46 : vector<256x1xi32>
    %c1_i32_17 = arith.constant 1 : i32
    %48 = tpu.dynamic_rotate %28 by %c1_i32_17 dim 0 : vector<256x64xf32>, i32 -> vector<256x64xf32>
    %cst_18 = arith.constant 0.000000e+00 : f32
    %49 = vector.broadcast %cst_18 : f32 to vector<256x64xf32>
    %50 = arith.maximumf %27, %49 : vector<256x64xf32>
    %cst_19 = arith.constant 0.000000e+00 : f32
    %51 = vector.broadcast %cst_19 : f32 to vector<256x64xf32>
    %52 = arith.maximumf %28, %51 : vector<256x64xf32>
    %cst_20 = arith.constant 0.000000e+00 : f32
    %53 = vector.broadcast %cst_20 : f32 to vector<256x64xf32>
    %54 = arith.maximumf %48, %53 : vector<256x64xf32>
    %cst_21 = arith.constant 0.000000e+00 : f32
    %55 = vector.shape_cast %47 : vector<256x1xi1> to vector<256x1xi1>
    %56 = vector.broadcast %55 : vector<256x1xi1> to vector<256x64xi1>
    %57 = vector.broadcast %cst_21 : f32 to vector<256x64xf32>
    %58 = arith.select %56, %54, %57 : vector<256x64xi1>, vector<256x64xf32>
    %c0_22 = arith.constant 0 : index
    %c0_23 = arith.constant 0 : index
    %59 = vector.load %arg4[%c0_22, %c0_23] : memref<64x64xf32, #tpu.memory_space<vmem>>, vector<64x64xf32>
    %cst_24 = arith.constant dense<0.000000e+00> : vector<256x64xf32>
    %60 = tpu.matmul %58, %59, %cst_24 {dimension_numbers = #tpu.dot_dimension_numbers<[1], [0], [0], [1], [0, 0, 1, 1], [], []>} : vector<256x64xf32>, vector<64x64xf32>, vector<256x64xf32> -> vector<256x64xf32>
    %c0_25 = arith.constant 0 : index
    %c0_26 = arith.constant 0 : index
    %61 = vector.load %arg5[%c0_25, %c0_26] : memref<64x64xf32, #tpu.memory_space<vmem>>, vector<64x64xf32>
    %cst_27 = arith.constant dense<0.000000e+00> : vector<256x64xf32>
    %62 = tpu.matmul %50, %61, %cst_27 {dimension_numbers = #tpu.dot_dimension_numbers<[1], [0], [0], [1], [0, 0, 1, 1], [], []>} : vector<256x64xf32>, vector<64x64xf32>, vector<256x64xf32> -> vector<256x64xf32>
    %63 = arith.addf %60, %62 : vector<256x64xf32>
    %c0_28 = arith.constant 0 : index
    %c0_29 = arith.constant 0 : index
    %64 = vector.load %arg6[%c0_28, %c0_29] : memref<64x64xf32, #tpu.memory_space<vmem>>, vector<64x64xf32>
    %cst_30 = arith.constant dense<0.000000e+00> : vector<256x64xf32>
    %65 = tpu.matmul %52, %64, %cst_30 {dimension_numbers = #tpu.dot_dimension_numbers<[1], [0], [0], [1], [0, 0, 1, 1], [], []>} : vector<256x64xf32>, vector<64x64xf32>, vector<256x64xf32> -> vector<256x64xf32>
    %66 = arith.addf %63, %65 : vector<256x64xf32>
    %67 = vector.extract_strided_slice %66 {offsets = [0, 0], sizes = [128, 64], strides = [1, 1]} : vector<256x64xf32> to vector<128x64xf32>
    %68 = vector.extract_strided_slice %66 {offsets = [128, 0], sizes = [128, 64], strides = [1, 1]} : vector<256x64xf32> to vector<128x64xf32>
    %69 = tpu.iota {dimensions = array<i32: 0>} : vector<128x1xi32>
    %c64_i32 = arith.constant 64 : i32
    %c0_i32_31 = arith.constant 0 : i32
    %70 = arith.cmpi eq, %c64_i32, %c0_i32_31 : i32
    %c1_i32_32 = arith.constant 1 : i32
    %71 = arith.select %70, %c1_i32_32, %c64_i32 : i32
    %72 = vector.broadcast %71 : i32 to vector<128x1xi32>
    %73 = arith.remsi %69, %72 : vector<128x1xi32>
    %c0_i32_33 = arith.constant 0 : i32
    %74 = vector.broadcast %c0_i32_33 : i32 to vector<128x1xi32>
    %75 = arith.cmpi ne, %73, %74 : vector<128x1xi32>
    %c0_i32_34 = arith.constant 0 : i32
    %76 = vector.broadcast %c0_i32_34 : i32 to vector<128x1xi32>
    %77 = arith.cmpi slt, %73, %76 : vector<128x1xi32>
    %c0_i32_35 = arith.constant 0 : i32
    %78 = arith.cmpi slt, %71, %c0_i32_35 : i32
    %79 = vector.broadcast %78 : i1 to vector<128x1xi1>
    %80 = vector.broadcast %79 : vector<128x1xi1> to vector<128x1xi1>
    %81 = arith.xori %77, %80 : vector<128x1xi1>
    %82 = arith.andi %81, %75 : vector<128x1xi1>
    %83 = vector.broadcast %71 : i32 to vector<128x1xi32>
    %84 = arith.addi %73, %83 : vector<128x1xi32>
    %85 = arith.select %82, %84, %73 : vector<128x1xi1>, vector<128x1xi32>
    %c8_i32_36 = arith.constant 8 : i32
    %86 = vector.broadcast %c8_i32_36 : i32 to vector<128x1xi32>
    %87 = arith.cmpi sge, %85, %86 : vector<128x1xi32>
    %c8_i32_37 = arith.constant 8 : i32
    %88 = tpu.dynamic_rotate %68 by %c8_i32_37 dim 0 : vector<128x64xf32>, i32 -> vector<128x64xf32>
    %cst_38 = arith.constant 0.000000e+00 : f32
    %89 = vector.shape_cast %87 : vector<128x1xi1> to vector<128x1xi1>
    %90 = vector.broadcast %89 : vector<128x1xi1> to vector<128x64xi1>
    %91 = vector.broadcast %cst_38 : f32 to vector<128x64xf32>
    %92 = arith.select %90, %88, %91 : vector<128x64xi1>, vector<128x64xf32>
    %c0_39 = arith.constant 0 : index
    %c0_40 = arith.constant 0 : index
    %93 = vector.load %arg7[%c0_39, %c0_40] : memref<64x64xf32, #tpu.memory_space<vmem>>, vector<64x64xf32>
    %cst_41 = arith.constant dense<0.000000e+00> : vector<128x64xf32>
    %94 = tpu.matmul %92, %93, %cst_41 {dimension_numbers = #tpu.dot_dimension_numbers<[1], [0], [0], [1], [0, 0, 1, 1], [], []>} : vector<128x64xf32>, vector<64x64xf32>, vector<128x64xf32> -> vector<128x64xf32>
    %c0_42 = arith.constant 0 : index
    %c0_43 = arith.constant 0 : index
    %95 = vector.load %arg8[%c0_42, %c0_43] : memref<64x64xf32, #tpu.memory_space<vmem>>, vector<64x64xf32>
    %cst_44 = arith.constant dense<0.000000e+00> : vector<128x64xf32>
    %96 = tpu.matmul %67, %95, %cst_44 {dimension_numbers = #tpu.dot_dimension_numbers<[1], [0], [0], [1], [0, 0, 1, 1], [], []>} : vector<128x64xf32>, vector<64x64xf32>, vector<128x64xf32> -> vector<128x64xf32>
    %97 = arith.addf %94, %96 : vector<128x64xf32>
    %c0_45 = arith.constant 0 : index
    %c0_46 = arith.constant 0 : index
    %98 = vector.load %arg9[%c0_45, %c0_46] : memref<64x64xf32, #tpu.memory_space<vmem>>, vector<64x64xf32>
    %cst_47 = arith.constant dense<0.000000e+00> : vector<128x64xf32>
    %99 = tpu.matmul %68, %98, %cst_47 {dimension_numbers = #tpu.dot_dimension_numbers<[1], [0], [0], [1], [0, 0, 1, 1], [], []>} : vector<128x64xf32>, vector<64x64xf32>, vector<128x64xf32> -> vector<128x64xf32>
    %100 = arith.addf %97, %99 : vector<128x64xf32>
    %c0_48 = arith.constant 0 : index
    %c0_49 = arith.constant 0 : index
    %101 = vector.load %arg10[%c0_48, %c0_49] : memref<1x64xf32, #tpu.memory_space<vmem>>, vector<1x64xf32>
    %c0_50 = arith.constant 0 : index
    %c0_51 = arith.constant 0 : index
    %102 = vector.load %arg11[%c0_50, %c0_51] : memref<1x64xf32, #tpu.memory_space<vmem>>, vector<1x64xf32>
    %cst_52 = arith.constant dense<0.000000e+00> : vector<64xf32>
    %103 = vector.multi_reduction <add>, %100, %cst_52 [0] : vector<128x64xf32> to vector<64xf32>
    %104 = vector.shape_cast %103 : vector<64xf32> to vector<1x64xf32>
    %cst_53 = arith.constant 7.812500e-03 : f32
    %105 = vector.broadcast %cst_53 : f32 to vector<1x64xf32>
    %106 = arith.mulf %104, %105 : vector<1x64xf32>
    %107 = vector.broadcast %106 : vector<1x64xf32> to vector<128x64xf32>
    %108 = arith.subf %100, %107 : vector<128x64xf32>
    %109 = arith.mulf %108, %108 : vector<128x64xf32>
    %cst_54 = arith.constant dense<0.000000e+00> : vector<64xf32>
    %110 = vector.multi_reduction <add>, %109, %cst_54 [0] : vector<128x64xf32> to vector<64xf32>
    %111 = vector.shape_cast %110 : vector<64xf32> to vector<1x64xf32>
    %cst_55 = arith.constant 7.812500e-03 : f32
    %112 = vector.broadcast %cst_55 : f32 to vector<1x64xf32>
    %113 = arith.mulf %111, %112 : vector<1x64xf32>
    %cst_56 = arith.constant 9.99999974E-6 : f32
    %114 = vector.broadcast %cst_56 : f32 to vector<1x64xf32>
    %115 = arith.addf %113, %114 : vector<1x64xf32>
    %116 = math.rsqrt %115 : vector<1x64xf32>
    %117 = vector.broadcast %116 : vector<1x64xf32> to vector<128x64xf32>
    %118 = arith.mulf %108, %117 : vector<128x64xf32>
    %119 = vector.broadcast %101 : vector<1x64xf32> to vector<128x64xf32>
    %120 = arith.mulf %118, %119 : vector<128x64xf32>
    %121 = vector.broadcast %102 : vector<1x64xf32> to vector<128x64xf32>
    %122 = arith.addf %120, %121 : vector<128x64xf32>
    %cst_57 = arith.constant 0.000000e+00 : f32
    %123 = vector.broadcast %cst_57 : f32 to vector<128x64xf32>
    %124 = arith.maximumf %122, %123 : vector<128x64xf32>
    %c0_58 = arith.constant 0 : index
    %c0_59 = arith.constant 0 : index
    %125 = vector.load %arg12[%c0_58, %c0_59] : memref<64x64xf32, #tpu.memory_space<vmem>>, vector<64x64xf32>
    %cst_60 = arith.constant dense<0.000000e+00> : vector<128x64xf32>
    %126 = tpu.matmul %124, %125, %cst_60 {dimension_numbers = #tpu.dot_dimension_numbers<[1], [0], [0], [1], [0, 0, 1, 1], [], []>} : vector<128x64xf32>, vector<64x64xf32>, vector<128x64xf32> -> vector<128x64xf32>
    %c0_61 = arith.constant 0 : index
    %c0_62 = arith.constant 0 : index
    %127 = vector.load %arg13[%c0_61, %c0_62] : memref<1x64xf32, #tpu.memory_space<vmem>>, vector<1x64xf32>
    %c0_63 = arith.constant 0 : index
    %c0_64 = arith.constant 0 : index
    %128 = vector.load %arg14[%c0_63, %c0_64] : memref<1x64xf32, #tpu.memory_space<vmem>>, vector<1x64xf32>
    %cst_65 = arith.constant dense<0.000000e+00> : vector<64xf32>
    %129 = vector.multi_reduction <add>, %126, %cst_65 [0] : vector<128x64xf32> to vector<64xf32>
    %130 = vector.shape_cast %129 : vector<64xf32> to vector<1x64xf32>
    %cst_66 = arith.constant 7.812500e-03 : f32
    %131 = vector.broadcast %cst_66 : f32 to vector<1x64xf32>
    %132 = arith.mulf %130, %131 : vector<1x64xf32>
    %133 = vector.broadcast %132 : vector<1x64xf32> to vector<128x64xf32>
    %134 = arith.subf %126, %133 : vector<128x64xf32>
    %135 = arith.mulf %134, %134 : vector<128x64xf32>
    %cst_67 = arith.constant dense<0.000000e+00> : vector<64xf32>
    %136 = vector.multi_reduction <add>, %135, %cst_67 [0] : vector<128x64xf32> to vector<64xf32>
    %137 = vector.shape_cast %136 : vector<64xf32> to vector<1x64xf32>
    %cst_68 = arith.constant 7.812500e-03 : f32
    %138 = vector.broadcast %cst_68 : f32 to vector<1x64xf32>
    %139 = arith.mulf %137, %138 : vector<1x64xf32>
    %cst_69 = arith.constant 9.99999974E-6 : f32
    %140 = vector.broadcast %cst_69 : f32 to vector<1x64xf32>
    %141 = arith.addf %139, %140 : vector<1x64xf32>
    %142 = math.rsqrt %141 : vector<1x64xf32>
    %143 = vector.broadcast %142 : vector<1x64xf32> to vector<128x64xf32>
    %144 = arith.mulf %134, %143 : vector<128x64xf32>
    %145 = vector.broadcast %127 : vector<1x64xf32> to vector<128x64xf32>
    %146 = arith.mulf %144, %145 : vector<128x64xf32>
    %147 = vector.broadcast %128 : vector<1x64xf32> to vector<128x64xf32>
    %148 = arith.addf %146, %147 : vector<128x64xf32>
    %149 = arith.maximumf %27, %28 : vector<256x64xf32>
    %150 = vector.shape_cast %47 : vector<256x1xi1> to vector<256x1xi1>
    %151 = vector.broadcast %150 : vector<256x1xi1> to vector<256x64xi1>
    %152 = arith.select %151, %48, %149 : vector<256x64xi1>, vector<256x64xf32>
    %153 = arith.maximumf %149, %152 : vector<256x64xf32>
    %154 = vector.extract_strided_slice %153 {offsets = [0, 0], sizes = [128, 64], strides = [1, 1]} : vector<256x64xf32> to vector<128x64xf32>
    %155 = vector.extract_strided_slice %153 {offsets = [128, 0], sizes = [128, 64], strides = [1, 1]} : vector<256x64xf32> to vector<128x64xf32>
    %156 = arith.maximumf %154, %155 : vector<128x64xf32>
    %c8_i32_70 = arith.constant 8 : i32
    %157 = tpu.dynamic_rotate %155 by %c8_i32_70 dim 0 : vector<128x64xf32>, i32 -> vector<128x64xf32>
    %158 = vector.shape_cast %87 : vector<128x1xi1> to vector<128x1xi1>
    %159 = vector.broadcast %158 : vector<128x1xi1> to vector<128x64xi1>
    %160 = arith.select %159, %157, %156 : vector<128x64xi1>, vector<128x64xf32>
    %161 = arith.maximumf %156, %160 : vector<128x64xf32>
    %c0_71 = arith.constant 0 : index
    %c0_72 = arith.constant 0 : index
    %162 = vector.load %arg15[%c0_71, %c0_72] : memref<1x64xf32, #tpu.memory_space<vmem>>, vector<1x64xf32>
    %c0_73 = arith.constant 0 : index
    %c0_74 = arith.constant 0 : index
    %163 = vector.load %arg16[%c0_73, %c0_74] : memref<1x64xf32, #tpu.memory_space<vmem>>, vector<1x64xf32>
    %cst_75 = arith.constant dense<0.000000e+00> : vector<64xf32>
    %164 = vector.multi_reduction <add>, %161, %cst_75 [0] : vector<128x64xf32> to vector<64xf32>
    %165 = vector.shape_cast %164 : vector<64xf32> to vector<1x64xf32>
    %cst_76 = arith.constant 7.812500e-03 : f32
    %166 = vector.broadcast %cst_76 : f32 to vector<1x64xf32>
    %167 = arith.mulf %165, %166 : vector<1x64xf32>
    %168 = vector.broadcast %167 : vector<1x64xf32> to vector<128x64xf32>
    %169 = arith.subf %161, %168 : vector<128x64xf32>
    %170 = arith.mulf %169, %169 : vector<128x64xf32>
    %cst_77 = arith.constant dense<0.000000e+00> : vector<64xf32>
    %171 = vector.multi_reduction <add>, %170, %cst_77 [0] : vector<128x64xf32> to vector<64xf32>
    %172 = vector.shape_cast %171 : vector<64xf32> to vector<1x64xf32>
    %cst_78 = arith.constant 7.812500e-03 : f32
    %173 = vector.broadcast %cst_78 : f32 to vector<1x64xf32>
    %174 = arith.mulf %172, %173 : vector<1x64xf32>
    %cst_79 = arith.constant 9.99999974E-6 : f32
    %175 = vector.broadcast %cst_79 : f32 to vector<1x64xf32>
    %176 = arith.addf %174, %175 : vector<1x64xf32>
    %177 = math.rsqrt %176 : vector<1x64xf32>
    %178 = vector.broadcast %177 : vector<1x64xf32> to vector<128x64xf32>
    %179 = arith.mulf %169, %178 : vector<128x64xf32>
    %180 = vector.broadcast %162 : vector<1x64xf32> to vector<128x64xf32>
    %181 = arith.mulf %179, %180 : vector<128x64xf32>
    %182 = vector.broadcast %163 : vector<1x64xf32> to vector<128x64xf32>
    %183 = arith.addf %181, %182 : vector<128x64xf32>
    %c0_80 = arith.constant 0 : index
    %c0_81 = arith.constant 0 : index
    %184 = vector.load %arg17[%c0_80, %c0_81] : memref<128x128xf32, #tpu.memory_space<vmem>>, vector<128x64xf32>
    tpu.vector_store %arg17[%c0_80, %c0_81], %148 {strides = array<i32>} : memref<128x128xf32, #tpu.memory_space<vmem>>, vector<128x64xf32>,
    %c0_82 = arith.constant 0 : index
    %c64 = arith.constant 64 : index
    %185 = vector.load %arg17[%c0_82, %c64] : memref<128x128xf32, #tpu.memory_space<vmem>>, vector<128x64xf32>
    tpu.vector_store %arg17[%c0_82, %c64], %183 {strides = array<i32>} : memref<128x128xf32, #tpu.memory_space<vmem>>, vector<128x64xf32>,
    return
  }
}

</mosaic_0001>

<llo_original>
// kernel: gdas_reduction_cell.1
$region0: #{gdas_reduction_cell.1}
  #allocation0 [shape = 'u32[]', space=smem, size = 0x4, offset = 0x4, fixed_abs, tag = 'smem constant byte address 0x4 - core index']
  #allocation1 [shape = 'u32[144,128]{1,0:T(1,128)}', space=vmem, size = 0x12000, scoped, tag = 'internal scratch']
  %s0 = inlined_call_operand.vmem [shape: f32[512,48], index: 0, kind: input, shape index: {}]
  %s1 = inlined_call_operand.vmem [shape: f32[48,64], index: 1, kind: input, shape index: {}]
  %s2 = inlined_call_operand.vmem [shape: f32[1,64], index: 2, kind: input, shape index: {}]
  %s3 = inlined_call_operand.vmem [shape: f32[1,64], index: 3, kind: input, shape index: {}]
  %s4 = inlined_call_operand.vmem [shape: f32[64,64], index: 4, kind: input, shape index: {}]
  %s5 = inlined_call_operand.vmem [shape: f32[64,64], index: 5, kind: input, shape index: {}]
  %s6 = inlined_call_operand.vmem [shape: f32[64,64], index: 6, kind: input, shape index: {}]
  %s7 = inlined_call_operand.vmem [shape: f32[64,64], index: 7, kind: input, shape index: {}]
  %s8 = inlined_call_operand.vmem [shape: f32[64,64], index: 8, kind: input, shape index: {}]
  %s9 = inlined_call_operand.vmem [shape: f32[64,64], index: 9, kind: input, shape index: {}]
  %s10 = inlined_call_operand.vmem [shape: f32[1,64], index: 10, kind: input, shape index: {}]
  %s11 = inlined_call_operand.vmem [shape: f32[1,64], index: 11, kind: input, shape index: {}]
  %s12 = inlined_call_operand.vmem [shape: f32[64,64], index: 12, kind: input, shape index: {}]
  %s13 = inlined_call_operand.vmem [shape: f32[1,64], index: 13, kind: input, shape index: {}]
  %s14 = inlined_call_operand.vmem [shape: f32[1,64], index: 14, kind: input, shape index: {}]
  %s15 = inlined_call_operand.vmem [shape: f32[1,64], index: 15, kind: input, shape index: {}]
  %s16 = inlined_call_operand.vmem [shape: f32[1,64], index: 16, kind: input, shape index: {}]
  %s17 = inlined_call_operand.hbm [shape: f32[128,128], index: 17, kind: output, shape index: {}]
  %s18 = sld [smem:[#allocation0]]
  $region78: #{gdas_reduction_cell.1} parent=0
    _
  %s20 = ssub.s32 1, %s18
  %s21 = scalar_select 0, %s20, %s18
  $region1: #{gdas_reduction_cell.1} parent=0
    #allocation2 [shape = 'u8[65536]{0}', space=vmem, size = 0x10000, scoped, tag = 'output window, operand 0, single buffered']
    #allocation3 [shape = 's32[1]{0}', space=sflag, size = 0x4, scoped, tag = 'scoped memory for gdas_reduction_cell.1']
    %22 = vsyncpa [#allocation3], 0
    // Predicated region
    $region2: #{gdas_reduction_cell.1} parent=1 // pred_check
      _
    $region3: #{gdas_reduction_cell.1} parent=1 // pred_check_branch
      %24 = sbr.rel (0) target = $region5
    $region4: #{gdas_reduction_cell.1} parent=1 // pred_region
      _
    $region5: #{gdas_reduction_cell.1} parent=1 // pred_fallthru
      _
    // Predicated region
    $region6: #{gdas_reduction_cell.1} parent=1 // pred_check
      _
    $region7: #{gdas_reduction_cell.1} parent=1 // pred_check_branch
      %26 = sbr.rel (0) target = $region9
    $region8: #{gdas_reduction_cell.1} parent=1 // pred_region
      _
    $region9: #{gdas_reduction_cell.1} parent=1 // pred_fallthru
      _
    // Predicated region
    $region10: #{gdas_reduction_cell.1} parent=1 // pred_check
      _
    $region11: #{gdas_reduction_cell.1} parent=1 // pred_check_branch
      %28 = sbr.rel (0) target = $region13
    $region12: #{gdas_reduction_cell.1} parent=1 // pred_region
      _
    $region13: #{gdas_reduction_cell.1} parent=1 // pred_fallthru
      _
    // Predicated region
    $region14: #{gdas_reduction_cell.1} parent=1 // pred_check
      _
    $region15: #{gdas_reduction_cell.1} parent=1 // pred_check_branch
      %30 = sbr.rel (0) target = $region17
    $region16: #{gdas_reduction_cell.1} parent=1 // pred_region
      _
    $region17: #{gdas_reduction_cell.1} parent=1 // pred_fallthru
      _
    // Predicated region
    $region18: #{gdas_reduction_cell.1} parent=1 // pred_check
      _
    $region19: #{gdas_reduction_cell.1} parent=1 // pred_check_branch
      %32 = sbr.rel (0) target = $region21
    $region20: #{gdas_reduction_cell.1} parent=1 // pred_region
      _
    $region21: #{gdas_reduction_cell.1} parent=1 // pred_fallthru
      _
    // Predicated region
    $region22: #{gdas_reduction_cell.1} parent=1 // pred_check
      _
    $region23: #{gdas_reduction_cell.1} parent=1 // pred_check_branch
      %34 = sbr.rel (0) target = $region25
    $region24: #{gdas_reduction_cell.1} parent=1 // pred_region
      _
    $region25: #{gdas_reduction_cell.1} parent=1 // pred_fallthru
      _
    // Predicated region
    $region26: #{gdas_reduction_cell.1} parent=1 // pred_check
      _
    $region27: #{gdas_reduction_cell.1} parent=1 // pred_check_branch
      %36 = sbr.rel (0) target = $region29
    $region28: #{gdas_reduction_cell.1} parent=1 // pred_region
      _
    $region29: #{gdas_reduction_cell.1} parent=1 // pred_fallthru
      _
    // Predicated region
    $region30: #{gdas_reduction_cell.1} parent=1 // pred_check
      _
    $region31: #{gdas_reduction_cell.1} parent=1 // pred_check_branch
      %38 = sbr.rel (0) target = $region33
    $region32: #{gdas_reduction_cell.1} parent=1 // pred_region
      _
    $region33: #{gdas_reduction_cell.1} parent=1 // pred_fallthru
      _
    // Predicated region
    $region34: #{gdas_reduction_cell.1} parent=1 // pred_check
      _
    $region35: #{gdas_reduction_cell.1} parent=1 // pred_check_branch
      %40 = sbr.rel (0) target = $region37
    $region36: #{gdas_reduction_cell.1} parent=1 // pred_region
      _
    $region37: #{gdas_reduction_cell.1} parent=1 // pred_fallthru
      _
    // Predicated region
    $region38: #{gdas_reduction_cell.1} parent=1 // pred_check
      _
    $region39: #{gdas_reduction_cell.1} parent=1 // pred_check_branch
      %42 = sbr.rel (0) target = $region41
    $region40: #{gdas_reduction_cell.1} parent=1 // pred_region
      _
    $region41: #{gdas_reduction_cell.1} parent=1 // pred_fallthru
      _
    // Predicated region
    $region42: #{gdas_reduction_cell.1} parent=1 // pred_check
      _
    $region43: #{gdas_reduction_cell.1} parent=1 // pred_check_branch
      %44 = sbr.rel (0) target = $region45
    $region44: #{gdas_reduction_cell.1} parent=1 // pred_region
      _
    $region45: #{gdas_reduction_cell.1} parent=1 // pred_fallthru
      _
    // Predicated region
    $region46: #{gdas_reduction_cell.1} parent=1 // pred_check
      _
    $region47: #{gdas_reduction_cell.1} parent=1 // pred_check_branch
      %46 = sbr.rel (0) target = $region49
    $region48: #{gdas_reduction_cell.1} parent=1 // pred_region
      _
    $region49: #{gdas_reduction_cell.1} parent=1 // pred_fallthru
      _
    // Predicated region
    $region50: #{gdas_reduction_cell.1} parent=1 // pred_check
      _
    $region51: #{gdas_reduction_cell.1} parent=1 // pred_check_branch
      %48 = sbr.rel (0) target = $region53
    $region52: #{gdas_reduction_cell.1} parent=1 // pred_region
      _
    $region53: #{gdas_reduction_cell.1} parent=1 // pred_fallthru
      _
    // Predicated region
    $region54: #{gdas_reduction_cell.1} parent=1 // pred_check
      _
    $region55: #{gdas_reduction_cell.1} parent=1 // pred_check_branch
      %50 = sbr.rel (0) target = $region57
    $region56: #{gdas_reduction_cell.1} parent=1 // pred_region
      _
    $region57: #{gdas_reduction_cell.1} parent=1 // pred_fallthru
      _
    // Predicated region
    $region58: #{gdas_reduction_cell.1} parent=1 // pred_check
      _
    $region59: #{gdas_reduction_cell.1} parent=1 // pred_check_branch
      %52 = sbr.rel (0) target = $region61
    $region60: #{gdas_reduction_cell.1} parent=1 // pred_region
      _
    $region61: #{gdas_reduction_cell.1} parent=1 // pred_fallthru
      _
    // Predicated region
    $region62: #{gdas_reduction_cell.1} parent=1 // pred_check
      _
    $region63: #{gdas_reduction_cell.1} parent=1 // pred_check_branch
      %54 = sbr.rel (0) target = $region65
    $region64: #{gdas_reduction_cell.1} parent=1 // pred_region
      _
    $region65: #{gdas_reduction_cell.1} parent=1 // pred_fallthru
      _
    // Predicated region
    $region66: #{gdas_reduction_cell.1} parent=1 // pred_check
      _
    $region67: #{gdas_reduction_cell.1} parent=1 // pred_check_branch
      %56 = sbr.rel (0) target = $region69
    $region68: #{gdas_reduction_cell.1} parent=1 // pred_region
      _
    $region69: #{gdas_reduction_cell.1} parent=1 // pred_fallthru
      _
    %v57 = vld [vmem:[%s0] sm:$0xff]
    %v58 = vld [vmem:[%s0 + $0x8] sm:$0xff]
    %v59 = vld [vmem:[%s0 + $0x10] sm:$0xff]
    %v60 = vld [vmem:[%s0 + $0x18] sm:$0xff]
    %v61 = vld [vmem:[%s0 + $0x20] sm:$0xff]
    %v62 = vld [vmem:[%s0 + $0x28] sm:$0xff]
    %v63 = vld [vmem:[%s0 + $0x30] sm:$0xff]
    %v64 = vld [vmem:[%s0 + $0x38] sm:$0xff]
    %v65 = vld [vmem:[%s0 + $0x40] sm:$0xff]
    %v66 = vld [vmem:[%s0 + $0x48] sm:$0xff]
    %v67 = vld [vmem:[%s0 + $0x50] sm:$0xff]
    %v68 = vld [vmem:[%s0 + $0x58] sm:$0xff]
    %v69 = vld [vmem:[%s0 + $0x60] sm:$0xff]
    %v70 = vld [vmem:[%s0 + $0x68] sm:$0xff]
    %v71 = vld [vmem:[%s0 + $0x70] sm:$0xff]
    %v72 = vld [vmem:[%s0 + $0x78] sm:$0xff]
    %v73 = vld [vmem:[%s0 + $0x80] sm:$0xff]
    %v74 = vld [vmem:[%s0 + $0x88] sm:$0xff]
    %v75 = vld [vmem:[%s0 + $0x90] sm:$0xff]
    %v76 = vld [vmem:[%s0 + $0x98] sm:$0xff]
    %v77 = vld [vmem:[%s0 + $0xa0] sm:$0xff]
    %v78 = vld [vmem:[%s0 + $0xa8] sm:$0xff]
    %v79 = vld [vmem:[%s0 + $0xb0] sm:$0xff]
    %v80 = vld [vmem:[%s0 + $0xb8] sm:$0xff]
    %v81 = vld [vmem:[%s0 + $0xc0] sm:$0xff]
    %v82 = vld [vmem:[%s0 + $0xc8] sm:$0xff]
    %v83 = vld [vmem:[%s0 + $0xd0] sm:$0xff]
    %v84 = vld [vmem:[%s0 + $0xd8] sm:$0xff]
    %v85 = vld [vmem:[%s0 + $0xe0] sm:$0xff]
    %v86 = vld [vmem:[%s0 + $0xe8] sm:$0xff]
    %v87 = vld [vmem:[%s0 + $0xf0] sm:$0xff]
    %v88 = vld [vmem:[%s0 + $0xf8] sm:$0xff]
    %v89 = vld [vmem:[%s0 + $0x100] sm:$0xff]
    %v90 = vld [vmem:[%s0 + $0x108] sm:$0xff]
    %v91 = vld [vmem:[%s0 + $0x110] sm:$0xff]
    %v92 = vld [vmem:[%s0 + $0x118] sm:$0xff]
    %v93 = vld [vmem:[%s0 + $0x120] sm:$0xff]
    %v94 = vld [vmem:[%s0 + $0x128] sm:$0xff]
    %v95 = vld [vmem:[%s0 + $0x130] sm:$0xff]
    %v96 = vld [vmem:[%s0 + $0x138] sm:$0xff]
    %v97 = vld [vmem:[%s0 + $0x140] sm:$0xff]
    %v98 = vld [vmem:[%s0 + $0x148] sm:$0xff]
    %v99 = vld [vmem:[%s0 + $0x150] sm:$0xff]
    %v100 = vld [vmem:[%s0 + $0x158] sm:$0xff]
    %v101 = vld [vmem:[%s0 + $0x160] sm:$0xff]
    %v102 = vld [vmem:[%s0 + $0x168] sm:$0xff]
    %v103 = vld [vmem:[%s0 + $0x170] sm:$0xff]
    %v104 = vld [vmem:[%s0 + $0x178] sm:$0xff]
    %v105 = vld [vmem:[%s0 + $0x180] sm:$0xff]
    %v106 = vld [vmem:[%s0 + $0x188] sm:$0xff]
    %v107 = vld [vmem:[%s0 + $0x190] sm:$0xff]
    %v108 = vld [vmem:[%s0 + $0x198] sm:$0xff]
    %v109 = vld [vmem:[%s0 + $0x1a0] sm:$0xff]
    %v110 = vld [vmem:[%s0 + $0x1a8] sm:$0xff]
    %v111 = vld [vmem:[%s0 + $0x1b0] sm:$0xff]
    %v112 = vld [vmem:[%s0 + $0x1b8] sm:$0xff]
    %v113 = vld [vmem:[%s0 + $0x1c0] sm:$0xff]
    %v114 = vld [vmem:[%s0 + $0x1c8] sm:$0xff]
    %v115 = vld [vmem:[%s0 + $0x1d0] sm:$0xff]
    %v116 = vld [vmem:[%s0 + $0x1d8] sm:$0xff]
    %v117 = vld [vmem:[%s0 + $0x1e0] sm:$0xff]
    %v118 = vld [vmem:[%s0 + $0x1e8] sm:$0xff]
    %v119 = vld [vmem:[%s0 + $0x1f0] sm:$0xff]
    %v120 = vld [vmem:[%s0 + $0x1f8] sm:$0xff]
    %v121 = vmax.f32 %v57, 0.0
    %v122 = vmax.f32 %v58, 0.0
    %v123 = vmax.f32 %v59, 0.0
    %v124 = vmax.f32 %v60, 0.0
    %v125 = vmax.f32 %v61, 0.0
    %v126 = vmax.f32 %v62, 0.0
    %v127 = vmax.f32 %v63, 0.0
    %v128 = vmax.f32 %v64, 0.0
    %v129 = vmax.f32 %v65, 0.0
    %v130 = vmax.f32 %v66, 0.0
    %v131 = vmax.f32 %v67, 0.0
    %v132 = vmax.f32 %v68, 0.0
    %v133 = vmax.f32 %v69, 0.0
    %v134 = vmax.f32 %v70, 0.0
    %v135 = vmax.f32 %v71, 0.0
    %v136 = vmax.f32 %v72, 0.0
    %v137 = vmax.f32 %v73, 0.0
    %v138 = vmax.f32 %v74, 0.0
    %v139 = vmax.f32 %v75, 0.0
    %v140 = vmax.f32 %v76, 0.0
    %v141 = vmax.f32 %v77, 0.0
    %v142 = vmax.f32 %v78, 0.0
    %v143 = vmax.f32 %v79, 0.0
    %v144 = vmax.f32 %v80, 0.0
    %v145 = vmax.f32 %v81, 0.0
    %v146 = vmax.f32 %v82, 0.0
    %v147 = vmax.f32 %v83, 0.0
    %v148 = vmax.f32 %v84, 0.0
    %v149 = vmax.f32 %v85, 0.0
    %v150 = vmax.f32 %v86, 0.0
    %v151 = vmax.f32 %v87, 0.0
    %v152 = vmax.f32 %v88, 0.0
    %v153 = vmax.f32 %v89, 0.0
    %v154 = vmax.f32 %v90, 0.0
    %v155 = vmax.f32 %v91, 0.0
    %v156 = vmax.f32 %v92, 0.0
    %v157 = vmax.f32 %v93, 0.0
    %v158 = vmax.f32 %v94, 0.0
    %v159 = vmax.f32 %v95, 0.0
    %v160 = vmax.f32 %v96, 0.0
    %v161 = vmax.f32 %v97, 0.0
    %v162 = vmax.f32 %v98, 0.0
    %v163 = vmax.f32 %v99, 0.0
    %v164 = vmax.f32 %v100, 0.0
    %v165 = vmax.f32 %v101, 0.0
    %v166 = vmax.f32 %v102, 0.0
    %v167 = vmax.f32 %v103, 0.0
    %v168 = vmax.f32 %v104, 0.0
    %v169 = vmax.f32 %v105, 0.0
    %v170 = vmax.f32 %v106, 0.0
    %v171 = vmax.f32 %v107, 0.0
    %v172 = vmax.f32 %v108, 0.0
    %v173 = vmax.f32 %v109, 0.0
    %v174 = vmax.f32 %v110, 0.0
    %v175 = vmax.f32 %v111, 0.0
    %v176 = vmax.f32 %v112, 0.0
    %v177 = vmax.f32 %v113, 0.0
    %v178 = vmax.f32 %v114, 0.0
    %v179 = vmax.f32 %v115, 0.0
    %v180 = vmax.f32 %v116, 0.0
    %v181 = vmax.f32 %v117, 0.0
    %v182 = vmax.f32 %v118, 0.0
    %v183 = vmax.f32 %v119, 0.0
    %v184 = vmax.f32 %v120, 0.0
    %v185 = vld [vmem:[%s1] sm:$0xff]
    %v186 = vld [vmem:[%s1 + $0x8] sm:$0xff]
    %v187 = vld [vmem:[%s1 + $0x10] sm:$0xff]
    %v188 = vld [vmem:[%s1 + $0x18] sm:$0xff]
    %v189 = vld [vmem:[%s1 + $0x20] sm:$0xff]
    %v190 = vld [vmem:[%s1 + $0x28] sm:$0xff]
    %vm191 = vcmask 392192
    %v193 = vsel %vm191, %v121, 0
    %v196 = vsel %vm191, %v122, 0
    %v199 = vsel %vm191, %v123, 0
    %v202 = vsel %vm191, %v124, 0
    %v205 = vsel %vm191, %v125, 0
    %v208 = vsel %vm191, %v126, 0
    %v211 = vsel %vm191, %v127, 0
    %v214 = vsel %vm191, %v128, 0
    %v217 = vsel %vm191, %v129, 0
    %v220 = vsel %vm191, %v130, 0
    %v223 = vsel %vm191, %v131, 0
    %v226 = vsel %vm191, %v132, 0
    %v229 = vsel %vm191, %v133, 0
    %v232 = vsel %vm191, %v134, 0
    %v235 = vsel %vm191, %v135, 0
    %v238 = vsel %vm191, %v136, 0
    %v241 = vsel %vm191, %v137, 0
    %v244 = vsel %vm191, %v138, 0
    %v247 = vsel %vm191, %v139, 0
    %v250 = vsel %vm191, %v140, 0
    %v253 = vsel %vm191, %v141, 0
    %v256 = vsel %vm191, %v142, 0
    %v259 = vsel %vm191, %v143, 0
    %v262 = vsel %vm191, %v144, 0
    %v265 = vsel %vm191, %v145, 0
    %v268 = vsel %vm191, %v146, 0
    %v271 = vsel %vm191, %v147, 0
    %v274 = vsel %vm191, %v148, 0
    %v277 = vsel %vm191, %v149, 0
    %v280 = vsel %vm191, %v150, 0
    %v283 = vsel %vm191, %v151, 0
    %v286 = vsel %vm191, %v152, 0
    %v289 = vsel %vm191, %v153, 0
    %v292 = vsel %vm191, %v154, 0
    %v295 = vsel %vm191, %v155, 0
    %v298 = vsel %vm191, %v156, 0
    %v301 = vsel %vm191, %v157, 0
    %v304 = vsel %vm191, %v158, 0
    %v307 = vsel %vm191, %v159, 0
    %v310 = vsel %vm191, %v160, 0
    %v313 = vsel %vm191, %v161, 0
    %v316 = vsel %vm191, %v162, 0
    %v319 = vsel %vm191, %v163, 0
    %v322 = vsel %vm191, %v164, 0
    %v325 = vsel %vm191, %v165, 0
    %v328 = vsel %vm191, %v166, 0
    %v331 = vsel %vm191, %v167, 0
    %v334 = vsel %vm191, %v168, 0
    %v337 = vsel %vm191, %v169, 0
    %v340 = vsel %vm191, %v170, 0
    %v343 = vsel %vm191, %v171, 0
    %v346 = vsel %vm191, %v172, 0
    %v349 = vsel %vm191, %v173, 0
    %v352 = vsel %vm191, %v174, 0
    %v355 = vsel %vm191, %v175, 0
    %v358 = vsel %vm191, %v176, 0
    %v361 = vsel %vm191, %v177, 0
    %v364 = vsel %vm191, %v178, 0
    %v367 = vsel %vm191, %v179, 0
    %v370 = vsel %vm191, %v180, 0
    %v373 = vsel %vm191, %v181, 0
    %v376 = vsel %vm191, %v182, 0
    %v379 = vsel %vm191, %v183, 0
    %v382 = vsel %vm191, %v184, 0
    %384 = vmatprep.subr.mxu0 0.0
    %385 = vmatpush1.msra.mxu0 %v185
    %386 = vmatprep.subr.mxu0 0.0
    %387 = vmatpush1.msra.mxu0 %v186
    %388 = vmatprep.subr.mxu0 0.0
    %389 = vmatpush1.msra.mxu0 %v187
    %390 = vmatprep.subr.mxu0 0.0
    %391 = vmatpush1.msra.mxu0 %v188
    %392 = vmatprep.subr.mxu0 0.0
    %393 = vmatpush1.msra.mxu0 %v189
    %394 = vmatprep.subr.mxu0 0.0
    %395 = vmatpush1.msra.mxu0 %v190
    %396 = vmatprep.subr.mxu0 0.0
    %397 = vmatpush1.msra.mxu0 0.0
    %398 = vmatprep.subr.mxu0 0.0
    %399 = vmatpush1.msra.mxu0 0.0
    %400 = vmatprep.subr.mxu0 0.0
    %401 = vmatpush1.msra.mxu0 0.0
    %402 = vmatprep.subr.mxu0 0.0
    %403 = vmatpush1.msra.mxu0 0.0
    %404 = vmatprep.subr.mxu0 0.0
    %405 = vmatpush1.msra.mxu0 0.0
    %406 = vmatprep.subr.mxu0 0.0
    %407 = vmatpush1.msra.mxu0 0.0
    %408 = vmatprep.subr.mxu0 0.0
    %409 = vmatpush1.msra.mxu0 0.0
    %410 = vmatprep.subr.mxu0 0.0
    %411 = vmatpush1.msra.mxu0 0.0
    %412 = vmatprep.subr.mxu0 0.0
    %413 = vmatpush1.msra.mxu0 0.0
    %414 = vmatprep.subr.mxu0 0.0
    %415 = vmatpush1.msra.mxu0 0.0
    %416 = vmatprep.subr.mxu0 0.0
    %417 = vmatpush1.msra.mxu0 0.0
    %418 = vmatprep.subr.mxu0 0.0
    %419 = vmatpush1.msra.mxu0 0.0
    %420 = vmatprep.subr.mxu0 0.0
    %421 = vmatpush1.msra.mxu0 0.0
    %422 = vmatprep.subr.mxu0 0.0
    %423 = vmatpush1.msra.mxu0 0.0
    %424 = vmatprep.subr.mxu0 0.0
    %425 = vmatpush1.msra.mxu0 0.0
    %426 = vmatprep.subr.mxu0 0.0
    %427 = vmatpush1.msra.mxu0 0.0
    %428 = vmatprep.subr.mxu0 0.0
    %429 = vmatpush1.msra.mxu0 0.0
    %430 = vmatprep.subr.mxu0 0.0
    %431 = vmatpush1.msra.mxu0 0.0
    %432 = vmatprep.subr.mxu0 0.0
    %433 = vmatpush1.msra.mxu0 0.0
    %434 = vmatprep.subr.mxu0 0.0
    %435 = vmatpush1.msra.mxu0 0.0
    %436 = vmatprep.subr.mxu0 0.0
    %437 = vmatpush1.msra.mxu0 0.0
    %438 = vmatprep.subr.mxu0 0.0
    %439 = vmatpush1.msra.mxu0 0.0
    %440 = vmatprep.subr.mxu0 0.0
    %441 = vmatpush1.msra.mxu0 0.0
    %442 = vmatprep.subr.mxu0 0.0
    %443 = vmatpush1.msra.mxu0 0.0
    %444 = vmatprep.subr.mxu0 0.0
    %445 = vmatpush1.msra.mxu0 0.0
    %446 = vmatprep.subr.mxu0 0.0
    %447 = vmatpush1.msra.mxu0 0.0
    %448 = vmatprep.mubr.f32.mxu0 0.0
    %449 = vmatmul.mubr.f32.gmra.mrb[0].mxu0 %v193
    %v450 = vpop.f32.mrb[0].mxu0
    %v451 = vadd.f32 0.0, %v450
    %v452 = vpop.f32.mrb[0].mxu0
    %453 = vmatprep.mubr.f32.mxu0 0.0
    %454 = vmatmul.mubr.f32.gmra.mrb[0].mxu0 %v196
    %v455 = vpop.f32.mrb[0].mxu0
    %v456 = vadd.f32 0.0, %v455
    %v457 = vpop.f32.mrb[0].mxu0
    %458 = vmatprep.mubr.f32.mxu0 0.0
    %459 = vmatmul.mubr.f32.gmra.mrb[0].mxu0 %v199
    %v460 = vpop.f32.mrb[0].mxu0
    %v461 = vadd.f32 0.0, %v460
    %v462 = vpop.f32.mrb[0].mxu0
    %463 = vmatprep.mubr.f32.mxu0 0.0
    %464 = vmatmul.mubr.f32.gmra.mrb[0].mxu0 %v202
    %v465 = vpop.f32.mrb[0].mxu0
    %v466 = vadd.f32 0.0, %v465
    %v467 = vpop.f32.mrb[0].mxu0
    %468 = vmatprep.mubr.f32.mxu0 0.0
    %469 = vmatmul.mubr.f32.gmra.mrb[0].mxu0 %v205
    %v470 = vpop.f32.mrb[0].mxu0
    %v471 = vadd.f32 0.0, %v470
    %v472 = vpop.f32.mrb[0].mxu0
    %473 = vmatprep.mubr.f32.mxu0 0.0
    %474 = vmatmul.mubr.f32.gmra.mrb[0].mxu0 %v208
    %v475 = vpop.f32.mrb[0].mxu0
    %v476 = vadd.f32 0.0, %v475
    %v477 = vpop.f32.mrb[0].mxu0
    %478 = vmatprep.mubr.f32.mxu0 0.0
    %479 = vmatmul.mubr.f32.gmra.mrb[0].mxu0 %v211
    %v480 = vpop.f32.mrb[0].mxu0
    %v481 = vadd.f32 0.0, %v480
    %v482 = vpop.f32.mrb[0].mxu0
    %483 = vmatprep.mubr.f32.mxu0 0.0
    %484 = vmatmul.mubr.f32.gmra.mrb[0].mxu0 %v214
    %v485 = vpop.f32.mrb[0].mxu0
    %v486 = vadd.f32 0.0, %v485
    %v487 = vpop.f32.mrb[0].mxu0
    %488 = vmatprep.mubr.f32.mxu0 0.0
    %489 = vmatmul.mubr.f32.gmra.mrb[0].mxu0 %v217
    %v490 = vpop.f32.mrb[0].mxu0
    %v491 = vadd.f32 0.0, %v490
    %v492 = vpop.f32.mrb[0].mxu0
    %493 = vmatprep.mubr.f32.mxu0 0.0
    %494 = vmatmul.mubr.f32.gmra.mrb[0].mxu0 %v220
    %v495 = vpop.f32.mrb[0].mxu0
    %v496 = vadd.f32 0.0, %v495
    %v497 = vpop.f32.mrb[0].mxu0
    %498 = vmatprep.mubr.f32.mxu0 0.0
    %499 = vmatmul.mubr.f32.gmra.mrb[0].mxu0 %v223
    %v500 = vpop.f32.mrb[0].mxu0
    %v501 = vadd.f32 0.0, %v500
    %v502 = vpop.f32.mrb[0].mxu0
    %503 = vmatprep.mubr.f32.mxu0 0.0
    %504 = vmatmul.mubr.f32.gmra.mrb[0].mxu0 %v226
    %v505 = vpop.f32.mrb[0].mxu0
    %v506 = vadd.f32 0.0, %v505
    %v507 = vpop.f32.mrb[0].mxu0
    %508 = vmatprep.mubr.f32.mxu0 0.0
    %509 = vmatmul.mubr.f32.gmra.mrb[0].mxu0 %v229
    %v510 = vpop.f32.mrb[0].mxu0
    %v511 = vadd.f32 0.0, %v510
    %v512 = vpop.f32.mrb[0].mxu0
    %513 = vmatprep.mubr.f32.mxu0 0.0
    %514 = vmatmul.mubr.f32.gmra.mrb[0].mxu0 %v232
    %v515 = vpop.f32.mrb[0].mxu0
    %v516 = vadd.f32 0.0, %v515
    %v517 = vpop.f32.mrb[0].mxu0
    %518 = vmatprep.mubr.f32.mxu0 0.0
    %519 = vmatmul.mubr.f32.gmra.mrb[0].mxu0 %v235
    %v520 = vpop.f32.mrb[0].mxu0
    %v521 = vadd.f32 0.0, %v520
    %v522 = vpop.f32.mrb[0].mxu0
    %523 = vmatprep.mubr.f32.mxu0 0.0
    %524 = vmatmul.mubr.f32.gmra.mrb[0].mxu0 %v238
    %v525 = vpop.f32.mrb[0].mxu0
    %v526 = vadd.f32 0.0, %v525
    %v527 = vpop.f32.mrb[0].mxu0
    %528 = vmatprep.mubr.f32.mxu0 0.0
    %529 = vmatmul.mubr.f32.gmra.mrb[0].mxu0 %v241
    %v530 = vpop.f32.mrb[0].mxu0
    %v531 = vadd.f32 0.0, %v530
    %v532 = vpop.f32.mrb[0].mxu0
    %533 = vmatprep.mubr.f32.mxu0 0.0
    %534 = vmatmul.mubr.f32.gmra.mrb[0].mxu0 %v244
    %v535 = vpop.f32.mrb[0].mxu0
    %v536 = vadd.f32 0.0, %v535
    %v537 = vpop.f32.mrb[0].mxu0
    %538 = vmatprep.mubr.f32.mxu0 0.0
    %539 = vmatmul.mubr.f32.gmra.mrb[0].mxu0 %v247
    %v540 = vpop.f32.mrb[0].mxu0
    %v541 = vadd.f32 0.0, %v540
    %v542 = vpop.f32.mrb[0].mxu0
    %543 = vmatprep.mubr.f32.mxu0 0.0
    %544 = vmatmul.mubr.f32.gmra.mrb[0].mxu0 %v250
    %v545 = vpop.f32.mrb[0].mxu0
    %v546 = vadd.f32 0.0, %v545
    %v547 = vpop.f32.mrb[0].mxu0
    %548 = vmatprep.mubr.f32.mxu0 0.0
    %549 = vmatmul.mubr.f32.gmra.mrb[0].mxu0 %v253
    %v550 = vpop.f32.mrb[0].mxu0
    %v551 = vadd.f32 0.0, %v550
    %v552 = vpop.f32.mrb[0].mxu0
    %553 = vmatprep.mubr.f32.mxu0 0.0
    %554 = vmatmul.mubr.f32.gmra.mrb[0].mxu0 %v256
    %v555 = vpop.f32.mrb[0].mxu0
    %v556 = vadd.f32 0.0, %v555
    %v557 = vpop.f32.mrb[0].mxu0
    %558 = vmatprep.mubr.f32.mxu0 0.0
    %559 = vmatmul.mubr.f32.gmra.mrb[0].mxu0 %v259
    %v560 = vpop.f32.mrb[0].mxu0
    %v561 = vadd.f32 0.0, %v560
    %v562 = vpop.f32.mrb[0].mxu0
    %563 = vmatprep.mubr.f32.mxu0 0.0
    %564 = vmatmul.mubr.f32.gmra.mrb[0].mxu0 %v262
    %v565 = vpop.f32.mrb[0].mxu0
    %v566 = vadd.f32 0.0, %v565
    %v567 = vpop.f32.mrb[0].mxu0
    %568 = vmatprep.mubr.f32.mxu0 0.0
    %569 = vmatmul.mubr.f32.gmra.mrb[0].mxu0 %v265
    %v570 = vpop.f32.mrb[0].mxu0
    %v571 = vadd.f32 0.0, %v570
    %v572 = vpop.f32.mrb[0].mxu0
    %573 = vmatprep.mubr.f32.mxu0 0.0
    %574 = vmatmul.mubr.f32.gmra.mrb[0].mxu0 %v268
    %v575 = vpop.f32.mrb[0].mxu0
    %v576 = vadd.f32 0.0, %v575
    %v577 = vpop.f32.mrb[0].mxu0
    %578 = vmatprep.mubr.f32.mxu0 0.0
    %579 = vmatmul.mubr.f32.gmra.mrb[0].mxu0 %v271
    %v580 = vpop.f32.mrb[0].mxu0
    %v581 = vadd.f32 0.0, %v580
    %v582 = vpop.f32.mrb[0].mxu0
    %583 = vmatprep.mubr.f32.mxu0 0.0
    %584 = vmatmul.mubr.f32.gmra.mrb[0].mxu0 %v274
    %v585 = vpop.f32.mrb[0].mxu0
    %v586 = vadd.f32 0.0, %v585
    %v587 = vpop.f32.mrb[0].mxu0
    %588 = vmatprep.mubr.f32.mxu0 0.0
    %589 = vmatmul.mubr.f32.gmra.mrb[0].mxu0 %v277
    %v590 = vpop.f32.mrb[0].mxu0
    %v591 = vadd.f32 0.0, %v590
    %v592 = vpop.f32.mrb[0].mxu0
    %593 = vmatprep.mubr.f32.mxu0 0.0
    %594 = vmatmul.mubr.f32.gmra.mrb[0].mxu0 %v280
    %v595 = vpop.f32.mrb[0].mxu0
    %v596 = vadd.f32 0.0, %v595
    %v597 = vpop.f32.mrb[0].mxu0
    %598 = vmatprep.mubr.f32.mxu0 0.0
    %599 = vmatmul.mubr.f32.gmra.mrb[0].mxu0 %v283
    %v600 = vpop.f32.mrb[0].mxu0
    %v601 = vadd.f32 0.0, %v600
    %v602 = vpop.f32.mrb[0].mxu0
    %603 = vmatprep.mubr.f32.mxu0 0.0
    %604 = vmatmul.mubr.f32.gmra.mrb[0].mxu0 %v286
    %v605 = vpop.f32.mrb[0].mxu0
    %v606 = vadd.f32 0.0, %v605
    %v607 = vpop.f32.mrb[0].mxu0
    %608 = vmatprep.mubr.f32.mxu0 0.0
    %609 = vmatmul.mubr.f32.gmra.mrb[0].mxu0 %v289
    %v610 = vpop.f32.mrb[0].mxu0
    %v611 = vadd.f32 0.0, %v610
    %v612 = vpop.f32.mrb[0].mxu0
    %613 = vmatprep.mubr.f32.mxu0 0.0
    %614 = vmatmul.mubr.f32.gmra.mrb[0].mxu0 %v292
    %v615 = vpop.f32.mrb[0].mxu0
    %v616 = vadd.f32 0.0, %v615
    %v617 = vpop.f32.mrb[0].mxu0
    %618 = vmatprep.mubr.f32.mxu0 0.0
    %619 = vmatmul.mubr.f32.gmra.mrb[0].mxu0 %v295
    %v620 = vpop.f32.mrb[0].mxu0
    %v621 = vadd.f32 0.0, %v620
    %v622 = vpop.f32.mrb[0].mxu0
    %623 = vmatprep.mubr.f32.mxu0 0.0
    %624 = vmatmul.mubr.f32.gmra.mrb[0].mxu0 %v298
    %v625 = vpop.f32.mrb[0].mxu0
    %v626 = vadd.f32 0.0, %v625
    %v627 = vpop.f32.mrb[0].mxu0
    %628 = vmatprep.mubr.f32.mxu0 0.0
    %629 = vmatmul.mubr.f32.gmra.mrb[0].mxu0 %v301
    %v630 = vpop.f32.mrb[0].mxu0
    %v631 = vadd.f32 0.0, %v630
    %v632 = vpop.f32.mrb[0].mxu0
    %633 = vmatprep.mubr.f32.mxu0 0.0
    %634 = vmatmul.mubr.f32.gmra.mrb[0].mxu0 %v304
    %v635 = vpop.f32.mrb[0].mxu0
    %v636 = vadd.f32 0.0, %v635
    %v637 = vpop.f32.mrb[0].mxu0
    %638 = vmatprep.mubr.f32.mxu0 0.0
    %639 = vmatmul.mubr.f32.gmra.mrb[0].mxu0 %v307
    %v640 = vpop.f32.mrb[0].mxu0
    %v641 = vadd.f32 0.0, %v640
    %v642 = vpop.f32.mrb[0].mxu0
    %643 = vmatprep.mubr.f32.mxu0 0.0
    %644 = vmatmul.mubr.f32.gmra.mrb[0].mxu0 %v310
    %v645 = vpop.f32.mrb[0].mxu0
    %v646 = vadd.f32 0.0, %v645
    %v647 = vpop.f32.mrb[0].mxu0
    %648 = vmatprep.mubr.f32.mxu0 0.0
    %649 = vmatmul.mubr.f32.gmra.mrb[0].mxu0 %v313
    %v650 = vpop.f32.mrb[0].mxu0
    %v651 = vadd.f32 0.0, %v650
    %v652 = vpop.f32.mrb[0].mxu0
    %653 = vmatprep.mubr.f32.mxu0 0.0
    %654 = vmatmul.mubr.f32.gmra.mrb[0].mxu0 %v316
    %v655 = vpop.f32.mrb[0].mxu0
    %v656 = vadd.f32 0.0, %v655
    %v657 = vpop.f32.mrb[0].mxu0
    %658 = vmatprep.mubr.f32.mxu0 0.0
    %659 = vmatmul.mubr.f32.gmra.mrb[0].mxu0 %v319
    %v660 = vpop.f32.mrb[0].mxu0
    %v661 = vadd.f32 0.0, %v660
    %v662 = vpop.f32.mrb[0].mxu0
    %663 = vmatprep.mubr.f32.mxu0 0.0
    %664 = vmatmul.mubr.f32.gmra.mrb[0].mxu0 %v322
    %v665 = vpop.f32.mrb[0].mxu0
    %v666 = vadd.f32 0.0, %v665
    %v667 = vpop.f32.mrb[0].mxu0
    %668 = vmatprep.mubr.f32.mxu0 0.0
    %669 = vmatmul.mubr.f32.gmra.mrb[0].mxu0 %v325
    %v670 = vpop.f32.mrb[0].mxu0
    %v671 = vadd.f32 0.0, %v670
    %v672 = vpop.f32.mrb[0].mxu0
    %673 = vmatprep.mubr.f32.mxu0 0.0
    %674 = vmatmul.mubr.f32.gmra.mrb[0].mxu0 %v328
    %v675 = vpop.f32.mrb[0].mxu0
    %v676 = vadd.f32 0.0, %v675
    %v677 = vpop.f32.mrb[0].mxu0
    %678 = vmatprep.mubr.f32.mxu0 0.0
    %679 = vmatmul.mubr.f32.gmra.mrb[0].mxu0 %v331
    %v680 = vpop.f32.mrb[0].mxu0
    %v681 = vadd.f32 0.0, %v680
    %v682 = vpop.f32.mrb[0].mxu0
    %683 = vmatprep.mubr.f32.mxu0 0.0
    %684 = vmatmul.mubr.f32.gmra.mrb[0].mxu0 %v334
    %v685 = vpop.f32.mrb[0].mxu0
    %v686 = vadd.f32 0.0, %v685
    %v687 = vpop.f32.mrb[0].mxu0
    %688 = vmatprep.mubr.f32.mxu0 0.0
    %689 = vmatmul.mubr.f32.gmra.mrb[0].mxu0 %v337
    %v690 = vpop.f32.mrb[0].mxu0
    %v691 = vadd.f32 0.0, %v690
    %v692 = vpop.f32.mrb[0].mxu0
    %693 = vmatprep.mubr.f32.mxu0 0.0
    %694 = vmatmul.mubr.f32.gmra.mrb[0].mxu0 %v340
    %v695 = vpop.f32.mrb[0].mxu0
    %v696 = vadd.f32 0.0, %v695
    %v697 = vpop.f32.mrb[0].mxu0
    %698 = vmatprep.mubr.f32.mxu0 0.0
    %699 = vmatmul.mubr.f32.gmra.mrb[0].mxu0 %v343
    %v700 = vpop.f32.mrb[0].mxu0
    %v701 = vadd.f32 0.0, %v700
    %v702 = vpop.f32.mrb[0].mxu0
    %703 = vmatprep.mubr.f32.mxu0 0.0
    %704 = vmatmul.mubr.f32.gmra.mrb[0].mxu0 %v346
    %v705 = vpop.f32.mrb[0].mxu0
    %v706 = vadd.f32 0.0, %v705
    %v707 = vpop.f32.mrb[0].mxu0
    %708 = vmatprep.mubr.f32.mxu0 0.0
    %709 = vmatmul.mubr.f32.gmra.mrb[0].mxu0 %v349
    %v710 = vpop.f32.mrb[0].mxu0
    %v711 = vadd.f32 0.0, %v710
    %v712 = vpop.f32.mrb[0].mxu0
    %713 = vmatprep.mubr.f32.mxu0 0.0
    %714 = vmatmul.mubr.f32.gmra.mrb[0].mxu0 %v352
    %v715 = vpop.f32.mrb[0].mxu0
    %v716 = vadd.f32 0.0, %v715
    %v717 = vpop.f32.mrb[0].mxu0
    %718 = vmatprep.mubr.f32.mxu0 0.0
    %719 = vmatmul.mubr.f32.gmra.mrb[0].mxu0 %v355
    %v720 = vpop.f32.mrb[0].mxu0
    %v721 = vadd.f32 0.0, %v720
    %v722 = vpop.f32.mrb[0].mxu0
    %723 = vmatprep.mubr.f32.mxu0 0.0
    %724 = vmatmul.mubr.f32.gmra.mrb[0].mxu0 %v358
    %v725 = vpop.f32.mrb[0].mxu0
    %v726 = vadd.f32 0.0, %v725
    %v727 = vpop.f32.mrb[0].mxu0
    %728 = vmatprep.mubr.f32.mxu0 0.0
    %729 = vmatmul.mubr.f32.gmra.mrb[0].mxu0 %v361
    %v730 = vpop.f32.mrb[0].mxu0
    %v731 = vadd.f32 0.0, %v730
    %v732 = vpop.f32.mrb[0].mxu0
    %733 = vmatprep.mubr.f32.mxu0 0.0
    %734 = vmatmul.mubr.f32.gmra.mrb[0].mxu0 %v364
    %v735 = vpop.f32.mrb[0].mxu0
    %v736 = vadd.f32 0.0, %v735
    %v737 = vpop.f32.mrb[0].mxu0
    %738 = vmatprep.mubr.f32.mxu0 0.0
    %739 = vmatmul.mubr.f32.gmra.mrb[0].mxu0 %v367
    %v740 = vpop.f32.mrb[0].mxu0
    %v741 = vadd.f32 0.0, %v740
    %v742 = vpop.f32.mrb[0].mxu0
    %743 = vmatprep.mubr.f32.mxu0 0.0
    %744 = vmatmul.mubr.f32.gmra.mrb[0].mxu0 %v370
    %v745 = vpop.f32.mrb[0].mxu0
    %v746 = vadd.f32 0.0, %v745
    %v747 = vpop.f32.mrb[0].mxu0
    %748 = vmatprep.mubr.f32.mxu0 0.0
    %749 = vmatmul.mubr.f32.gmra.mrb[0].mxu0 %v373
    %v750 = vpop.f32.mrb[0].mxu0
    %v751 = vadd.f32 0.0, %v750
    %v752 = vpop.f32.mrb[0].mxu0
    %753 = vmatprep.mubr.f32.mxu0 0.0
    %754 = vmatmul.mubr.f32.gmra.mrb[0].mxu0 %v376
    %v755 = vpop.f32.mrb[0].mxu0
    %v756 = vadd.f32 0.0, %v755
    %v757 = vpop.f32.mrb[0].mxu0
    %758 = vmatprep.mubr.f32.mxu0 0.0
    %759 = vmatmul.mubr.f32.gmra.mrb[0].mxu0 %v379
    %v760 = vpop.f32.mrb[0].mxu0
    %v761 = vadd.f32 0.0, %v760
    %v762 = vpop.f32.mrb[0].mxu0
    %763 = vmatprep.mubr.f32.mxu0 0.0
    %764 = vmatmul.mubr.f32.gmra.mrb[0].mxu0 %v382
    %v765 = vpop.f32.mrb[0].mxu0
    %v766 = vadd.f32 0.0, %v765
    %v767 = vpop.f32.mrb[0].mxu0
    %768 = vdwg.mxu0
    %v769 = vld [vmem:[%s2] sm:$0x1]
    %v770 = vld [vmem:[%s3] sm:$0x1]
    %vm771 = vcmask 523264
    %v772 = vsel %vm771, %v451, 0.0
    %v773 = vsel %vm771, %v456, 0.0
    %v774 = vadd.f32 %v772, %v773
    %v775 = vsel %vm771, %v461, 0.0
    %v776 = vadd.f32 %v774, %v775
    %v777 = vsel %vm771, %v466, 0.0
    %v778 = vadd.f32 %v776, %v777
    %v779 = vsel %vm771, %v471, 0.0
    %v780 = vadd.f32 %v778, %v779
    %v781 = vsel %vm771, %v476, 0.0
    %v782 = vadd.f32 %v780, %v781
    %v783 = vsel %vm771, %v481, 0.0
    %v784 = vadd.f32 %v782, %v783
    %v785 = vsel %vm771, %v486, 0.0
    %v786 = vadd.f32 %v784, %v785
    %v787 = vsel %vm771, %v491, 0.0
    %v788 = vadd.f32 %v786, %v787
    %v789 = vsel %vm771, %v496, 0.0
    %v790 = vadd.f32 %v788, %v789
    %v791 = vsel %vm771, %v501, 0.0
    %v792 = vadd.f32 %v790, %v791
    %v793 = vsel %vm771, %v506, 0.0
    %v794 = vadd.f32 %v792, %v793
    %v795 = vsel %vm771, %v511, 0.0
    %v796 = vadd.f32 %v794, %v795
    %v797 = vsel %vm771, %v516, 0.0
    %v798 = vadd.f32 %v796, %v797
    %v799 = vsel %vm771, %v521, 0.0
    %v800 = vadd.f32 %v798, %v799
    %v801 = vsel %vm771, %v526, 0.0
    %v802 = vadd.f32 %v800, %v801
    %v803 = vsel %vm771, %v531, 0.0
    %v804 = vadd.f32 %v802, %v803
    %v805 = vsel %vm771, %v536, 0.0
    %v806 = vadd.f32 %v804, %v805
    %v807 = vsel %vm771, %v541, 0.0
    %v808 = vadd.f32 %v806, %v807
    %v809 = vsel %vm771, %v546, 0.0
    %v810 = vadd.f32 %v808, %v809
    %v811 = vsel %vm771, %v551, 0.0
    %v812 = vadd.f32 %v810, %v811
    %v813 = vsel %vm771, %v556, 0.0
    %v814 = vadd.f32 %v812, %v813
    %v815 = vsel %vm771, %v561, 0.0
    %v816 = vadd.f32 %v814, %v815
    %v817 = vsel %vm771, %v566, 0.0
    %v818 = vadd.f32 %v816, %v817
    %v819 = vsel %vm771, %v571, 0.0
    %v820 = vadd.f32 %v818, %v819
    %v821 = vsel %vm771, %v576, 0.0
    %v822 = vadd.f32 %v820, %v821
    %v823 = vsel %vm771, %v581, 0.0
    %v824 = vadd.f32 %v822, %v823
    %v825 = vsel %vm771, %v586, 0.0
    %v826 = vadd.f32 %v824, %v825
    %v827 = vsel %vm771, %v591, 0.0
    %v828 = vadd.f32 %v826, %v827
    %v829 = vsel %vm771, %v596, 0.0
    %v830 = vadd.f32 %v828, %v829
    %v831 = vsel %vm771, %v601, 0.0
    %v832 = vadd.f32 %v830, %v831
    %v833 = vsel %vm771, %v606, 0.0
    %v834 = vadd.f32 %v832, %v833
    %v835 = vsel %vm771, %v611, 0.0
    %v836 = vadd.f32 %v834, %v835
    %v837 = vsel %vm771, %v616, 0.0
    %v838 = vadd.f32 %v836, %v837
    %v839 = vsel %vm771, %v621, 0.0
    %v840 = vadd.f32 %v838, %v839
    %v841 = vsel %vm771, %v626, 0.0
    %v842 = vadd.f32 %v840, %v841
    %v843 = vsel %vm771, %v631, 0.0
    %v844 = vadd.f32 %v842, %v843
    %v845 = vsel %vm771, %v636, 0.0
    %v846 = vadd.f32 %v844, %v845
    %v847 = vsel %vm771, %v641, 0.0
    %v848 = vadd.f32 %v846, %v847
    %v849 = vsel %vm771, %v646, 0.0
    %v850 = vadd.f32 %v848, %v849
    %v851 = vsel %vm771, %v651, 0.0
    %v852 = vadd.f32 %v850, %v851
    %v853 = vsel %vm771, %v656, 0.0
    %v854 = vadd.f32 %v852, %v853
    %v855 = vsel %vm771, %v661, 0.0
    %v856 = vadd.f32 %v854, %v855
    %v857 = vsel %vm771, %v666, 0.0
    %v858 = vadd.f32 %v856, %v857
    %v859 = vsel %vm771, %v671, 0.0
    %v860 = vadd.f32 %v858, %v859
    %v861 = vsel %vm771, %v676, 0.0
    %v862 = vadd.f32 %v860, %v861
    %v863 = vsel %vm771, %v681, 0.0
    %v864 = vadd.f32 %v862, %v863
    %v865 = vsel %vm771, %v686, 0.0
    %v866 = vadd.f32 %v864, %v865
    %v867 = vsel %vm771, %v691, 0.0
    %v868 = vadd.f32 %v866, %v867
    %v869 = vsel %vm771, %v696, 0.0
    %v870 = vadd.f32 %v868, %v869
    %v871 = vsel %vm771, %v701, 0.0
    %v872 = vadd.f32 %v870, %v871
    %v873 = vsel %vm771, %v706, 0.0
    %v874 = vadd.f32 %v872, %v873
    %v875 = vsel %vm771, %v711, 0.0
    %v876 = vadd.f32 %v874, %v875
    %v877 = vsel %vm771, %v716, 0.0
    %v878 = vadd.f32 %v876, %v877
    %v879 = vsel %vm771, %v721, 0.0
    %v880 = vadd.f32 %v878, %v879
    %v881 = vsel %vm771, %v726, 0.0
    %v882 = vadd.f32 %v880, %v881
    %v883 = vsel %vm771, %v731, 0.0
    %v884 = vadd.f32 %v882, %v883
    %v885 = vsel %vm771, %v736, 0.0
    %v886 = vadd.f32 %v884, %v885
    %v887 = vsel %vm771, %v741, 0.0
    %v888 = vadd.f32 %v886, %v887
    %v889 = vsel %vm771, %v746, 0.0
    %v890 = vadd.f32 %v888, %v889
    %v891 = vsel %vm771, %v751, 0.0
    %v892 = vadd.f32 %v890, %v891
    %v893 = vsel %vm771, %v756, 0.0
    %v894 = vadd.f32 %v892, %v893
    %v895 = vsel %vm771, %v761, 0.0
    %v896 = vadd.f32 %v894, %v895
    %v897 = vsel %vm771, %v766, 0.0
    %v898 = vadd.f32 %v896, %v897
    %v899 = vrot.slane %v898, 4
    %v900 = vadd.f32 %v898, %v899
    %v901 = vrot.slane %v900, 2
    %v902 = vadd.f32 %v900, %v901
    %v903 = vrot.slane %v902, 1
    %v904 = vadd.f32 %v902, %v903
    %v905 = vmul.f32 %v904, 0.001953125
    %v906 = vsub.f32 %v451, %v905
    %v907 = vsub.f32 %v456, %v905
    %v908 = vsub.f32 %v461, %v905
    %v909 = vsub.f32 %v466, %v905
    %v910 = vsub.f32 %v471, %v905
    %v911 = vsub.f32 %v476, %v905
    %v912 = vsub.f32 %v481, %v905
    %v913 = vsub.f32 %v486, %v905
    %v914 = vsub.f32 %v491, %v905
    %v915 = vsub.f32 %v496, %v905
    %v916 = vsub.f32 %v501, %v905
    %v917 = vsub.f32 %v506, %v905
    %v918 = vsub.f32 %v511, %v905
    %v919 = vsub.f32 %v516, %v905
    %v920 = vsub.f32 %v521, %v905
    %v921 = vsub.f32 %v526, %v905
    %v922 = vsub.f32 %v531, %v905
    %v923 = vsub.f32 %v536, %v905
    %v924 = vsub.f32 %v541, %v905
    %v925 = vsub.f32 %v546, %v905
    %v926 = vsub.f32 %v551, %v905
    %v927 = vsub.f32 %v556, %v905
    %v928 = vsub.f32 %v561, %v905
    %v929 = vsub.f32 %v566, %v905
    %v930 = vsub.f32 %v571, %v905
    %v931 = vsub.f32 %v576, %v905
    %v932 = vsub.f32 %v581, %v905
    %v933 = vsub.f32 %v586, %v905
    %v934 = vsub.f32 %v591, %v905
    %v935 = vsub.f32 %v596, %v905
    %v936 = vsub.f32 %v601, %v905
    %v937 = vsub.f32 %v606, %v905
    %v938 = vsub.f32 %v611, %v905
    %v939 = vsub.f32 %v616, %v905
    %v940 = vsub.f32 %v621, %v905
    %v941 = vsub.f32 %v626, %v905
    %v942 = vsub.f32 %v631, %v905
    %v943 = vsub.f32 %v636, %v905
    %v944 = vsub.f32 %v641, %v905
    %v945 = vsub.f32 %v646, %v905
    %v946 = vsub.f32 %v651, %v905
    %v947 = vsub.f32 %v656, %v905
    %v948 = vsub.f32 %v661, %v905
    %v949 = vsub.f32 %v666, %v905
    %v950 = vsub.f32 %v671, %v905
    %v951 = vsub.f32 %v676, %v905
    %v952 = vsub.f32 %v681, %v905
    %v953 = vsub.f32 %v686, %v905
    %v954 = vsub.f32 %v691, %v905
    %v955 = vsub.f32 %v696, %v905
    %v956 = vsub.f32 %v701, %v905
    %v957 = vsub.f32 %v706, %v905
    %v958 = vsub.f32 %v711, %v905
    %v959 = vsub.f32 %v716, %v905
    %v960 = vsub.f32 %v721, %v905
    %v961 = vsub.f32 %v726, %v905
    %v962 = vsub.f32 %v731, %v905
    %v963 = vsub.f32 %v736, %v905
    %v964 = vsub.f32 %v741, %v905
    %v965 = vsub.f32 %v746, %v905
    %v966 = vsub.f32 %v751, %v905
    %v967 = vsub.f32 %v756, %v905
    %v968 = vsub.f32 %v761, %v905
    %v969 = vsub.f32 %v766, %v905
    %v970 = vmul.f32 %v906, %v906
    %v971 = vmul.f32 %v907, %v907
    %v972 = vmul.f32 %v908, %v908
    %v973 = vmul.f32 %v909, %v909
    %v974 = vmul.f32 %v910, %v910
    %v975 = vmul.f32 %v911, %v911
    %v976 = vmul.f32 %v912, %v912
    %v977 = vmul.f32 %v913, %v913
    %v978 = vmul.f32 %v914, %v914
    %v979 = vmul.f32 %v915, %v915
    %v980 = vmul.f32 %v916, %v916
    %v981 = vmul.f32 %v917, %v917
    %v982 = vmul.f32 %v918, %v918
    %v983 = vmul.f32 %v919, %v919
    %v984 = vmul.f32 %v920, %v920
    %v985 = vmul.f32 %v921, %v921
    %v986 = vmul.f32 %v922, %v922
    %v987 = vmul.f32 %v923, %v923
    %v988 = vmul.f32 %v924, %v924
    %v989 = vmul.f32 %v925, %v925
    %v990 = vmul.f32 %v926, %v926
    %v991 = vmul.f32 %v927, %v927
    %v992 = vmul.f32 %v928, %v928
    %v993 = vmul.f32 %v929, %v929
    %v994 = vmul.f32 %v930, %v930
    %v995 = vmul.f32 %v931, %v931
    %v996 = vmul.f32 %v932, %v932
    %v997 = vmul.f32 %v933, %v933
    %v998 = vmul.f32 %v934, %v934
    %v999 = vmul.f32 %v935, %v935
    %v1000 = vmul.f32 %v936, %v936
    %v1001 = vmul.f32 %v937, %v937
    %v1002 = vmul.f32 %v938, %v938
    %v1003 = vmul.f32 %v939, %v939
    %v1004 = vmul.f32 %v940, %v940
    %v1005 = vmul.f32 %v941, %v941
    %v1006 = vmul.f32 %v942, %v942
    %v1007 = vmul.f32 %v943, %v943
    %v1008 = vmul.f32 %v944, %v944
    %v1009 = vmul.f32 %v945, %v945
    %v1010 = vmul.f32 %v946, %v946
    %v1011 = vmul.f32 %v947, %v947
    %v1012 = vmul.f32 %v948, %v948
    %v1013 = vmul.f32 %v949, %v949
    %v1014 = vmul.f32 %v950, %v950
    %v1015 = vmul.f32 %v951, %v951
    %v1016 = vmul.f32 %v952, %v952
    %v1017 = vmul.f32 %v953, %v953
    %v1018 = vmul.f32 %v954, %v954
    %v1019 = vmul.f32 %v955, %v955
    %v1020 = vmul.f32 %v956, %v956
    %v1021 = vmul.f32 %v957, %v957
    %v1022 = vmul.f32 %v958, %v958
    %v1023 = vmul.f32 %v959, %v959
    %v1024 = vmul.f32 %v960, %v960
    %v1025 = vmul.f32 %v961, %v961
    %v1026 = vmul.f32 %v962, %v962
    %v1027 = vmul.f32 %v963, %v963
    %v1028 = vmul.f32 %v964, %v964
    %v1029 = vmul.f32 %v965, %v965
    %v1030 = vmul.f32 %v966, %v966
    %v1031 = vmul.f32 %v967, %v967
    %v1032 = vmul.f32 %v968, %v968
    %v1033 = vmul.f32 %v969, %v969
    %v1034 = vsel %vm771, %v970, 0.0
    %v1035 = vsel %vm771, %v971, 0.0
    %v1036 = vadd.f32 %v1034, %v1035
    %v1037 = vsel %vm771, %v972, 0.0
    %v1038 = vadd.f32 %v1036, %v1037
    %v1039 = vsel %vm771, %v973, 0.0
    %v1040 = vadd.f32 %v1038, %v1039
    %v1041 = vsel %vm771, %v974, 0.0
    %v1042 = vadd.f32 %v1040, %v1041
    %v1043 = vsel %vm771, %v975, 0.0
    %v1044 = vadd.f32 %v1042, %v1043
    %v1045 = vsel %vm771, %v976, 0.0
    %v1046 = vadd.f32 %v1044, %v1045
    %v1047 = vsel %vm771, %v977, 0.0
    %v1048 = vadd.f32 %v1046, %v1047
    %v1049 = vsel %vm771, %v978, 0.0
    %v1050 = vadd.f32 %v1048, %v1049
    %v1051 = vsel %vm771, %v979, 0.0
    %v1052 = vadd.f32 %v1050, %v1051
    %v1053 = vsel %vm771, %v980, 0.0
    %v1054 = vadd.f32 %v1052, %v1053
    %v1055 = vsel %vm771, %v981, 0.0
    %v1056 = vadd.f32 %v1054, %v1055
    %v1057 = vsel %vm771, %v982, 0.0
    %v1058 = vadd.f32 %v1056, %v1057
    %v1059 = vsel %vm771, %v983, 0.0
    %v1060 = vadd.f32 %v1058, %v1059
    %v1061 = vsel %vm771, %v984, 0.0
    %v1062 = vadd.f32 %v1060, %v1061
    %v1063 = vsel %vm771, %v985, 0.0
    %v1064 = vadd.f32 %v1062, %v1063
    %v1065 = vsel %vm771, %v986, 0.0
    %v1066 = vadd.f32 %v1064, %v1065
    %v1067 = vsel %vm771, %v987, 0.0
    %v1068 = vadd.f32 %v1066, %v1067
    %v1069 = vsel %vm771, %v988, 0.0
    %v1070 = vadd.f32 %v1068, %v1069
    %v1071 = vsel %vm771, %v989, 0.0
    %v1072 = vadd.f32 %v1070, %v1071
    %v1073 = vsel %vm771, %v990, 0.0
    %v1074 = vadd.f32 %v1072, %v1073
    %v1075 = vsel %vm771, %v991, 0.0
    %v1076 = vadd.f32 %v1074, %v1075
    %v1077 = vsel %vm771, %v992, 0.0
    %v1078 = vadd.f32 %v1076, %v1077
    %v1079 = vsel %vm771, %v993, 0.0
    %v1080 = vadd.f32 %v1078, %v1079
    %v1081 = vsel %vm771, %v994, 0.0
    %v1082 = vadd.f32 %v1080, %v1081
    %v1083 = vsel %vm771, %v995, 0.0
    %v1084 = vadd.f32 %v1082, %v1083
    %v1085 = vsel %vm771, %v996, 0.0
    %v1086 = vadd.f32 %v1084, %v1085
    %v1087 = vsel %vm771, %v997, 0.0
    %v1088 = vadd.f32 %v1086, %v1087
    %v1089 = vsel %vm771, %v998, 0.0
    %v1090 = vadd.f32 %v1088, %v1089
    %v1091 = vsel %vm771, %v999, 0.0
    %v1092 = vadd.f32 %v1090, %v1091
    %v1093 = vsel %vm771, %v1000, 0.0
    %v1094 = vadd.f32 %v1092, %v1093
    %v1095 = vsel %vm771, %v1001, 0.0
    %v1096 = vadd.f32 %v1094, %v1095
    %v1097 = vsel %vm771, %v1002, 0.0
    %v1098 = vadd.f32 %v1096, %v1097
    %v1099 = vsel %vm771, %v1003, 0.0
    %v1100 = vadd.f32 %v1098, %v1099
    %v1101 = vsel %vm771, %v1004, 0.0
    %v1102 = vadd.f32 %v1100, %v1101
    %v1103 = vsel %vm771, %v1005, 0.0
    %v1104 = vadd.f32 %v1102, %v1103
    %v1105 = vsel %vm771, %v1006, 0.0
    %v1106 = vadd.f32 %v1104, %v1105
    %v1107 = vsel %vm771, %v1007, 0.0
    %v1108 = vadd.f32 %v1106, %v1107
    %v1109 = vsel %vm771, %v1008, 0.0
    %v1110 = vadd.f32 %v1108, %v1109
    %v1111 = vsel %vm771, %v1009, 0.0
    %v1112 = vadd.f32 %v1110, %v1111
    %v1113 = vsel %vm771, %v1010, 0.0
    %v1114 = vadd.f32 %v1112, %v1113
    %v1115 = vsel %vm771, %v1011, 0.0
    %v1116 = vadd.f32 %v1114, %v1115
    %v1117 = vsel %vm771, %v1012, 0.0
    %v1118 = vadd.f32 %v1116, %v1117
    %v1119 = vsel %vm771, %v1013, 0.0
    %v1120 = vadd.f32 %v1118, %v1119
    %v1121 = vsel %vm771, %v1014, 0.0
    %v1122 = vadd.f32 %v1120, %v1121
    %v1123 = vsel %vm771, %v1015, 0.0
    %v1124 = vadd.f32 %v1122, %v1123
    %v1125 = vsel %vm771, %v1016, 0.0
    %v1126 = vadd.f32 %v1124, %v1125
    %v1127 = vsel %vm771, %v1017, 0.0
    %v1128 = vadd.f32 %v1126, %v1127
    %v1129 = vsel %vm771, %v1018, 0.0
    %v1130 = vadd.f32 %v1128, %v1129
    %v1131 = vsel %vm771, %v1019, 0.0
    %v1132 = vadd.f32 %v1130, %v1131
    %v1133 = vsel %vm771, %v1020, 0.0
    %v1134 = vadd.f32 %v1132, %v1133
    %v1135 = vsel %vm771, %v1021, 0.0
    %v1136 = vadd.f32 %v1134, %v1135
    %v1137 = vsel %vm771, %v1022, 0.0
    %v1138 = vadd.f32 %v1136, %v1137
    %v1139 = vsel %vm771, %v1023, 0.0
    %v1140 = vadd.f32 %v1138, %v1139
    %v1141 = vsel %vm771, %v1024, 0.0
    %v1142 = vadd.f32 %v1140, %v1141
    %v1143 = vsel %vm771, %v1025, 0.0
    %v1144 = vadd.f32 %v1142, %v1143
    %v1145 = vsel %vm771, %v1026, 0.0
    %v1146 = vadd.f32 %v1144, %v1145
    %v1147 = vsel %vm771, %v1027, 0.0
    %v1148 = vadd.f32 %v1146, %v1147
    %v1149 = vsel %vm771, %v1028, 0.0
    %v1150 = vadd.f32 %v1148, %v1149
    %v1151 = vsel %vm771, %v1029, 0.0
    %v1152 = vadd.f32 %v1150, %v1151
    %v1153 = vsel %vm771, %v1030, 0.0
    %v1154 = vadd.f32 %v1152, %v1153
    %v1155 = vsel %vm771, %v1031, 0.0
    %v1156 = vadd.f32 %v1154, %v1155
    %v1157 = vsel %vm771, %v1032, 0.0
    %v1158 = vadd.f32 %v1156, %v1157
    %v1159 = vsel %vm771, %v1033, 0.0
    %v1160 = vadd.f32 %v1158, %v1159
    %v1161 = vrot.slane %v1160, 4
    %v1162 = vadd.f32 %v1160, %v1161
    %v1163 = vrot.slane %v1162, 2
    %v1164 = vadd.f32 %v1162, %v1163
    %v1165 = vrot.slane %v1164, 1
    %v1166 = vadd.f32 %v1164, %v1165
    %v1167 = vmul.f32 %v1166, 0.001953125
    %v1168 = vadd.f32 %v1167, 1e-05
    %v1169 = vrsqrt.pop %v1168
    %v1170 = vmul.f32 %v906, %v1169
    %v1171 = vmul.f32 %v907, %v1169
    %v1172 = vmul.f32 %v908, %v1169
    %v1173 = vmul.f32 %v909, %v1169
    %v1174 = vmul.f32 %v910, %v1169
    %v1175 = vmul.f32 %v911, %v1169
    %v1176 = vmul.f32 %v912, %v1169
    %v1177 = vmul.f32 %v913, %v1169
    %v1178 = vmul.f32 %v914, %v1169
    %v1179 = vmul.f32 %v915, %v1169
    %v1180 = vmul.f32 %v916, %v1169
    %v1181 = vmul.f32 %v917, %v1169
    %v1182 = vmul.f32 %v918, %v1169
    %v1183 = vmul.f32 %v919, %v1169
    %v1184 = vmul.f32 %v920, %v1169
    %v1185 = vmul.f32 %v921, %v1169
    %v1186 = vmul.f32 %v922, %v1169
    %v1187 = vmul.f32 %v923, %v1169
    %v1188 = vmul.f32 %v924, %v1169
    %v1189 = vmul.f32 %v925, %v1169
    %v1190 = vmul.f32 %v926, %v1169
    %v1191 = vmul.f32 %v927, %v1169
    %v1192 = vmul.f32 %v928, %v1169
    %v1193 = vmul.f32 %v929, %v1169
    %v1194 = vmul.f32 %v930, %v1169
    %v1195 = vmul.f32 %v931, %v1169
    %v1196 = vmul.f32 %v932, %v1169
    %v1197 = vmul.f32 %v933, %v1169
    %v1198 = vmul.f32 %v934, %v1169
    %v1199 = vmul.f32 %v935, %v1169
    %v1200 = vmul.f32 %v936, %v1169
    %v1201 = vmul.f32 %v937, %v1169
    %v1202 = vmul.f32 %v938, %v1169
    %v1203 = vmul.f32 %v939, %v1169
    %v1204 = vmul.f32 %v940, %v1169
    %v1205 = vmul.f32 %v941, %v1169
    %v1206 = vmul.f32 %v942, %v1169
    %v1207 = vmul.f32 %v943, %v1169
    %v1208 = vmul.f32 %v944, %v1169
    %v1209 = vmul.f32 %v945, %v1169
    %v1210 = vmul.f32 %v946, %v1169
    %v1211 = vmul.f32 %v947, %v1169
    %v1212 = vmul.f32 %v948, %v1169
    %v1213 = vmul.f32 %v949, %v1169
    %v1214 = vmul.f32 %v950, %v1169
    %v1215 = vmul.f32 %v951, %v1169
    %v1216 = vmul.f32 %v952, %v1169
    %v1217 = vmul.f32 %v953, %v1169
    %v1218 = vmul.f32 %v954, %v1169
    %v1219 = vmul.f32 %v955, %v1169
    %v1220 = vmul.f32 %v956, %v1169
    %v1221 = vmul.f32 %v957, %v1169
    %v1222 = vmul.f32 %v958, %v1169
    %v1223 = vmul.f32 %v959, %v1169
    %v1224 = vmul.f32 %v960, %v1169
    %v1225 = vmul.f32 %v961, %v1169
    %v1226 = vmul.f32 %v962, %v1169
    %v1227 = vmul.f32 %v963, %v1169
    %v1228 = vmul.f32 %v964, %v1169
    %v1229 = vmul.f32 %v965, %v1169
    %v1230 = vmul.f32 %v966, %v1169
    %v1231 = vmul.f32 %v967, %v1169
    %v1232 = vmul.f32 %v968, %v1169
    %v1233 = vmul.f32 %v969, %v1169
    %v1235 = vlaneseq
    %v1236 = vshrl.u32 %v1235, 7
    %v1237 = vsub.s32 0, %v1236
    %v1238 = vrot.slane %v769, %v1237
    %v1240 = vmul.f32 %v1170, %v1238
    %v1241 = vmul.f32 %v1171, %v1238
    %v1242 = vmul.f32 %v1172, %v1238
    %v1243 = vmul.f32 %v1173, %v1238
    %v1244 = vmul.f32 %v1174, %v1238
    %v1245 = vmul.f32 %v1175, %v1238
    %v1246 = vmul.f32 %v1176, %v1238
    %v1247 = vmul.f32 %v1177, %v1238
    %v1248 = vmul.f32 %v1178, %v1238
    %v1249 = vmul.f32 %v1179, %v1238
    %v1250 = vmul.f32 %v1180, %v1238
    %v1251 = vmul.f32 %v1181, %v1238
    %v1252 = vmul.f32 %v1182, %v1238
    %v1253 = vmul.f32 %v1183, %v1238
    %v1254 = vmul.f32 %v1184, %v1238
    %v1255 = vmul.f32 %v1185, %v1238
    %v1256 = vmul.f32 %v1186, %v1238
    %v1257 = vmul.f32 %v1187, %v1238
    %v1258 = vmul.f32 %v1188, %v1238
    %v1259 = vmul.f32 %v1189, %v1238
    %v1260 = vmul.f32 %v1190, %v1238
    %v1261 = vmul.f32 %v1191, %v1238
    %v1262 = vmul.f32 %v1192, %v1238
    %v1263 = vmul.f32 %v1193, %v1238
    %v1264 = vmul.f32 %v1194, %v1238
    %v1265 = vmul.f32 %v1195, %v1238
    %v1266 = vmul.f32 %v1196, %v1238
    %v1267 = vmul.f32 %v1197, %v1238
    %v1268 = vmul.f32 %v1198, %v1238
    %v1269 = vmul.f32 %v1199, %v1238
    %v1270 = vmul.f32 %v1200, %v1238
    %v1271 = vmul.f32 %v1201, %v1238
    %v1272 = vmul.f32 %v1202, %v1238
    %v1273 = vmul.f32 %v1203, %v1238
    %v1274 = vmul.f32 %v1204, %v1238
    %v1275 = vmul.f32 %v1205, %v1238
    %v1276 = vmul.f32 %v1206, %v1238
    %v1277 = vmul.f32 %v1207, %v1238
    %v1278 = vmul.f32 %v1208, %v1238
    %v1279 = vmul.f32 %v1209, %v1238
    %v1280 = vmul.f32 %v1210, %v1238
    %v1281 = vmul.f32 %v1211, %v1238
    %v1282 = vmul.f32 %v1212, %v1238
    %v1283 = vmul.f32 %v1213, %v1238
    %v1284 = vmul.f32 %v1214, %v1238
    %v1285 = vmul.f32 %v1215, %v1238
    %v1286 = vmul.f32 %v1216, %v1238
    %v1287 = vmul.f32 %v1217, %v1238
    %v1288 = vmul.f32 %v1218, %v1238
    %v1289 = vmul.f32 %v1219, %v1238
    %v1290 = vmul.f32 %v1220, %v1238
    %v1291 = vmul.f32 %v1221, %v1238
    %v1292 = vmul.f32 %v1222, %v1238
    %v1293 = vmul.f32 %v1223, %v1238
    %v1294 = vmul.f32 %v1224, %v1238
    %v1295 = vmul.f32 %v1225, %v1238
    %v1296 = vmul.f32 %v1226, %v1238
    %v1297 = vmul.f32 %v1227, %v1238
    %v1298 = vmul.f32 %v1228, %v1238
    %v1299 = vmul.f32 %v1229, %v1238
    %v1300 = vmul.f32 %v1230, %v1238
    %v1301 = vmul.f32 %v1231, %v1238
    %v1302 = vmul.f32 %v1232, %v1238
    %v1303 = vmul.f32 %v1233, %v1238
    %v1305 = vlaneseq
    %v1306 = vshrl.u32 %v1305, 7
    %v1307 = vsub.s32 0, %v1306
    %v1308 = vrot.slane %v770, %v1307
    %v1310 = vadd.f32 %v1240, %v1308
    %v1311 = vadd.f32 %v1241, %v1308
    %v1312 = vadd.f32 %v1242, %v1308
    %v1313 = vadd.f32 %v1243, %v1308
    %v1314 = vadd.f32 %v1244, %v1308
    %v1315 = vadd.f32 %v1245, %v1308
    %v1316 = vadd.f32 %v1246, %v1308
    %v1317 = vadd.f32 %v1247, %v1308
    %v1318 = vadd.f32 %v1248, %v1308
    %v1319 = vadd.f32 %v1249, %v1308
    %v1320 = vadd.f32 %v1250, %v1308
    %v1321 = vadd.f32 %v1251, %v1308
    %v1322 = vadd.f32 %v1252, %v1308
    %v1323 = vadd.f32 %v1253, %v1308
    %v1324 = vadd.f32 %v1254, %v1308
    %v1325 = vadd.f32 %v1255, %v1308
    %v1326 = vadd.f32 %v1256, %v1308
    %v1327 = vadd.f32 %v1257, %v1308
    %v1328 = vadd.f32 %v1258, %v1308
    %v1329 = vadd.f32 %v1259, %v1308
    %v1330 = vadd.f32 %v1260, %v1308
    %v1331 = vadd.f32 %v1261, %v1308
    %v1332 = vadd.f32 %v1262, %v1308
    %v1333 = vadd.f32 %v1263, %v1308
    %v1334 = vadd.f32 %v1264, %v1308
    %v1335 = vadd.f32 %v1265, %v1308
    %v1336 = vadd.f32 %v1266, %v1308
    %v1337 = vadd.f32 %v1267, %v1308
    %v1338 = vadd.f32 %v1268, %v1308
    %v1339 = vadd.f32 %v1269, %v1308
    %v1340 = vadd.f32 %v1270, %v1308
    %v1341 = vadd.f32 %v1271, %v1308
    %v1342 = vadd.f32 %v1272, %v1308
    %v1343 = vadd.f32 %v1273, %v1308
    %v1344 = vadd.f32 %v1274, %v1308
    %v1345 = vadd.f32 %v1275, %v1308
    %v1346 = vadd.f32 %v1276, %v1308
    %v1347 = vadd.f32 %v1277, %v1308
    %v1348 = vadd.f32 %v1278, %v1308
    %v1349 = vadd.f32 %v1279, %v1308
    %v1350 = vadd.f32 %v1280, %v1308
    %v1351 = vadd.f32 %v1281, %v1308
    %v1352 = vadd.f32 %v1282, %v1308
    %v1353 = vadd.f32 %v1283, %v1308
    %v1354 = vadd.f32 %v1284, %v1308
    %v1355 = vadd.f32 %v1285, %v1308
    %v1356 = vadd.f32 %v1286, %v1308
    %v1357 = vadd.f32 %v1287, %v1308
    %v1358 = vadd.f32 %v1288, %v1308
    %v1359 = vadd.f32 %v1289, %v1308
    %v1360 = vadd.f32 %v1290, %v1308
    %v1361 = vadd.f32 %v1291, %v1308
    %v1362 = vadd.f32 %v1292, %v1308
    %v1363 = vadd.f32 %v1293, %v1308
    %v1364 = vadd.f32 %v1294, %v1308
    %v1365 = vadd.f32 %v1295, %v1308
    %v1366 = vadd.f32 %v1296, %v1308
    %v1367 = vadd.f32 %v1297, %v1308
    %v1368 = vadd.f32 %v1298, %v1308
    %v1369 = vadd.f32 %v1299, %v1308
    %v1370 = vadd.f32 %v1300, %v1308
    %v1371 = vadd.f32 %v1301, %v1308
    %v1372 = vadd.f32 %v1302, %v1308
    %v1373 = vadd.f32 %v1303, %v1308
    %v1374 = vlaneseq
    %v1375 = vshrl.u32 %v1374, 7
    %v1376 = vadd.s32 %v1375, 8
    %v1377 = vadd.s32 %v1375, 16
    %v1378 = vadd.s32 %v1375, 24
    %v1379 = vadd.s32 %v1375, 32
    %v1380 = vadd.s32 %v1375, 40
    %v1381 = vadd.s32 %v1375, 48
    %v1382 = vadd.s32 %v1375, 56
    %v1383 = vadd.s32 %v1375, 64
    %v1384 = vadd.s32 %v1375, 72
    %v1385 = vadd.s32 %v1375, 80
    %v1386 = vadd.s32 %v1375, 88
    %v1387 = vadd.s32 %v1375, 96
    %v1388 = vadd.s32 %v1375, 104
    %v1389 = vadd.s32 %v1375, 112
    %v1390 = vadd.s32 %v1375, 120
    %v1391 = vadd.s32 %v1375, 128
    %v1392 = vadd.s32 %v1375, 136
    %v1393 = vadd.s32 %v1375, 144
    %v1394 = vadd.s32 %v1375, 152
    %v1395 = vadd.s32 %v1375, 160
    %v1396 = vadd.s32 %v1375, 168
    %v1397 = vadd.s32 %v1375, 176
    %v1398 = vadd.s32 %v1375, 184
    %v1399 = vadd.s32 %v1375, 192
    %v1400 = vadd.s32 %v1375, 200
    %v1401 = vadd.s32 %v1375, 208
    %v1402 = vadd.s32 %v1375, 216
    %v1403 = vadd.s32 %v1375, 224
    %v1404 = vadd.s32 %v1375, 232
    %v1405 = vadd.s32 %v1375, 240
    %v1406 = vadd.s32 %v1375, 248
    %vm1407 = vcmp.lt.s32.totalorder %v1375, 0
    %v1408 = vsub.s32 0, %v1375
    %v1409 = vsel %vm1407, %v1408, %v1375
    %v1410 = vshrl.u32 %v1409, 3
    %v1411 = vand.u32 %v1409, 7
    %v1412 = vsub.s32 0, %v1411
    %v1413 = vsel %vm1407, %v1412, %v1411
    %vm1414 = vcmp.lt.s32.totalorder %v1376, 0
    %v1415 = vsub.s32 0, %v1376
    %v1416 = vsel %vm1414, %v1415, %v1376
    %v1417 = vshrl.u32 %v1416, 3
    %v1418 = vand.u32 %v1416, 7
    %v1419 = vsub.s32 0, %v1418
    %v1420 = vsel %vm1414, %v1419, %v1418
    %vm1421 = vcmp.lt.s32.totalorder %v1377, 0
    %v1422 = vsub.s32 0, %v1377
    %v1423 = vsel %vm1421, %v1422, %v1377
    %v1424 = vshrl.u32 %v1423, 3
    %v1425 = vand.u32 %v1423, 7
    %v1426 = vsub.s32 0, %v1425
    %v1427 = vsel %vm1421, %v1426, %v1425
    %vm1428 = vcmp.lt.s32.totalorder %v1378, 0
    %v1429 = vsub.s32 0, %v1378
    %v1430 = vsel %vm1428, %v1429, %v1378
    %v1431 = vshrl.u32 %v1430, 3
    %v1432 = vand.u32 %v1430, 7
    %v1433 = vsub.s32 0, %v1432
    %v1434 = vsel %vm1428, %v1433, %v1432
    %vm1435 = vcmp.lt.s32.totalorder %v1379, 0
    %v1436 = vsub.s32 0, %v1379
    %v1437 = vsel %vm1435, %v1436, %v1379
    %v1438 = vshrl.u32 %v1437, 3
    %v1439 = vand.u32 %v1437, 7
    %v1440 = vsub.s32 0, %v1439
    %v1441 = vsel %vm1435, %v1440, %v1439
    %vm1442 = vcmp.lt.s32.totalorder %v1380, 0
    %v1443 = vsub.s32 0, %v1380
    %v1444 = vsel %vm1442, %v1443, %v1380
    %v1445 = vshrl.u32 %v1444, 3
    %v1446 = vand.u32 %v1444, 7
    %v1447 = vsub.s32 0, %v1446
    %v1448 = vsel %vm1442, %v1447, %v1446
    %vm1449 = vcmp.lt.s32.totalorder %v1381, 0
    %v1450 = vsub.s32 0, %v1381
    %v1451 = vsel %vm1449, %v1450, %v1381
    %v1452 = vshrl.u32 %v1451, 3
    %v1453 = vand.u32 %v1451, 7
    %v1454 = vsub.s32 0, %v1453
    %v1455 = vsel %vm1449, %v1454, %v1453
    %vm1456 = vcmp.lt.s32.totalorder %v1382, 0
    %v1457 = vsub.s32 0, %v1382
    %v1458 = vsel %vm1456, %v1457, %v1382
    %v1459 = vshrl.u32 %v1458, 3
    %v1460 = vand.u32 %v1458, 7
    %v1461 = vsub.s32 0, %v1460
    %v1462 = vsel %vm1456, %v1461, %v1460
    %vm1463 = vcmp.lt.s32.totalorder %v1383, 0
    %v1464 = vsub.s32 0, %v1383
    %v1465 = vsel %vm1463, %v1464, %v1383
    %v1466 = vshrl.u32 %v1465, 3
    %v1467 = vand.u32 %v1465, 7
    %v1468 = vsub.s32 0, %v1467
    %v1469 = vsel %vm1463, %v1468, %v1467
    %vm1470 = vcmp.lt.s32.totalorder %v1384, 0
    %v1471 = vsub.s32 0, %v1384
    %v1472 = vsel %vm1470, %v1471, %v1384
    %v1473 = vshrl.u32 %v1472, 3
    %v1474 = vand.u32 %v1472, 7
    %v1475 = vsub.s32 0, %v1474
    %v1476 = vsel %vm1470, %v1475, %v1474
    %vm1477 = vcmp.lt.s32.totalorder %v1385, 0
    %v1478 = vsub.s32 0, %v1385
    %v1479 = vsel %vm1477, %v1478, %v1385
    %v1480 = vshrl.u32 %v1479, 3
    %v1481 = vand.u32 %v1479, 7
    %v1482 = vsub.s32 0, %v1481
    %v1483 = vsel %vm1477, %v1482, %v1481
    %vm1484 = vcmp.lt.s32.totalorder %v1386, 0
    %v1485 = vsub.s32 0, %v1386
    %v1486 = vsel %vm1484, %v1485, %v1386
    %v1487 = vshrl.u32 %v1486, 3
    %v1488 = vand.u32 %v1486, 7
    %v1489 = vsub.s32 0, %v1488
    %v1490 = vsel %vm1484, %v1489, %v1488
    %vm1491 = vcmp.lt.s32.totalorder %v1387, 0
    %v1492 = vsub.s32 0, %v1387
    %v1493 = vsel %vm1491, %v1492, %v1387
    %v1494 = vshrl.u32 %v1493, 3
    %v1495 = vand.u32 %v1493, 7
    %v1496 = vsub.s32 0, %v1495
    %v1497 = vsel %vm1491, %v1496, %v1495
    %vm1498 = vcmp.lt.s32.totalorder %v1388, 0
    %v1499 = vsub.s32 0, %v1388
    %v1500 = vsel %vm1498, %v1499, %v1388
    %v1501 = vshrl.u32 %v1500, 3
    %v1502 = vand.u32 %v1500, 7
    %v1503 = vsub.s32 0, %v1502
    %v1504 = vsel %vm1498, %v1503, %v1502
    %vm1505 = vcmp.lt.s32.totalorder %v1389, 0
    %v1506 = vsub.s32 0, %v1389
    %v1507 = vsel %vm1505, %v1506, %v1389
    %v1508 = vshrl.u32 %v1507, 3
    %v1509 = vand.u32 %v1507, 7
    %v1510 = vsub.s32 0, %v1509
    %v1511 = vsel %vm1505, %v1510, %v1509
    %vm1512 = vcmp.lt.s32.totalorder %v1390, 0
    %v1513 = vsub.s32 0, %v1390
    %v1514 = vsel %vm1512, %v1513, %v1390
    %v1515 = vshrl.u32 %v1514, 3
    %v1516 = vand.u32 %v1514, 7
    %v1517 = vsub.s32 0, %v1516
    %v1518 = vsel %vm1512, %v1517, %v1516
    %vm1519 = vcmp.lt.s32.totalorder %v1391, 0
    %v1520 = vsub.s32 0, %v1391
    %v1521 = vsel %vm1519, %v1520, %v1391
    %v1522 = vshrl.u32 %v1521, 3
    %v1523 = vand.u32 %v1521, 7
    %v1524 = vsub.s32 0, %v1523
    %v1525 = vsel %vm1519, %v1524, %v1523
    %vm1526 = vcmp.lt.s32.totalorder %v1392, 0
    %v1527 = vsub.s32 0, %v1392
    %v1528 = vsel %vm1526, %v1527, %v1392
    %v1529 = vshrl.u32 %v1528, 3
    %v1530 = vand.u32 %v1528, 7
    %v1531 = vsub.s32 0, %v1530
    %v1532 = vsel %vm1526, %v1531, %v1530
    %vm1533 = vcmp.lt.s32.totalorder %v1393, 0
    %v1534 = vsub.s32 0, %v1393
    %v1535 = vsel %vm1533, %v1534, %v1393
    %v1536 = vshrl.u32 %v1535, 3
    %v1537 = vand.u32 %v1535, 7
    %v1538 = vsub.s32 0, %v1537
    %v1539 = vsel %vm1533, %v1538, %v1537
    %vm1540 = vcmp.lt.s32.totalorder %v1394, 0
    %v1541 = vsub.s32 0, %v1394
    %v1542 = vsel %vm1540, %v1541, %v1394
    %v1543 = vshrl.u32 %v1542, 3
    %v1544 = vand.u32 %v1542, 7
    %v1545 = vsub.s32 0, %v1544
    %v1546 = vsel %vm1540, %v1545, %v1544
    %vm1547 = vcmp.lt.s32.totalorder %v1395, 0
    %v1548 = vsub.s32 0, %v1395
    %v1549 = vsel %vm1547, %v1548, %v1395
    %v1550 = vshrl.u32 %v1549, 3
    %v1551 = vand.u32 %v1549, 7
    %v1552 = vsub.s32 0, %v1551
    %v1553 = vsel %vm1547, %v1552, %v1551
    %vm1554 = vcmp.lt.s32.totalorder %v1396, 0
    %v1555 = vsub.s32 0, %v1396
    %v1556 = vsel %vm1554, %v1555, %v1396
    %v1557 = vshrl.u32 %v1556, 3
    %v1558 = vand.u32 %v1556, 7
    %v1559 = vsub.s32 0, %v1558
    %v1560 = vsel %vm1554, %v1559, %v1558
    %vm1561 = vcmp.lt.s32.totalorder %v1397, 0
    %v1562 = vsub.s32 0, %v1397
    %v1563 = vsel %vm1561, %v1562, %v1397
    %v1564 = vshrl.u32 %v1563, 3
    %v1565 = vand.u32 %v1563, 7
    %v1566 = vsub.s32 0, %v1565
    %v1567 = vsel %vm1561, %v1566, %v1565
    %vm1568 = vcmp.lt.s32.totalorder %v1398, 0
    %v1569 = vsub.s32 0, %v1398
    %v1570 = vsel %vm1568, %v1569, %v1398
    %v1571 = vshrl.u32 %v1570, 3
    %v1572 = vand.u32 %v1570, 7
    %v1573 = vsub.s32 0, %v1572
    %v1574 = vsel %vm1568, %v1573, %v1572
    %vm1575 = vcmp.lt.s32.totalorder %v1399, 0
    %v1576 = vsub.s32 0, %v1399
    %v1577 = vsel %vm1575, %v1576, %v1399
    %v1578 = vshrl.u32 %v1577, 3
    %v1579 = vand.u32 %v1577, 7
    %v1580 = vsub.s32 0, %v1579
    %v1581 = vsel %vm1575, %v1580, %v1579
    %vm1582 = vcmp.lt.s32.totalorder %v1400, 0
    %v1583 = vsub.s32 0, %v1400
    %v1584 = vsel %vm1582, %v1583, %v1400
    %v1585 = vshrl.u32 %v1584, 3
    %v1586 = vand.u32 %v1584, 7
    %v1587 = vsub.s32 0, %v1586
    %v1588 = vsel %vm1582, %v1587, %v1586
    %vm1589 = vcmp.lt.s32.totalorder %v1401, 0
    %v1590 = vsub.s32 0, %v1401
    %v1591 = vsel %vm1589, %v1590, %v1401
    %v1592 = vshrl.u32 %v1591, 3
    %v1593 = vand.u32 %v1591, 7
    %v1594 = vsub.s32 0, %v1593
    %v1595 = vsel %vm1589, %v1594, %v1593
    %vm1596 = vcmp.lt.s32.totalorder %v1402, 0
    %v1597 = vsub.s32 0, %v1402
    %v1598 = vsel %vm1596, %v1597, %v1402
    %v1599 = vshrl.u32 %v1598, 3
    %v1600 = vand.u32 %v1598, 7
    %v1601 = vsub.s32 0, %v1600
    %v1602 = vsel %vm1596, %v1601, %v1600
    %vm1603 = vcmp.lt.s32.totalorder %v1403, 0
    %v1604 = vsub.s32 0, %v1403
    %v1605 = vsel %vm1603, %v1604, %v1403
    %v1606 = vshrl.u32 %v1605, 3
    %v1607 = vand.u32 %v1605, 7
    %v1608 = vsub.s32 0, %v1607
    %v1609 = vsel %vm1603, %v1608, %v1607
    %vm1610 = vcmp.lt.s32.totalorder %v1404, 0
    %v1611 = vsub.s32 0, %v1404
    %v1612 = vsel %vm1610, %v1611, %v1404
    %v1613 = vshrl.u32 %v1612, 3
    %v1614 = vand.u32 %v1612, 7
    %v1615 = vsub.s32 0, %v1614
    %v1616 = vsel %vm1610, %v1615, %v1614
    %vm1617 = vcmp.lt.s32.totalorder %v1405, 0
    %v1618 = vsub.s32 0, %v1405
    %v1619 = vsel %vm1617, %v1618, %v1405
    %v1620 = vshrl.u32 %v1619, 3
    %v1621 = vand.u32 %v1619, 7
    %v1622 = vsub.s32 0, %v1621
    %v1623 = vsel %vm1617, %v1622, %v1621
    %vm1624 = vcmp.lt.s32.totalorder %v1406, 0
    %v1625 = vsub.s32 0, %v1406
    %v1626 = vsel %vm1624, %v1625, %v1406
    %v1627 = vshrl.u32 %v1626, 3
    %v1628 = vand.u32 %v1626, 7
    %v1629 = vsub.s32 0, %v1628
    %v1630 = vsel %vm1624, %v1629, %v1628
    %vm1631 = vcmp.ne.s32.totalorder %v1413, 0
    %vm1632 = vcmp.ne.s32.totalorder %v1420, 0
    %vm1633 = vcmp.ne.s32.totalorder %v1427, 0
    %vm1634 = vcmp.ne.s32.totalorder %v1434, 0
    %vm1635 = vcmp.ne.s32.totalorder %v1441, 0
    %vm1636 = vcmp.ne.s32.totalorder %v1448, 0
    %vm1637 = vcmp.ne.s32.totalorder %v1455, 0
    %vm1638 = vcmp.ne.s32.totalorder %v1462, 0
    %vm1639 = vcmp.ne.s32.totalorder %v1469, 0
    %vm1640 = vcmp.ne.s32.totalorder %v1476, 0
    %vm1641 = vcmp.ne.s32.totalorder %v1483, 0
    %vm1642 = vcmp.ne.s32.totalorder %v1490, 0
    %vm1643 = vcmp.ne.s32.totalorder %v1497, 0
    %vm1644 = vcmp.ne.s32.totalorder %v1504, 0
    %vm1645 = vcmp.ne.s32.totalorder %v1511, 0
    %vm1646 = vcmp.ne.s32.totalorder %v1518, 0
    %vm1647 = vcmp.ne.s32.totalorder %v1525, 0
    %vm1648 = vcmp.ne.s32.totalorder %v1532, 0
    %vm1649 = vcmp.ne.s32.totalorder %v1539, 0
    %vm1650 = vcmp.ne.s32.totalorder %v1546, 0
    %vm1651 = vcmp.ne.s32.totalorder %v1553, 0
    %vm1652 = vcmp.ne.s32.totalorder %v1560, 0
    %vm1653 = vcmp.ne.s32.totalorder %v1567, 0
    %vm1654 = vcmp.ne.s32.totalorder %v1574, 0
    %vm1655 = vcmp.ne.s32.totalorder %v1581, 0
    %vm1656 = vcmp.ne.s32.totalorder %v1588, 0
    %vm1657 = vcmp.ne.s32.totalorder %v1595, 0
    %vm1658 = vcmp.ne.s32.totalorder %v1602, 0
    %vm1659 = vcmp.ne.s32.totalorder %v1609, 0
    %vm1660 = vcmp.ne.s32.totalorder %v1616, 0
    %vm1661 = vcmp.ne.s32.totalorder %v1623, 0
    %vm1662 = vcmp.ne.s32.totalorder %v1630, 0
    %vm1663 = vcmp.lt.s32.totalorder %v1413, 0
    %vm1664 = vcmp.lt.s32.totalorder %v1420, 0
    %vm1665 = vcmp.lt.s32.totalorder %v1427, 0
    %vm1666 = vcmp.lt.s32.totalorder %v1434, 0
    %vm1667 = vcmp.lt.s32.totalorder %v1441, 0
    %vm1668 = vcmp.lt.s32.totalorder %v1448, 0
    %vm1669 = vcmp.lt.s32.totalorder %v1455, 0
    %vm1670 = vcmp.lt.s32.totalorder %v1462, 0
    %vm1671 = vcmp.lt.s32.totalorder %v1469, 0
    %vm1672 = vcmp.lt.s32.totalorder %v1476, 0
    %vm1673 = vcmp.lt.s32.totalorder %v1483, 0
    %vm1674 = vcmp.lt.s32.totalorder %v1490, 0
    %vm1675 = vcmp.lt.s32.totalorder %v1497, 0
    %vm1676 = vcmp.lt.s32.totalorder %v1504, 0
    %vm1677 = vcmp.lt.s32.totalorder %v1511, 0
    %vm1678 = vcmp.lt.s32.totalorder %v1518, 0
    %vm1679 = vcmp.lt.s32.totalorder %v1525, 0
    %vm1680 = vcmp.lt.s32.totalorder %v1532, 0
    %vm1681 = vcmp.lt.s32.totalorder %v1539, 0
    %vm1682 = vcmp.lt.s32.totalorder %v1546, 0
    %vm1683 = vcmp.lt.s32.totalorder %v1553, 0
    %vm1684 = vcmp.lt.s32.totalorder %v1560, 0
    %vm1685 = vcmp.lt.s32.totalorder %v1567, 0
    %vm1686 = vcmp.lt.s32.totalorder %v1574, 0
    %vm1687 = vcmp.lt.s32.totalorder %v1581, 0
    %vm1688 = vcmp.lt.s32.totalorder %v1588, 0
    %vm1689 = vcmp.lt.s32.totalorder %v1595, 0
    %vm1690 = vcmp.lt.s32.totalorder %v1602, 0
    %vm1691 = vcmp.lt.s32.totalorder %v1609, 0
    %vm1692 = vcmp.lt.s32.totalorder %v1616, 0
    %vm1693 = vcmp.lt.s32.totalorder %v1623, 0
    %vm1694 = vcmp.lt.s32.totalorder %v1630, 0
    %vm1695 = vmand %vm1663, %vm1631
    %vm1696 = vmand %vm1664, %vm1632
    %vm1697 = vmand %vm1665, %vm1633
    %vm1698 = vmand %vm1666, %vm1634
    %vm1699 = vmand %vm1667, %vm1635
    %vm1700 = vmand %vm1668, %vm1636
    %vm1701 = vmand %vm1669, %vm1637
    %vm1702 = vmand %vm1670, %vm1638
    %vm1703 = vmand %vm1671, %vm1639
    %vm1704 = vmand %vm1672, %vm1640
    %vm1705 = vmand %vm1673, %vm1641
    %vm1706 = vmand %vm1674, %vm1642
    %vm1707 = vmand %vm1675, %vm1643
    %vm1708 = vmand %vm1676, %vm1644
    %vm1709 = vmand %vm1677, %vm1645
    %vm1710 = vmand %vm1678, %vm1646
    %vm1711 = vmand %vm1679, %vm1647
    %vm1712 = vmand %vm1680, %vm1648
    %vm1713 = vmand %vm1681, %vm1649
    %vm1714 = vmand %vm1682, %vm1650
    %vm1715 = vmand %vm1683, %vm1651
    %vm1716 = vmand %vm1684, %vm1652
    %vm1717 = vmand %vm1685, %vm1653
    %vm1718 = vmand %vm1686, %vm1654
    %vm1719 = vmand %vm1687, %vm1655
    %vm1720 = vmand %vm1688, %vm1656
    %vm1721 = vmand %vm1689, %vm1657
    %vm1722 = vmand %vm1690, %vm1658
    %vm1723 = vmand %vm1691, %vm1659
    %vm1724 = vmand %vm1692, %vm1660
    %vm1725 = vmand %vm1693, %vm1661
    %vm1726 = vmand %vm1694, %vm1662
    %v1727 = vadd.s32 %v1413, 8
    %v1728 = vadd.s32 %v1420, 8
    %v1729 = vadd.s32 %v1427, 8
    %v1730 = vadd.s32 %v1434, 8
    %v1731 = vadd.s32 %v1441, 8
    %v1732 = vadd.s32 %v1448, 8
    %v1733 = vadd.s32 %v1455, 8
    %v1734 = vadd.s32 %v1462, 8
    %v1735 = vadd.s32 %v1469, 8
    %v1736 = vadd.s32 %v1476, 8
    %v1737 = vadd.s32 %v1483, 8
    %v1738 = vadd.s32 %v1490, 8
    %v1739 = vadd.s32 %v1497, 8
    %v1740 = vadd.s32 %v1504, 8
    %v1741 = vadd.s32 %v1511, 8
    %v1742 = vadd.s32 %v1518, 8
    %v1743 = vadd.s32 %v1525, 8
    %v1744 = vadd.s32 %v1532, 8
    %v1745 = vadd.s32 %v1539, 8
    %v1746 = vadd.s32 %v1546, 8
    %v1747 = vadd.s32 %v1553, 8
    %v1748 = vadd.s32 %v1560, 8
    %v1749 = vadd.s32 %v1567, 8
    %v1750 = vadd.s32 %v1574, 8
    %v1751 = vadd.s32 %v1581, 8
    %v1752 = vadd.s32 %v1588, 8
    %v1753 = vadd.s32 %v1595, 8
    %v1754 = vadd.s32 %v1602, 8
    %v1755 = vadd.s32 %v1609, 8
    %v1756 = vadd.s32 %v1616, 8
    %v1757 = vadd.s32 %v1623, 8
    %v1758 = vadd.s32 %v1630, 8
    %v1759 = vsel %vm1695, %v1727, %v1413
    %v1760 = vsel %vm1696, %v1728, %v1420
    %v1761 = vsel %vm1697, %v1729, %v1427
    %v1762 = vsel %vm1698, %v1730, %v1434
    %v1763 = vsel %vm1699, %v1731, %v1441
    %v1764 = vsel %vm1700, %v1732, %v1448
    %v1765 = vsel %vm1701, %v1733, %v1455
    %v1766 = vsel %vm1702, %v1734, %v1462
    %v1767 = vsel %vm1703, %v1735, %v1469
    %v1768 = vsel %vm1704, %v1736, %v1476
    %v1769 = vsel %vm1705, %v1737, %v1483
    %v1770 = vsel %vm1706, %v1738, %v1490
    %v1771 = vsel %vm1707, %v1739, %v1497
    %v1772 = vsel %vm1708, %v1740, %v1504
    %v1773 = vsel %vm1709, %v1741, %v1511
    %v1774 = vsel %vm1710, %v1742, %v1518
    %v1775 = vsel %vm1711, %v1743, %v1525
    %v1776 = vsel %vm1712, %v1744, %v1532
    %v1777 = vsel %vm1713, %v1745, %v1539
    %v1778 = vsel %vm1714, %v1746, %v1546
    %v1779 = vsel %vm1715, %v1747, %v1553
    %v1780 = vsel %vm1716, %v1748, %v1560
    %v1781 = vsel %vm1717, %v1749, %v1567
    %v1782 = vsel %vm1718, %v1750, %v1574
    %v1783 = vsel %vm1719, %v1751, %v1581
    %v1784 = vsel %vm1720, %v1752, %v1588
    %v1785 = vsel %vm1721, %v1753, %v1595
    %v1786 = vsel %vm1722, %v1754, %v1602
    %v1787 = vsel %vm1723, %v1755, %v1609
    %v1788 = vsel %vm1724, %v1756, %v1616
    %v1789 = vsel %vm1725, %v1757, %v1623
    %v1790 = vsel %vm1726, %v1758, %v1630
    %vm1791 = vcmp.ne.s32.totalorder %v1759, 0
    %vm1792 = vcmp.ne.s32.totalorder %v1760, 0
    %vm1793 = vcmp.ne.s32.totalorder %v1761, 0
    %vm1794 = vcmp.ne.s32.totalorder %v1762, 0
    %vm1795 = vcmp.ne.s32.totalorder %v1763, 0
    %vm1796 = vcmp.ne.s32.totalorder %v1764, 0
    %vm1797 = vcmp.ne.s32.totalorder %v1765, 0
    %vm1798 = vcmp.ne.s32.totalorder %v1766, 0
    %vm1799 = vcmp.ne.s32.totalorder %v1767, 0
    %vm1800 = vcmp.ne.s32.totalorder %v1768, 0
    %vm1801 = vcmp.ne.s32.totalorder %v1769, 0
    %vm1802 = vcmp.ne.s32.totalorder %v1770, 0
    %vm1803 = vcmp.ne.s32.totalorder %v1771, 0
    %vm1804 = vcmp.ne.s32.totalorder %v1772, 0
    %vm1805 = vcmp.ne.s32.totalorder %v1773, 0
    %vm1806 = vcmp.ne.s32.totalorder %v1774, 0
    %vm1807 = vcmp.ne.s32.totalorder %v1775, 0
    %vm1808 = vcmp.ne.s32.totalorder %v1776, 0
    %vm1809 = vcmp.ne.s32.totalorder %v1777, 0
    %vm1810 = vcmp.ne.s32.totalorder %v1778, 0
    %vm1811 = vcmp.ne.s32.totalorder %v1779, 0
    %vm1812 = vcmp.ne.s32.totalorder %v1780, 0
    %vm1813 = vcmp.ne.s32.totalorder %v1781, 0
    %vm1814 = vcmp.ne.s32.totalorder %v1782, 0
    %vm1815 = vcmp.ne.s32.totalorder %v1783, 0
    %vm1816 = vcmp.ne.s32.totalorder %v1784, 0
    %vm1817 = vcmp.ne.s32.totalorder %v1785, 0
    %vm1818 = vcmp.ne.s32.totalorder %v1786, 0
    %vm1819 = vcmp.ne.s32.totalorder %v1787, 0
    %vm1820 = vcmp.ne.s32.totalorder %v1788, 0
    %vm1821 = vcmp.ne.s32.totalorder %v1789, 0
    %vm1822 = vcmp.ne.s32.totalorder %v1790, 0
    %v1823 = vrot.slane %v1342, 7
    %v1824 = vrot.slane %v1343, 7
    %v1825 = vrot.slane %v1344, 7
    %v1826 = vrot.slane %v1345, 7
    %v1827 = vrot.slane %v1346, 7
    %v1828 = vrot.slane %v1347, 7
    %v1829 = vrot.slane %v1348, 7
    %v1830 = vrot.slane %v1349, 7
    %v1831 = vrot.slane %v1350, 7
    %v1832 = vrot.slane %v1351, 7
    %v1833 = vrot.slane %v1352, 7
    %v1834 = vrot.slane %v1353, 7
    %v1835 = vrot.slane %v1354, 7
    %v1836 = vrot.slane %v1355, 7
    %v1837 = vrot.slane %v1356, 7
    %v1838 = vrot.slane %v1357, 7
    %v1839 = vrot.slane %v1358, 7
    %v1840 = vrot.slane %v1359, 7
    %v1841 = vrot.slane %v1360, 7
    %v1842 = vrot.slane %v1361, 7
    %v1843 = vrot.slane %v1362, 7
    %v1844 = vrot.slane %v1363, 7
    %v1845 = vrot.slane %v1364, 7
    %v1846 = vrot.slane %v1365, 7
    %v1847 = vrot.slane %v1366, 7
    %v1848 = vrot.slane %v1367, 7
    %v1849 = vrot.slane %v1368, 7
    %v1850 = vrot.slane %v1369, 7
    %v1851 = vrot.slane %v1370, 7
    %v1852 = vrot.slane %v1371, 7
    %v1853 = vrot.slane %v1372, 7
    %v1854 = vrot.slane %v1373, 7
    %vm1855 = vcmp.lt.s32.totalorder %v1375, 1
    %v1856 = vsel %vm1855, %v1853, %v1854
    %v1857 = vsel %vm1855, %v1852, %v1853
    %v1858 = vsel %vm1855, %v1851, %v1852
    %v1859 = vsel %vm1855, %v1850, %v1851
    %v1860 = vsel %vm1855, %v1849, %v1850
    %v1861 = vsel %vm1855, %v1848, %v1849
    %v1862 = vsel %vm1855, %v1847, %v1848
    %v1863 = vsel %vm1855, %v1846, %v1847
    %v1864 = vsel %vm1855, %v1845, %v1846
    %v1865 = vsel %vm1855, %v1844, %v1845
    %v1866 = vsel %vm1855, %v1843, %v1844
    %v1867 = vsel %vm1855, %v1842, %v1843
    %v1868 = vsel %vm1855, %v1841, %v1842
    %v1869 = vsel %vm1855, %v1840, %v1841
    %v1870 = vsel %vm1855, %v1839, %v1840
    %v1871 = vsel %vm1855, %v1838, %v1839
    %v1872 = vsel %vm1855, %v1837, %v1838
    %v1873 = vsel %vm1855, %v1836, %v1837
    %v1874 = vsel %vm1855, %v1835, %v1836
    %v1875 = vsel %vm1855, %v1834, %v1835
    %v1876 = vsel %vm1855, %v1833, %v1834
    %v1877 = vsel %vm1855, %v1832, %v1833
    %v1878 = vsel %vm1855, %v1831, %v1832
    %v1879 = vsel %vm1855, %v1830, %v1831
    %v1880 = vsel %vm1855, %v1829, %v1830
    %v1881 = vsel %vm1855, %v1828, %v1829
    %v1882 = vsel %vm1855, %v1827, %v1828
    %v1883 = vsel %vm1855, %v1826, %v1827
    %v1884 = vsel %vm1855, %v1825, %v1826
    %v1885 = vsel %vm1855, %v1824, %v1825
    %v1886 = vsel %vm1855, %v1823, %v1824
    %v1887 = vsel %vm1855, %v1854, %v1823
    %v1888 = vmax.f32 %v1310, 0.0
    %v1889 = vmax.f32 %v1311, 0.0
    %v1890 = vmax.f32 %v1312, 0.0
    %v1891 = vmax.f32 %v1313, 0.0
    %v1892 = vmax.f32 %v1314, 0.0
    %v1893 = vmax.f32 %v1315, 0.0
    %v1894 = vmax.f32 %v1316, 0.0
    %v1895 = vmax.f32 %v1317, 0.0
    %v1896 = vmax.f32 %v1318, 0.0
    %v1897 = vmax.f32 %v1319, 0.0
    %v1898 = vmax.f32 %v1320, 0.0
    %v1899 = vmax.f32 %v1321, 0.0
    %v1900 = vmax.f32 %v1322, 0.0
    %v1901 = vmax.f32 %v1323, 0.0
    %v1902 = vmax.f32 %v1324, 0.0
    %v1903 = vmax.f32 %v1325, 0.0
    %v1904 = vmax.f32 %v1326, 0.0
    %v1905 = vmax.f32 %v1327, 0.0
    %v1906 = vmax.f32 %v1328, 0.0
    %v1907 = vmax.f32 %v1329, 0.0
    %v1908 = vmax.f32 %v1330, 0.0
    %v1909 = vmax.f32 %v1331, 0.0
    %v1910 = vmax.f32 %v1332, 0.0
    %v1911 = vmax.f32 %v1333, 0.0
    %v1912 = vmax.f32 %v1334, 0.0
    %v1913 = vmax.f32 %v1335, 0.0
    %v1914 = vmax.f32 %v1336, 0.0
    %v1915 = vmax.f32 %v1337, 0.0
    %v1916 = vmax.f32 %v1338, 0.0
    %v1917 = vmax.f32 %v1339, 0.0
    %v1918 = vmax.f32 %v1340, 0.0
    %v1919 = vmax.f32 %v1341, 0.0
    %v1920 = vmax.f32 %v1342, 0.0
    %v1921 = vmax.f32 %v1343, 0.0
    %v1922 = vmax.f32 %v1344, 0.0
    %v1923 = vmax.f32 %v1345, 0.0
    %v1924 = vmax.f32 %v1346, 0.0
    %v1925 = vmax.f32 %v1347, 0.0
    %v1926 = vmax.f32 %v1348, 0.0
    %v1927 = vmax.f32 %v1349, 0.0
    %v1928 = vmax.f32 %v1350, 0.0
    %v1929 = vmax.f32 %v1351, 0.0
    %v1930 = vmax.f32 %v1352, 0.0
    %v1931 = vmax.f32 %v1353, 0.0
    %v1932 = vmax.f32 %v1354, 0.0
    %v1933 = vmax.f32 %v1355, 0.0
    %v1934 = vmax.f32 %v1356, 0.0
    %v1935 = vmax.f32 %v1357, 0.0
    %v1936 = vmax.f32 %v1358, 0.0
    %v1937 = vmax.f32 %v1359, 0.0
    %v1938 = vmax.f32 %v1360, 0.0
    %v1939 = vmax.f32 %v1361, 0.0
    %v1940 = vmax.f32 %v1362, 0.0
    %v1941 = vmax.f32 %v1363, 0.0
    %v1942 = vmax.f32 %v1364, 0.0
    %v1943 = vmax.f32 %v1365, 0.0
    %v1944 = vmax.f32 %v1366, 0.0
    %v1945 = vmax.f32 %v1367, 0.0
    %v1946 = vmax.f32 %v1368, 0.0
    %v1947 = vmax.f32 %v1369, 0.0
    %v1948 = vmax.f32 %v1370, 0.0
    %v1949 = vmax.f32 %v1371, 0.0
    %v1950 = vmax.f32 %v1372, 0.0
    %v1951 = vmax.f32 %v1373, 0.0
    %v1952 = vmax.f32 %v1887, 0.0
    %v1953 = vmax.f32 %v1886, 0.0
    %v1954 = vmax.f32 %v1885, 0.0
    %v1955 = vmax.f32 %v1884, 0.0
    %v1956 = vmax.f32 %v1883, 0.0
    %v1957 = vmax.f32 %v1882, 0.0
    %v1958 = vmax.f32 %v1881, 0.0
    %v1959 = vmax.f32 %v1880, 0.0
    %v1960 = vmax.f32 %v1879, 0.0
    %v1961 = vmax.f32 %v1878, 0.0
    %v1962 = vmax.f32 %v1877, 0.0
    %v1963 = vmax.f32 %v1876, 0.0
    %v1964 = vmax.f32 %v1875, 0.0
    %v1965 = vmax.f32 %v1874, 0.0
    %v1966 = vmax.f32 %v1873, 0.0
    %v1967 = vmax.f32 %v1872, 0.0
    %v1968 = vmax.f32 %v1871, 0.0
    %v1969 = vmax.f32 %v1870, 0.0
    %v1970 = vmax.f32 %v1869, 0.0
    %v1971 = vmax.f32 %v1868, 0.0
    %v1972 = vmax.f32 %v1867, 0.0
    %v1973 = vmax.f32 %v1866, 0.0
    %v1974 = vmax.f32 %v1865, 0.0
    %v1975 = vmax.f32 %v1864, 0.0
    %v1976 = vmax.f32 %v1863, 0.0
    %v1977 = vmax.f32 %v1862, 0.0
    %v1978 = vmax.f32 %v1861, 0.0
    %v1979 = vmax.f32 %v1860, 0.0
    %v1980 = vmax.f32 %v1859, 0.0
    %v1981 = vmax.f32 %v1858, 0.0
    %v1982 = vmax.f32 %v1857, 0.0
    %v1983 = vmax.f32 %v1856, 0.0
    %v1984 = vsel %vm1791, 1, 0
    %v1985 = vsel %vm1792, 1, 0
    %v1986 = vsel %vm1793, 1, 0
    %v1987 = vsel %vm1794, 1, 0
    %v1988 = vsel %vm1795, 1, 0
    %v1989 = vsel %vm1796, 1, 0
    %v1990 = vsel %vm1797, 1, 0
    %v1991 = vsel %vm1798, 1, 0
    %v1992 = vsel %vm1799, 1, 0
    %v1993 = vsel %vm1800, 1, 0
    %v1994 = vsel %vm1801, 1, 0
    %v1995 = vsel %vm1802, 1, 0
    %v1996 = vsel %vm1803, 1, 0
    %v1997 = vsel %vm1804, 1, 0
    %v1998 = vsel %vm1805, 1, 0
    %v1999 = vsel %vm1806, 1, 0
    %v2000 = vsel %vm1807, 1, 0
    %v2001 = vsel %vm1808, 1, 0
    %v2002 = vsel %vm1809, 1, 0
    %v2003 = vsel %vm1810, 1, 0
    %v2004 = vsel %vm1811, 1, 0
    %v2005 = vsel %vm1812, 1, 0
    %v2006 = vsel %vm1813, 1, 0
    %v2007 = vsel %vm1814, 1, 0
    %v2008 = vsel %vm1815, 1, 0
    %v2009 = vsel %vm1816, 1, 0
    %v2010 = vsel %vm1817, 1, 0
    %v2011 = vsel %vm1818, 1, 0
    %v2012 = vsel %vm1819, 1, 0
    %v2013 = vsel %vm1820, 1, 0
    %v2014 = vsel %vm1821, 1, 0
    %v2015 = vsel %vm1822, 1, 0
    %vm2016 = vcmp.eq.s32.totalorder %v1984, 1
    %vm2017 = vcmp.eq.s32.totalorder %v1985, 1
    %vm2018 = vcmp.eq.s32.totalorder %v1986, 1
    %vm2019 = vcmp.eq.s32.totalorder %v1987, 1
    %vm2020 = vcmp.eq.s32.totalorder %v1988, 1
    %vm2021 = vcmp.eq.s32.totalorder %v1989, 1
    %vm2022 = vcmp.eq.s32.totalorder %v1990, 1
    %vm2023 = vcmp.eq.s32.totalorder %v1991, 1
    %vm2024 = vcmp.eq.s32.totalorder %v1992, 1
    %vm2025 = vcmp.eq.s32.totalorder %v1993, 1
    %vm2026 = vcmp.eq.s32.totalorder %v1994, 1
    %vm2027 = vcmp.eq.s32.totalorder %v1995, 1
    %vm2028 = vcmp.eq.s32.totalorder %v1996, 1
    %vm2029 = vcmp.eq.s32.totalorder %v1997, 1
    %vm2030 = vcmp.eq.s32.totalorder %v1998, 1
    %vm2031 = vcmp.eq.s32.totalorder %v1999, 1
    %vm2032 = vcmp.eq.s32.totalorder %v2000, 1
    %vm2033 = vcmp.eq.s32.totalorder %v2001, 1
    %vm2034 = vcmp.eq.s32.totalorder %v2002, 1
    %vm2035 = vcmp.eq.s32.totalorder %v2003, 1
    %vm2036 = vcmp.eq.s32.totalorder %v2004, 1
    %vm2037 = vcmp.eq.s32.totalorder %v2005, 1
    %vm2038 = vcmp.eq.s32.totalorder %v2006, 1
    %vm2039 = vcmp.eq.s32.totalorder %v2007, 1
    %vm2040 = vcmp.eq.s32.totalorder %v2008, 1
    %vm2041 = vcmp.eq.s32.totalorder %v2009, 1
    %vm2042 = vcmp.eq.s32.totalorder %v2010, 1
    %vm2043 = vcmp.eq.s32.totalorder %v2011, 1
    %vm2044 = vcmp.eq.s32.totalorder %v2012, 1
    %vm2045 = vcmp.eq.s32.totalorder %v2013, 1
    %vm2046 = vcmp.eq.s32.totalorder %v2014, 1
    %vm2047 = vcmp.eq.s32.totalorder %v2015, 1
    %v2048 = vsel %vm2016, %v1952, 0.0
    %v2049 = vsel %vm2017, %v1953, 0.0
    %v2050 = vsel %vm2018, %v1954, 0.0
    %v2051 = vsel %vm2019, %v1955, 0.0
    %v2052 = vsel %vm2020, %v1956, 0.0
    %v2053 = vsel %vm2021, %v1957, 0.0
    %v2054 = vsel %vm2022, %v1958, 0.0
    %v2055 = vsel %vm2023, %v1959, 0.0
    %v2056 = vsel %vm2024, %v1960, 0.0
    %v2057 = vsel %vm2025, %v1961, 0.0
    %v2058 = vsel %vm2026, %v1962, 0.0
    %v2059 = vsel %vm2027, %v1963, 0.0
    %v2060 = vsel %vm2028, %v1964, 0.0
    %v2061 = vsel %vm2029, %v1965, 0.0
    %v2062 = vsel %vm2030, %v1966, 0.0
    %v2063 = vsel %vm2031, %v1967, 0.0
    %v2064 = vsel %vm2032, %v1968, 0.0
    %v2065 = vsel %vm2033, %v1969, 0.0
    %v2066 = vsel %vm2034, %v1970, 0.0
    %v2067 = vsel %vm2035, %v1971, 0.0
    %v2068 = vsel %vm2036, %v1972, 0.0
    %v2069 = vsel %vm2037, %v1973, 0.0
    %v2070 = vsel %vm2038, %v1974, 0.0
    %v2071 = vsel %vm2039, %v1975, 0.0
    %v2072 = vsel %vm2040, %v1976, 0.0
    %v2073 = vsel %vm2041, %v1977, 0.0
    %v2074 = vsel %vm2042, %v1978, 0.0
    %v2075 = vsel %vm2043, %v1979, 0.0
    %v2076 = vsel %vm2044, %v1980, 0.0
    %v2077 = vsel %vm2045, %v1981, 0.0
    %v2078 = vsel %vm2046, %v1982, 0.0
    %v2079 = vsel %vm2047, %v1983, 0.0
    %v2080 = vld [vmem:[%s4] sm:$0xff]
    %v2081 = vld [vmem:[%s4 + $0x8] sm:$0xff]
    %v2082 = vld [vmem:[%s4 + $0x10] sm:$0xff]
    %v2083 = vld [vmem:[%s4 + $0x18] sm:$0xff]
    %v2084 = vld [vmem:[%s4 + $0x20] sm:$0xff]
    %v2085 = vld [vmem:[%s4 + $0x28] sm:$0xff]
    %v2086 = vld [vmem:[%s4 + $0x30] sm:$0xff]
    %v2087 = vld [vmem:[%s4 + $0x38] sm:$0xff]
    %v2088 = vld [vmem:[%s5] sm:$0xff]
    %v2089 = vld [vmem:[%s5 + $0x8] sm:$0xff]
    %v2090 = vld [vmem:[%s5 + $0x10] sm:$0xff]
    %v2091 = vld [vmem:[%s5 + $0x18] sm:$0xff]
    %v2092 = vld [vmem:[%s5 + $0x20] sm:$0xff]
    %v2093 = vld [vmem:[%s5 + $0x28] sm:$0xff]
    %v2094 = vld [vmem:[%s5 + $0x30] sm:$0xff]
    %v2095 = vld [vmem:[%s5 + $0x38] sm:$0xff]
    %v2097 = vsel %vm771, %v1888, 0
    %v2100 = vsel %vm771, %v1889, 0
    %v2103 = vsel %vm771, %v1890, 0
    %v2106 = vsel %vm771, %v1891, 0
    %v2109 = vsel %vm771, %v1892, 0
    %v2112 = vsel %vm771, %v1893, 0
    %v2115 = vsel %vm771, %v1894, 0
    %v2118 = vsel %vm771, %v1895, 0
    %v2121 = vsel %vm771, %v1896, 0
    %v2124 = vsel %vm771, %v1897, 0
    %v2127 = vsel %vm771, %v1898, 0
    %v2130 = vsel %vm771, %v1899, 0
    %v2133 = vsel %vm771, %v1900, 0
    %v2136 = vsel %vm771, %v1901, 0
    %v2139 = vsel %vm771, %v1902, 0
    %v2142 = vsel %vm771, %v1903, 0
    %v2145 = vsel %vm771, %v1904, 0
    %v2148 = vsel %vm771, %v1905, 0
    %v2151 = vsel %vm771, %v1906, 0
    %v2154 = vsel %vm771, %v1907, 0
    %v2157 = vsel %vm771, %v1908, 0
    %v2160 = vsel %vm771, %v1909, 0
    %v2163 = vsel %vm771, %v1910, 0
    %v2166 = vsel %vm771, %v1911, 0
    %v2169 = vsel %vm771, %v1912, 0
    %v2172 = vsel %vm771, %v1913, 0
    %v2175 = vsel %vm771, %v1914, 0
    %v2178 = vsel %vm771, %v1915, 0
    %v2181 = vsel %vm771, %v1916, 0
    %v2184 = vsel %vm771, %v1917, 0
    %v2187 = vsel %vm771, %v1918, 0
    %v2190 = vsel %vm771, %v1919, 0
    %2192 = vmatprep.subr.mxu0 0.0
    %2193 = vmatpush1.msra.mxu0 %v2088
    %2194 = vmatprep.subr.mxu0 0.0
    %2195 = vmatpush1.msra.mxu0 %v2089
    %2196 = vmatprep.subr.mxu0 0.0
    %2197 = vmatpush1.msra.mxu0 %v2090
    %2198 = vmatprep.subr.mxu0 0.0
    %2199 = vmatpush1.msra.mxu0 %v2091
    %2200 = vmatprep.subr.mxu0 0.0
    %2201 = vmatpush1.msra.mxu0 %v2092
    %2202 = vmatprep.subr.mxu0 0.0
    %2203 = vmatpush1.msra.mxu0 %v2093
    %2204 = vmatprep.subr.mxu0 0.0
    %2205 = vmatpush1.msra.mxu0 %v2094
    %2206 = vmatprep.subr.mxu0 0.0
    %2207 = vmatpush1.msra.mxu0 %v2095
    %2208 = vmatprep.subr.mxu0 0.0
    %2209 = vmatpush1.msra.mxu0 0.0
    %2210 = vmatprep.subr.mxu0 0.0
    %2211 = vmatpush1.msra.mxu0 0.0
    %2212 = vmatprep.subr.mxu0 0.0
    %2213 = vmatpush1.msra.mxu0 0.0
    %2214 = vmatprep.subr.mxu0 0.0
    %2215 = vmatpush1.msra.mxu0 0.0
    %2216 = vmatprep.subr.mxu0 0.0
    %2217 = vmatpush1.msra.mxu0 0.0
    %2218 = vmatprep.subr.mxu0 0.0
    %2219 = vmatpush1.msra.mxu0 0.0
    %2220 = vmatprep.subr.mxu0 0.0
    %2221 = vmatpush1.msra.mxu0 0.0
    %2222 = vmatprep.subr.mxu0 0.0
    %2223 = vmatpush1.msra.mxu0 0.0
    %2224 = vmatprep.subr.mxu0 0.0
    %2225 = vmatpush1.msra.mxu0 0.0
    %2226 = vmatprep.subr.mxu0 0.0
    %2227 = vmatpush1.msra.mxu0 0.0
    %2228 = vmatprep.subr.mxu0 0.0
    %2229 = vmatpush1.msra.mxu0 0.0
    %2230 = vmatprep.subr.mxu0 0.0
    %2231 = vmatpush1.msra.mxu0 0.0
    %2232 = vmatprep.subr.mxu0 0.0
    %2233 = vmatpush1.msra.mxu0 0.0
    %2234 = vmatprep.subr.mxu0 0.0
    %2235 = vmatpush1.msra.mxu0 0.0
    %2236 = vmatprep.subr.mxu0 0.0
    %2237 = vmatpush1.msra.mxu0 0.0
    %2238 = vmatprep.subr.mxu0 0.0
    %2239 = vmatpush1.msra.mxu0 0.0
    %2240 = vmatprep.subr.mxu0 0.0
    %2241 = vmatpush1.msra.mxu0 0.0
    %2242 = vmatprep.subr.mxu0 0.0
    %2243 = vmatpush1.msra.mxu0 0.0
    %2244 = vmatprep.subr.mxu0 0.0
    %2245 = vmatpush1.msra.mxu0 0.0
    %2246 = vmatprep.subr.mxu0 0.0
    %2247 = vmatpush1.msra.mxu0 0.0
    %2248 = vmatprep.subr.mxu0 0.0
    %2249 = vmatpush1.msra.mxu0 0.0
    %2250 = vmatprep.subr.mxu0 0.0
    %2251 = vmatpush1.msra.mxu0 0.0
    %2252 = vmatprep.subr.mxu0 0.0
    %2253 = vmatpush1.msra.mxu0 0.0
    %2254 = vmatprep.subr.mxu0 0.0
    %2255 = vmatpush1.msra.mxu0 0.0
    %2256 = vmatprep.mubr.f32.mxu0 0.0
    %2257 = vmatmul.mubr.f32.gmra.mrb[0].mxu0 %v2097
    %v2258 = vpop.f32.mrb[0].mxu0
    %v2259 = vadd.f32 0.0, %v2258
    %v2260 = vpop.f32.mrb[0].mxu0
    %2261 = vmatprep.mubr.f32.mxu0 0.0
    %2262 = vmatmul.mubr.f32.gmra.mrb[0].mxu0 %v2100
    %v2263 = vpop.f32.mrb[0].mxu0
    %v2264 = vadd.f32 0.0, %v2263
    %v2265 = vpop.f32.mrb[0].mxu0
    %2266 = vmatprep.mubr.f32.mxu0 0.0
    %2267 = vmatmul.mubr.f32.gmra.mrb[0].mxu0 %v2103
    %v2268 = vpop.f32.mrb[0].mxu0
    %v2269 = vadd.f32 0.0, %v2268
    %v2270 = vpop.f32.mrb[0].mxu0
    %2271 = vmatprep.mubr.f32.mxu0 0.0
    %2272 = vmatmul.mubr.f32.gmra.mrb[0].mxu0 %v2106
    %v2273 = vpop.f32.mrb[0].mxu0
    %v2274 = vadd.f32 0.0, %v2273
    %v2275 = vpop.f32.mrb[0].mxu0
    %2276 = vmatprep.mubr.f32.mxu0 0.0
    %2277 = vmatmul.mubr.f32.gmra.mrb[0].mxu0 %v2109
    %v2278 = vpop.f32.mrb[0].mxu0
    %v2279 = vadd.f32 0.0, %v2278
    %v2280 = vpop.f32.mrb[0].mxu0
    %2281 = vmatprep.mubr.f32.mxu0 0.0
    %2282 = vmatmul.mubr.f32.gmra.mrb[0].mxu0 %v2112
    %v2283 = vpop.f32.mrb[0].mxu0
    %v2284 = vadd.f32 0.0, %v2283
    %v2285 = vpop.f32.mrb[0].mxu0
    %2286 = vmatprep.mubr.f32.mxu0 0.0
    %2287 = vmatmul.mubr.f32.gmra.mrb[0].mxu0 %v2115
    %v2288 = vpop.f32.mrb[0].mxu0
    %v2289 = vadd.f32 0.0, %v2288
    %v2290 = vpop.f32.mrb[0].mxu0
    %2291 = vmatprep.mubr.f32.mxu0 0.0
    %2292 = vmatmul.mubr.f32.gmra.mrb[0].mxu0 %v2118
    %v2293 = vpop.f32.mrb[0].mxu0
    %v2294 = vadd.f32 0.0, %v2293
    %v2295 = vpop.f32.mrb[0].mxu0
    %2296 = vmatprep.mubr.f32.mxu0 0.0
    %2297 = vmatmul.mubr.f32.gmra.mrb[0].mxu0 %v2121
    %v2298 = vpop.f32.mrb[0].mxu0
    %v2299 = vadd.f32 0.0, %v2298
    %v2300 = vpop.f32.mrb[0].mxu0
    %2301 = vmatprep.mubr.f32.mxu0 0.0
    %2302 = vmatmul.mubr.f32.gmra.mrb[0].mxu0 %v2124
    %v2303 = vpop.f32.mrb[0].mxu0
    %v2304 = vadd.f32 0.0, %v2303
    %v2305 = vpop.f32.mrb[0].mxu0
    %2306 = vmatprep.mubr.f32.mxu0 0.0
    %2307 = vmatmul.mubr.f32.gmra.mrb[0].mxu0 %v2127
    %v2308 = vpop.f32.mrb[0].mxu0
    %v2309 = vadd.f32 0.0, %v2308
    %v2310 = vpop.f32.mrb[0].mxu0
    %2311 = vmatprep.mubr.f32.mxu0 0.0
    %2312 = vmatmul.mubr.f32.gmra.mrb[0].mxu0 %v2130
    %v2313 = vpop.f32.mrb[0].mxu0
    %v2314 = vadd.f32 0.0, %v2313
    %v2315 = vpop.f32.mrb[0].mxu0
    %2316 = vmatprep.mubr.f32.mxu0 0.0
    %2317 = vmatmul.mubr.f32.gmra.mrb[0].mxu0 %v2133
    %v2318 = vpop.f32.mrb[0].mxu0
    %v2319 = vadd.f32 0.0, %v2318
    %v2320 = vpop.f32.mrb[0].mxu0
    %2321 = vmatprep.mubr.f32.mxu0 0.0
    %2322 = vmatmul.mubr.f32.gmra.mrb[0].mxu0 %v2136
    %v2323 = vpop.f32.mrb[0].mxu0
    %v2324 = vadd.f32 0.0, %v2323
    %v2325 = vpop.f32.mrb[0].mxu0
    %2326 = vmatprep.mubr.f32.mxu0 0.0
    %2327 = vmatmul.mubr.f32.gmra.mrb[0].mxu0 %v2139
    %v2328 = vpop.f32.mrb[0].mxu0
    %v2329 = vadd.f32 0.0, %v2328
    %v2330 = vpop.f32.mrb[0].mxu0
    %2331 = vmatprep.mubr.f32.mxu0 0.0
    %2332 = vmatmul.mubr.f32.gmra.mrb[0].mxu0 %v2142
    %v2333 = vpop.f32.mrb[0].mxu0
    %v2334 = vadd.f32 0.0, %v2333
    %v2335 = vpop.f32.mrb[0].mxu0
    %2336 = vmatprep.mubr.f32.mxu0 0.0
    %2337 = vmatmul.mubr.f32.gmra.mrb[0].mxu0 %v2145
    %v2338 = vpop.f32.mrb[0].mxu0
    %v2339 = vadd.f32 0.0, %v2338
    %v2340 = vpop.f32.mrb[0].mxu0
    %2341 = vmatprep.mubr.f32.mxu0 0.0
    %2342 = vmatmul.mubr.f32.gmra.mrb[0].mxu0 %v2148
    %v2343 = vpop.f32.mrb[0].mxu0
    %v2344 = vadd.f32 0.0, %v2343
    %v2345 = vpop.f32.mrb[0].mxu0
    %2346 = vmatprep.mubr.f32.mxu0 0.0
    %2347 = vmatmul.mubr.f32.gmra.mrb[0].mxu0 %v2151
    %v2348 = vpop.f32.mrb[0].mxu0
    %v2349 = vadd.f32 0.0, %v2348
    %v2350 = vpop.f32.mrb[0].mxu0
    %2351 = vmatprep.mubr.f32.mxu0 0.0
    %2352 = vmatmul.mubr.f32.gmra.mrb[0].mxu0 %v2154
    %v2353 = vpop.f32.mrb[0].mxu0
    %v2354 = vadd.f32 0.0, %v2353
    %v2355 = vpop.f32.mrb[0].mxu0
    %2356 = vmatprep.mubr.f32.mxu0 0.0
    %2357 = vmatmul.mubr.f32.gmra.mrb[0].mxu0 %v2157
    %v2358 = vpop.f32.mrb[0].mxu0
    %v2359 = vadd.f32 0.0, %v2358
    %v2360 = vpop.f32.mrb[0].mxu0
    %2361 = vmatprep.mubr.f32.mxu0 0.0
    %2362 = vmatmul.mubr.f32.gmra.mrb[0].mxu0 %v2160
    %v2363 = vpop.f32.mrb[0].mxu0
    %v2364 = vadd.f32 0.0, %v2363
    %v2365 = vpop.f32.mrb[0].mxu0
    %2366 = vmatprep.mubr.f32.mxu0 0.0
    %2367 = vmatmul.mubr.f32.gmra.mrb[0].mxu0 %v2163
    %v2368 = vpop.f32.mrb[0].mxu0
    %v2369 = vadd.f32 0.0, %v2368
    %v2370 = vpop.f32.mrb[0].mxu0
    %2371 = vmatprep.mubr.f32.mxu0 0.0
    %2372 = vmatmul.mubr.f32.gmra.mrb[0].mxu0 %v2166
    %v2373 = vpop.f32.mrb[0].mxu0
    %v2374 = vadd.f32 0.0, %v2373
    %v2375 = vpop.f32.mrb[0].mxu0
    %2376 = vmatprep.mubr.f32.mxu0 0.0
    %2377 = vmatmul.mubr.f32.gmra.mrb[0].mxu0 %v2169
    %v2378 = vpop.f32.mrb[0].mxu0
    %v2379 = vadd.f32 0.0, %v2378
    %v2380 = vpop.f32.mrb[0].mxu0
    %2381 = vmatprep.mubr.f32.mxu0 0.0
    %2382 = vmatmul.mubr.f32.gmra.mrb[0].mxu0 %v2172
    %v2383 = vpop.f32.mrb[0].mxu0
    %v2384 = vadd.f32 0.0, %v2383
    %v2385 = vpop.f32.mrb[0].mxu0
    %2386 = vmatprep.mubr.f32.mxu0 0.0
    %2387 = vmatmul.mubr.f32.gmra.mrb[0].mxu0 %v2175
    %v2388 = vpop.f32.mrb[0].mxu0
    %v2389 = vadd.f32 0.0, %v2388
    %v2390 = vpop.f32.mrb[0].mxu0
    %2391 = vmatprep.mubr.f32.mxu0 0.0
    %2392 = vmatmul.mubr.f32.gmra.mrb[0].mxu0 %v2178
    %v2393 = vpop.f32.mrb[0].mxu0
    %v2394 = vadd.f32 0.0, %v2393
    %v2395 = vpop.f32.mrb[0].mxu0
    %2396 = vmatprep.mubr.f32.mxu0 0.0
    %2397 = vmatmul.mubr.f32.gmra.mrb[0].mxu0 %v2181
    %v2398 = vpop.f32.mrb[0].mxu0
    %v2399 = vadd.f32 0.0, %v2398
    %v2400 = vpop.f32.mrb[0].mxu0
    %2401 = vmatprep.mubr.f32.mxu0 0.0
    %2402 = vmatmul.mubr.f32.gmra.mrb[0].mxu0 %v2184
    %v2403 = vpop.f32.mrb[0].mxu0
    %v2404 = vadd.f32 0.0, %v2403
    %v2405 = vpop.f32.mrb[0].mxu0
    %2406 = vmatprep.mubr.f32.mxu0 0.0
    %2407 = vmatmul.mubr.f32.gmra.mrb[0].mxu0 %v2187
    %v2408 = vpop.f32.mrb[0].mxu0
    %v2409 = vadd.f32 0.0, %v2408
    %v2410 = vpop.f32.mrb[0].mxu0
    %2411 = vmatprep.mubr.f32.mxu0 0.0
    %2412 = vmatmul.mubr.f32.gmra.mrb[0].mxu0 %v2190
    %v2413 = vpop.f32.mrb[0].mxu0
    %v2414 = vadd.f32 0.0, %v2413
    %v2415 = vpop.f32.mrb[0].mxu0
    %2416 = vdwg.mxu0
    %v2418 = vsel %vm771, %v2048, 0
    %v2421 = vsel %vm771, %v2049, 0
    %v2424 = vsel %vm771, %v2050, 0
    %v2427 = vsel %vm771, %v2051, 0
    %v2430 = vsel %vm771, %v2052, 0
    %v2433 = vsel %vm771, %v2053, 0
    %v2436 = vsel %vm771, %v2054, 0
    %v2439 = vsel %vm771, %v2055, 0
    %v2442 = vsel %vm771, %v2056, 0
    %v2445 = vsel %vm771, %v2057, 0
    %v2448 = vsel %vm771, %v2058, 0
    %v2451 = vsel %vm771, %v2059, 0
    %v2454 = vsel %vm771, %v2060, 0
    %v2457 = vsel %vm771, %v2061, 0
    %v2460 = vsel %vm771, %v2062, 0
    %v2463 = vsel %vm771, %v2063, 0
    %v2466 = vsel %vm771, %v2064, 0
    %v2469 = vsel %vm771, %v2065, 0
    %v2472 = vsel %vm771, %v2066, 0
    %v2475 = vsel %vm771, %v2067, 0
    %v2478 = vsel %vm771, %v2068, 0
    %v2481 = vsel %vm771, %v2069, 0
    %v2484 = vsel %vm771, %v2070, 0
    %v2487 = vsel %vm771, %v2071, 0
    %v2490 = vsel %vm771, %v2072, 0
    %v2493 = vsel %vm771, %v2073, 0
    %v2496 = vsel %vm771, %v2074, 0
    %v2499 = vsel %vm771, %v2075, 0
    %v2502 = vsel %vm771, %v2076, 0
    %v2505 = vsel %vm771, %v2077, 0
    %v2508 = vsel %vm771, %v2078, 0
    %v2511 = vsel %vm771, %v2079, 0
    %2513 = vmatprep.subr.mxu0 0.0
    %2514 = vmatpush1.msra.mxu0 %v2080
    %2515 = vmatprep.subr.mxu0 0.0
    %2516 = vmatpush1.msra.mxu0 %v2081
    %2517 = vmatprep.subr.mxu0 0.0
    %2518 = vmatpush1.msra.mxu0 %v2082
    %2519 = vmatprep.subr.mxu0 0.0
    %2520 = vmatpush1.msra.mxu0 %v2083
    %2521 = vmatprep.subr.mxu0 0.0
    %2522 = vmatpush1.msra.mxu0 %v2084
    %2523 = vmatprep.subr.mxu0 0.0
    %2524 = vmatpush1.msra.mxu0 %v2085
    %2525 = vmatprep.subr.mxu0 0.0
    %2526 = vmatpush1.msra.mxu0 %v2086
    %2527 = vmatprep.subr.mxu0 0.0
    %2528 = vmatpush1.msra.mxu0 %v2087
    %2529 = vmatprep.subr.mxu0 0.0
    %2530 = vmatpush1.msra.mxu0 0.0
    %2531 = vmatprep.subr.mxu0 0.0
    %2532 = vmatpush1.msra.mxu0 0.0
    %2533 = vmatprep.subr.mxu0 0.0
    %2534 = vmatpush1.msra.mxu0 0.0
    %2535 = vmatprep.subr.mxu0 0.0
    %2536 = vmatpush1.msra.mxu0 0.0
    %2537 = vmatprep.subr.mxu0 0.0
    %2538 = vmatpush1.msra.mxu0 0.0
    %2539 = vmatprep.subr.mxu0 0.0
    %2540 = vmatpush1.msra.mxu0 0.0
    %2541 = vmatprep.subr.mxu0 0.0
    %2542 = vmatpush1.msra.mxu0 0.0
    %2543 = vmatprep.subr.mxu0 0.0
    %2544 = vmatpush1.msra.mxu0 0.0
    %2545 = vmatprep.subr.mxu0 0.0
    %2546 = vmatpush1.msra.mxu0 0.0
    %2547 = vmatprep.subr.mxu0 0.0
    %2548 = vmatpush1.msra.mxu0 0.0
    %2549 = vmatprep.subr.mxu0 0.0
    %2550 = vmatpush1.msra.mxu0 0.0
    %2551 = vmatprep.subr.mxu0 0.0
    %2552 = vmatpush1.msra.mxu0 0.0
    %2553 = vmatprep.subr.mxu0 0.0
    %2554 = vmatpush1.msra.mxu0 0.0
    %2555 = vmatprep.subr.mxu0 0.0
    %2556 = vmatpush1.msra.mxu0 0.0
    %2557 = vmatprep.subr.mxu0 0.0
    %2558 = vmatpush1.msra.mxu0 0.0
    %2559 = vmatprep.subr.mxu0 0.0
    %2560 = vmatpush1.msra.mxu0 0.0
    %2561 = vmatprep.subr.mxu0 0.0
    %2562 = vmatpush1.msra.mxu0 0.0
    %2563 = vmatprep.subr.mxu0 0.0
    %2564 = vmatpush1.msra.mxu0 0.0
    %2565 = vmatprep.subr.mxu0 0.0
    %2566 = vmatpush1.msra.mxu0 0.0
    %2567 = vmatprep.subr.mxu0 0.0
    %2568 = vmatpush1.msra.mxu0 0.0
    %2569 = vmatprep.subr.mxu0 0.0
    %2570 = vmatpush1.msra.mxu0 0.0
    %2571 = vmatprep.subr.mxu0 0.0
    %2572 = vmatpush1.msra.mxu0 0.0
    %2573 = vmatprep.subr.mxu0 0.0
    %2574 = vmatpush1.msra.mxu0 0.0
    %2575 = vmatprep.subr.mxu0 0.0
    %2576 = vmatpush1.msra.mxu0 0.0
    %2577 = vmatprep.mubr.f32.mxu0 0.0
    %2578 = vmatmul.mubr.f32.gmra.mrb[0].mxu0 %v2418
    %v2579 = vpop.f32.mrb[0].mxu0
    %v2580 = vadd.f32 %v2259, %v2579
    %v2581 = vpop.f32.mrb[0].mxu0
    %2582 = vmatprep.mubr.f32.mxu0 0.0
    %2583 = vmatmul.mubr.f32.gmra.mrb[0].mxu0 %v2421
    %v2584 = vpop.f32.mrb[0].mxu0
    %v2585 = vadd.f32 %v2264, %v2584
    %v2586 = vpop.f32.mrb[0].mxu0
    %2587 = vmatprep.mubr.f32.mxu0 0.0
    %2588 = vmatmul.mubr.f32.gmra.mrb[0].mxu0 %v2424
    %v2589 = vpop.f32.mrb[0].mxu0
    %v2590 = vadd.f32 %v2269, %v2589
    %v2591 = vpop.f32.mrb[0].mxu0
    %2592 = vmatprep.mubr.f32.mxu0 0.0
    %2593 = vmatmul.mubr.f32.gmra.mrb[0].mxu0 %v2427
    %v2594 = vpop.f32.mrb[0].mxu0
    %v2595 = vadd.f32 %v2274, %v2594
    %v2596 = vpop.f32.mrb[0].mxu0
    %2597 = vmatprep.mubr.f32.mxu0 0.0
    %2598 = vmatmul.mubr.f32.gmra.mrb[0].mxu0 %v2430
    %v2599 = vpop.f32.mrb[0].mxu0
    %v2600 = vadd.f32 %v2279, %v2599
    %v2601 = vpop.f32.mrb[0].mxu0
    %2602 = vmatprep.mubr.f32.mxu0 0.0
    %2603 = vmatmul.mubr.f32.gmra.mrb[0].mxu0 %v2433
    %v2604 = vpop.f32.mrb[0].mxu0
    %v2605 = vadd.f32 %v2284, %v2604
    %v2606 = vpop.f32.mrb[0].mxu0
    %2607 = vmatprep.mubr.f32.mxu0 0.0
    %2608 = vmatmul.mubr.f32.gmra.mrb[0].mxu0 %v2436
    %v2609 = vpop.f32.mrb[0].mxu0
    %v2610 = vadd.f32 %v2289, %v2609
    %v2611 = vpop.f32.mrb[0].mxu0
    %2612 = vmatprep.mubr.f32.mxu0 0.0
    %2613 = vmatmul.mubr.f32.gmra.mrb[0].mxu0 %v2439
    %v2614 = vpop.f32.mrb[0].mxu0
    %v2615 = vadd.f32 %v2294, %v2614
    %v2616 = vpop.f32.mrb[0].mxu0
    %2617 = vmatprep.mubr.f32.mxu0 0.0
    %2618 = vmatmul.mubr.f32.gmra.mrb[0].mxu0 %v2442
    %v2619 = vpop.f32.mrb[0].mxu0
    %v2620 = vadd.f32 %v2299, %v2619
    %v2621 = vpop.f32.mrb[0].mxu0
    %2622 = vmatprep.mubr.f32.mxu0 0.0
    %2623 = vmatmul.mubr.f32.gmra.mrb[0].mxu0 %v2445
    %v2624 = vpop.f32.mrb[0].mxu0
    %v2625 = vadd.f32 %v2304, %v2624
    %v2626 = vpop.f32.mrb[0].mxu0
    %2627 = vmatprep.mubr.f32.mxu0 0.0
    %2628 = vmatmul.mubr.f32.gmra.mrb[0].mxu0 %v2448
    %v2629 = vpop.f32.mrb[0].mxu0
    %v2630 = vadd.f32 %v2309, %v2629
    %v2631 = vpop.f32.mrb[0].mxu0
    %2632 = vmatprep.mubr.f32.mxu0 0.0
    %2633 = vmatmul.mubr.f32.gmra.mrb[0].mxu0 %v2451
    %v2634 = vpop.f32.mrb[0].mxu0
    %v2635 = vadd.f32 %v2314, %v2634
    %v2636 = vpop.f32.mrb[0].mxu0
    %2637 = vmatprep.mubr.f32.mxu0 0.0
    %2638 = vmatmul.mubr.f32.gmra.mrb[0].mxu0 %v2454
    %v2639 = vpop.f32.mrb[0].mxu0
    %v2640 = vadd.f32 %v2319, %v2639
    %v2641 = vpop.f32.mrb[0].mxu0
    %2642 = vmatprep.mubr.f32.mxu0 0.0
    %2643 = vmatmul.mubr.f32.gmra.mrb[0].mxu0 %v2457
    %v2644 = vpop.f32.mrb[0].mxu0
    %v2645 = vadd.f32 %v2324, %v2644
    %v2646 = vpop.f32.mrb[0].mxu0
    %2647 = vmatprep.mubr.f32.mxu0 0.0
    %2648 = vmatmul.mubr.f32.gmra.mrb[0].mxu0 %v2460
    %v2649 = vpop.f32.mrb[0].mxu0
    %v2650 = vadd.f32 %v2329, %v2649
    %v2651 = vpop.f32.mrb[0].mxu0
    %2652 = vmatprep.mubr.f32.mxu0 0.0
    %2653 = vmatmul.mubr.f32.gmra.mrb[0].mxu0 %v2463
    %v2654 = vpop.f32.mrb[0].mxu0
    %v2655 = vadd.f32 %v2334, %v2654
    %v2656 = vpop.f32.mrb[0].mxu0
    %2657 = vmatprep.mubr.f32.mxu0 0.0
    %2658 = vmatmul.mubr.f32.gmra.mrb[0].mxu0 %v2466
    %v2659 = vpop.f32.mrb[0].mxu0
    %v2660 = vadd.f32 %v2339, %v2659
    %v2661 = vpop.f32.mrb[0].mxu0
    %2662 = vmatprep.mubr.f32.mxu0 0.0
    %2663 = vmatmul.mubr.f32.gmra.mrb[0].mxu0 %v2469
    %v2664 = vpop.f32.mrb[0].mxu0
    %v2665 = vadd.f32 %v2344, %v2664
    %v2666 = vpop.f32.mrb[0].mxu0
    %2667 = vmatprep.mubr.f32.mxu0 0.0
    %2668 = vmatmul.mubr.f32.gmra.mrb[0].mxu0 %v2472
    %v2669 = vpop.f32.mrb[0].mxu0
    %v2670 = vadd.f32 %v2349, %v2669
    %v2671 = vpop.f32.mrb[0].mxu0
    %2672 = vmatprep.mubr.f32.mxu0 0.0
    %2673 = vmatmul.mubr.f32.gmra.mrb[0].mxu0 %v2475
    %v2674 = vpop.f32.mrb[0].mxu0
    %v2675 = vadd.f32 %v2354, %v2674
    %v2676 = vpop.f32.mrb[0].mxu0
    %2677 = vmatprep.mubr.f32.mxu0 0.0
    %2678 = vmatmul.mubr.f32.gmra.mrb[0].mxu0 %v2478
    %v2679 = vpop.f32.mrb[0].mxu0
    %v2680 = vadd.f32 %v2359, %v2679
    %v2681 = vpop.f32.mrb[0].mxu0
    %2682 = vmatprep.mubr.f32.mxu0 0.0
    %2683 = vmatmul.mubr.f32.gmra.mrb[0].mxu0 %v2481
    %v2684 = vpop.f32.mrb[0].mxu0
    %v2685 = vadd.f32 %v2364, %v2684
    %v2686 = vpop.f32.mrb[0].mxu0
    %2687 = vmatprep.mubr.f32.mxu0 0.0
    %2688 = vmatmul.mubr.f32.gmra.mrb[0].mxu0 %v2484
    %v2689 = vpop.f32.mrb[0].mxu0
    %v2690 = vadd.f32 %v2369, %v2689
    %v2691 = vpop.f32.mrb[0].mxu0
    %2692 = vmatprep.mubr.f32.mxu0 0.0
    %2693 = vmatmul.mubr.f32.gmra.mrb[0].mxu0 %v2487
    %v2694 = vpop.f32.mrb[0].mxu0
    %v2695 = vadd.f32 %v2374, %v2694
    %v2696 = vpop.f32.mrb[0].mxu0
    %2697 = vmatprep.mubr.f32.mxu0 0.0
    %2698 = vmatmul.mubr.f32.gmra.mrb[0].mxu0 %v2490
    %v2699 = vpop.f32.mrb[0].mxu0
    %v2700 = vadd.f32 %v2379, %v2699
    %v2701 = vpop.f32.mrb[0].mxu0
    %2702 = vmatprep.mubr.f32.mxu0 0.0
    %2703 = vmatmul.mubr.f32.gmra.mrb[0].mxu0 %v2493
    %v2704 = vpop.f32.mrb[0].mxu0
    %v2705 = vadd.f32 %v2384, %v2704
    %v2706 = vpop.f32.mrb[0].mxu0
    %2707 = vmatprep.mubr.f32.mxu0 0.0
    %2708 = vmatmul.mubr.f32.gmra.mrb[0].mxu0 %v2496
    %v2709 = vpop.f32.mrb[0].mxu0
    %v2710 = vadd.f32 %v2389, %v2709
    %v2711 = vpop.f32.mrb[0].mxu0
    %2712 = vmatprep.mubr.f32.mxu0 0.0
    %2713 = vmatmul.mubr.f32.gmra.mrb[0].mxu0 %v2499
    %v2714 = vpop.f32.mrb[0].mxu0
    %v2715 = vadd.f32 %v2394, %v2714
    %v2716 = vpop.f32.mrb[0].mxu0
    %2717 = vmatprep.mubr.f32.mxu0 0.0
    %2718 = vmatmul.mubr.f32.gmra.mrb[0].mxu0 %v2502
    %v2719 = vpop.f32.mrb[0].mxu0
    %v2720 = vadd.f32 %v2399, %v2719
    %v2721 = vpop.f32.mrb[0].mxu0
    %2722 = vmatprep.mubr.f32.mxu0 0.0
    %2723 = vmatmul.mubr.f32.gmra.mrb[0].mxu0 %v2505
    %v2724 = vpop.f32.mrb[0].mxu0
    %v2725 = vadd.f32 %v2404, %v2724
    %v2726 = vpop.f32.mrb[0].mxu0
    %2727 = vmatprep.mubr.f32.mxu0 0.0
    %2728 = vmatmul.mubr.f32.gmra.mrb[0].mxu0 %v2508
    %v2729 = vpop.f32.mrb[0].mxu0
    %v2730 = vadd.f32 %v2409, %v2729
    %v2731 = vpop.f32.mrb[0].mxu0
    %2732 = vmatprep.mubr.f32.mxu0 0.0
    %2733 = vmatmul.mubr.f32.gmra.mrb[0].mxu0 %v2511
    %v2734 = vpop.f32.mrb[0].mxu0
    %v2735 = vadd.f32 %v2414, %v2734
    %v2736 = vpop.f32.mrb[0].mxu0
    %2737 = vdwg.mxu0
    %v2738 = vld [vmem:[%s6] sm:$0xff]
    %v2739 = vld [vmem:[%s6 + $0x8] sm:$0xff]
    %v2740 = vld [vmem:[%s6 + $0x10] sm:$0xff]
    %v2741 = vld [vmem:[%s6 + $0x18] sm:$0xff]
    %v2742 = vld [vmem:[%s6 + $0x20] sm:$0xff]
    %v2743 = vld [vmem:[%s6 + $0x28] sm:$0xff]
    %v2744 = vld [vmem:[%s6 + $0x30] sm:$0xff]
    %v2745 = vld [vmem:[%s6 + $0x38] sm:$0xff]
    %v2747 = vsel %vm771, %v1920, 0
    %v2750 = vsel %vm771, %v1921, 0
    %v2753 = vsel %vm771, %v1922, 0
    %v2756 = vsel %vm771, %v1923, 0
    %v2759 = vsel %vm771, %v1924, 0
    %v2762 = vsel %vm771, %v1925, 0
    %v2765 = vsel %vm771, %v1926, 0
    %v2768 = vsel %vm771, %v1927, 0
    %v2771 = vsel %vm771, %v1928, 0
    %v2774 = vsel %vm771, %v1929, 0
    %v2777 = vsel %vm771, %v1930, 0
    %v2780 = vsel %vm771, %v1931, 0
    %v2783 = vsel %vm771, %v1932, 0
    %v2786 = vsel %vm771, %v1933, 0
    %v2789 = vsel %vm771, %v1934, 0
    %v2792 = vsel %vm771, %v1935, 0
    %v2795 = vsel %vm771, %v1936, 0
    %v2798 = vsel %vm771, %v1937, 0
    %v2801 = vsel %vm771, %v1938, 0
    %v2804 = vsel %vm771, %v1939, 0
    %v2807 = vsel %vm771, %v1940, 0
    %v2810 = vsel %vm771, %v1941, 0
    %v2813 = vsel %vm771, %v1942, 0
    %v2816 = vsel %vm771, %v1943, 0
    %v2819 = vsel %vm771, %v1944, 0
    %v2822 = vsel %vm771, %v1945, 0
    %v2825 = vsel %vm771, %v1946, 0
    %v2828 = vsel %vm771, %v1947, 0
    %v2831 = vsel %vm771, %v1948, 0
    %v2834 = vsel %vm771, %v1949, 0
    %v2837 = vsel %vm771, %v1950, 0
    %v2840 = vsel %vm771, %v1951, 0
    %2842 = vmatprep.subr.mxu0 0.0
    %2843 = vmatpush1.msra.mxu0 %v2738
    %2844 = vmatprep.subr.mxu0 0.0
    %2845 = vmatpush1.msra.mxu0 %v2739
    %2846 = vmatprep.subr.mxu0 0.0
    %2847 = vmatpush1.msra.mxu0 %v2740
    %2848 = vmatprep.subr.mxu0 0.0
    %2849 = vmatpush1.msra.mxu0 %v2741
    %2850 = vmatprep.subr.mxu0 0.0
    %2851 = vmatpush1.msra.mxu0 %v2742
    %2852 = vmatprep.subr.mxu0 0.0
    %2853 = vmatpush1.msra.mxu0 %v2743
    %2854 = vmatprep.subr.mxu0 0.0
    %2855 = vmatpush1.msra.mxu0 %v2744
    %2856 = vmatprep.subr.mxu0 0.0
    %2857 = vmatpush1.msra.mxu0 %v2745
    %2858 = vmatprep.subr.mxu0 0.0
    %2859 = vmatpush1.msra.mxu0 0.0
    %2860 = vmatprep.subr.mxu0 0.0
    %2861 = vmatpush1.msra.mxu0 0.0
    %2862 = vmatprep.subr.mxu0 0.0
    %2863 = vmatpush1.msra.mxu0 0.0
    %2864 = vmatprep.subr.mxu0 0.0
    %2865 = vmatpush1.msra.mxu0 0.0
    %2866 = vmatprep.subr.mxu0 0.0
    %2867 = vmatpush1.msra.mxu0 0.0
    %2868 = vmatprep.subr.mxu0 0.0
    %2869 = vmatpush1.msra.mxu0 0.0
    %2870 = vmatprep.subr.mxu0 0.0
    %2871 = vmatpush1.msra.mxu0 0.0
    %2872 = vmatprep.subr.mxu0 0.0
    %2873 = vmatpush1.msra.mxu0 0.0
    %2874 = vmatprep.subr.mxu0 0.0
    %2875 = vmatpush1.msra.mxu0 0.0
    %2876 = vmatprep.subr.mxu0 0.0
    %2877 = vmatpush1.msra.mxu0 0.0
    %2878 = vmatprep.subr.mxu0 0.0
    %2879 = vmatpush1.msra.mxu0 0.0
    %2880 = vmatprep.subr.mxu0 0.0
    %2881 = vmatpush1.msra.mxu0 0.0
    %2882 = vmatprep.subr.mxu0 0.0
    %2883 = vmatpush1.msra.mxu0 0.0
    %2884 = vmatprep.subr.mxu0 0.0
    %2885 = vmatpush1.msra.mxu0 0.0
    %2886 = vmatprep.subr.mxu0 0.0
    %2887 = vmatpush1.msra.mxu0 0.0
    %2888 = vmatprep.subr.mxu0 0.0
    %2889 = vmatpush1.msra.mxu0 0.0
    %2890 = vmatprep.subr.mxu0 0.0
    %2891 = vmatpush1.msra.mxu0 0.0
    %2892 = vmatprep.subr.mxu0 0.0
    %2893 = vmatpush1.msra.mxu0 0.0
    %2894 = vmatprep.subr.mxu0 0.0
    %2895 = vmatpush1.msra.mxu0 0.0
    %2896 = vmatprep.subr.mxu0 0.0
    %2897 = vmatpush1.msra.mxu0 0.0
    %2898 = vmatprep.subr.mxu0 0.0
    %2899 = vmatpush1.msra.mxu0 0.0
    %2900 = vmatprep.subr.mxu0 0.0
    %2901 = vmatpush1.msra.mxu0 0.0
    %2902 = vmatprep.subr.mxu0 0.0
    %2903 = vmatpush1.msra.mxu0 0.0
    %2904 = vmatprep.subr.mxu0 0.0
    %2905 = vmatpush1.msra.mxu0 0.0
    %2906 = vmatprep.mubr.f32.mxu0 0.0
    %2907 = vmatmul.mubr.f32.gmra.mrb[0].mxu0 %v2747
    %v2908 = vpop.f32.mrb[0].mxu0
    %v2909 = vadd.f32 0.0, %v2908
    %v2910 = vpop.f32.mrb[0].mxu0
    %2911 = vmatprep.mubr.f32.mxu0 0.0
    %2912 = vmatmul.mubr.f32.gmra.mrb[0].mxu0 %v2750
    %v2913 = vpop.f32.mrb[0].mxu0
    %v2914 = vadd.f32 0.0, %v2913
    %v2915 = vpop.f32.mrb[0].mxu0
    %2916 = vmatprep.mubr.f32.mxu0 0.0
    %2917 = vmatmul.mubr.f32.gmra.mrb[0].mxu0 %v2753
    %v2918 = vpop.f32.mrb[0].mxu0
    %v2919 = vadd.f32 0.0, %v2918
    %v2920 = vpop.f32.mrb[0].mxu0
    %2921 = vmatprep.mubr.f32.mxu0 0.0
    %2922 = vmatmul.mubr.f32.gmra.mrb[0].mxu0 %v2756
    %v2923 = vpop.f32.mrb[0].mxu0
    %v2924 = vadd.f32 0.0, %v2923
    %v2925 = vpop.f32.mrb[0].mxu0
    %2926 = vmatprep.mubr.f32.mxu0 0.0
    %2927 = vmatmul.mubr.f32.gmra.mrb[0].mxu0 %v2759
    %v2928 = vpop.f32.mrb[0].mxu0
    %v2929 = vadd.f32 0.0, %v2928
    %v2930 = vpop.f32.mrb[0].mxu0
    %2931 = vmatprep.mubr.f32.mxu0 0.0
    %2932 = vmatmul.mubr.f32.gmra.mrb[0].mxu0 %v2762
    %v2933 = vpop.f32.mrb[0].mxu0
    %v2934 = vadd.f32 0.0, %v2933
    %v2935 = vpop.f32.mrb[0].mxu0
    %2936 = vmatprep.mubr.f32.mxu0 0.0
    %2937 = vmatmul.mubr.f32.gmra.mrb[0].mxu0 %v2765
    %v2938 = vpop.f32.mrb[0].mxu0
    %v2939 = vadd.f32 0.0, %v2938
    %v2940 = vpop.f32.mrb[0].mxu0
    %2941 = vmatprep.mubr.f32.mxu0 0.0
    %2942 = vmatmul.mubr.f32.gmra.mrb[0].mxu0 %v2768
    %v2943 = vpop.f32.mrb[0].mxu0
    %v2944 = vadd.f32 0.0, %v2943
    %v2945 = vpop.f32.mrb[0].mxu0
    %2946 = vmatprep.mubr.f32.mxu0 0.0
    %2947 = vmatmul.mubr.f32.gmra.mrb[0].mxu0 %v2771
    %v2948 = vpop.f32.mrb[0].mxu0
    %v2949 = vadd.f32 0.0, %v2948
    %v2950 = vpop.f32.mrb[0].mxu0
    %2951 = vmatprep.mubr.f32.mxu0 0.0
    %2952 = vmatmul.mubr.f32.gmra.mrb[0].mxu0 %v2774
    %v2953 = vpop.f32.mrb[0].mxu0
    %v2954 = vadd.f32 0.0, %v2953
    %v2955 = vpop.f32.mrb[0].mxu0
    %2956 = vmatprep.mubr.f32.mxu0 0.0
    %2957 = vmatmul.mubr.f32.gmra.mrb[0].mxu0 %v2777
    %v2958 = vpop.f32.mrb[0].mxu0
    %v2959 = vadd.f32 0.0, %v2958
    %v2960 = vpop.f32.mrb[0].mxu0
    %2961 = vmatprep.mubr.f32.mxu0 0.0
    %2962 = vmatmul.mubr.f32.gmra.mrb[0].mxu0 %v2780
    %v2963 = vpop.f32.mrb[0].mxu0
    %v2964 = vadd.f32 0.0, %v2963
    %v2965 = vpop.f32.mrb[0].mxu0
    %2966 = vmatprep.mubr.f32.mxu0 0.0
    %2967 = vmatmul.mubr.f32.gmra.mrb[0].mxu0 %v2783
    %v2968 = vpop.f32.mrb[0].mxu0
    %v2969 = vadd.f32 0.0, %v2968
    %v2970 = vpop.f32.mrb[0].mxu0
    %2971 = vmatprep.mubr.f32.mxu0 0.0
    %2972 = vmatmul.mubr.f32.gmra.mrb[0].mxu0 %v2786
    %v2973 = vpop.f32.mrb[0].mxu0
    %v2974 = vadd.f32 0.0, %v2973
    %v2975 = vpop.f32.mrb[0].mxu0
    %2976 = vmatprep.mubr.f32.mxu0 0.0
    %2977 = vmatmul.mubr.f32.gmra.mrb[0].mxu0 %v2789
    %v2978 = vpop.f32.mrb[0].mxu0
    %v2979 = vadd.f32 0.0, %v2978
    %v2980 = vpop.f32.mrb[0].mxu0
    %2981 = vmatprep.mubr.f32.mxu0 0.0
    %2982 = vmatmul.mubr.f32.gmra.mrb[0].mxu0 %v2792
    %v2983 = vpop.f32.mrb[0].mxu0
    %v2984 = vadd.f32 0.0, %v2983
    %v2985 = vpop.f32.mrb[0].mxu0
    %2986 = vmatprep.mubr.f32.mxu0 0.0
    %2987 = vmatmul.mubr.f32.gmra.mrb[0].mxu0 %v2795
    %v2988 = vpop.f32.mrb[0].mxu0
    %v2989 = vadd.f32 0.0, %v2988
    %v2990 = vpop.f32.mrb[0].mxu0
    %2991 = vmatprep.mubr.f32.mxu0 0.0
    %2992 = vmatmul.mubr.f32.gmra.mrb[0].mxu0 %v2798
    %v2993 = vpop.f32.mrb[0].mxu0
    %v2994 = vadd.f32 0.0, %v2993
    %v2995 = vpop.f32.mrb[0].mxu0
    %2996 = vmatprep.mubr.f32.mxu0 0.0
    %2997 = vmatmul.mubr.f32.gmra.mrb[0].mxu0 %v2801
    %v2998 = vpop.f32.mrb[0].mxu0
    %v2999 = vadd.f32 0.0, %v2998
    %v3000 = vpop.f32.mrb[0].mxu0
    %3001 = vmatprep.mubr.f32.mxu0 0.0
    %3002 = vmatmul.mubr.f32.gmra.mrb[0].mxu0 %v2804
    %v3003 = vpop.f32.mrb[0].mxu0
    %v3004 = vadd.f32 0.0, %v3003
    %v3005 = vpop.f32.mrb[0].mxu0
    %3006 = vmatprep.mubr.f32.mxu0 0.0
    %3007 = vmatmul.mubr.f32.gmra.mrb[0].mxu0 %v2807
    %v3008 = vpop.f32.mrb[0].mxu0
    %v3009 = vadd.f32 0.0, %v3008
    %v3010 = vpop.f32.mrb[0].mxu0
    %3011 = vmatprep.mubr.f32.mxu0 0.0
    %3012 = vmatmul.mubr.f32.gmra.mrb[0].mxu0 %v2810
    %v3013 = vpop.f32.mrb[0].mxu0
    %v3014 = vadd.f32 0.0, %v3013
    %v3015 = vpop.f32.mrb[0].mxu0
    %3016 = vmatprep.mubr.f32.mxu0 0.0
    %3017 = vmatmul.mubr.f32.gmra.mrb[0].mxu0 %v2813
    %v3018 = vpop.f32.mrb[0].mxu0
    %v3019 = vadd.f32 0.0, %v3018
    %v3020 = vpop.f32.mrb[0].mxu0
    %3021 = vmatprep.mubr.f32.mxu0 0.0
    %3022 = vmatmul.mubr.f32.gmra.mrb[0].mxu0 %v2816
    %v3023 = vpop.f32.mrb[0].mxu0
    %v3024 = vadd.f32 0.0, %v3023
    %v3025 = vpop.f32.mrb[0].mxu0
    %3026 = vmatprep.mubr.f32.mxu0 0.0
    %3027 = vmatmul.mubr.f32.gmra.mrb[0].mxu0 %v2819
    %v3028 = vpop.f32.mrb[0].mxu0
    %v3029 = vadd.f32 0.0, %v3028
    %v3030 = vpop.f32.mrb[0].mxu0
    %3031 = vmatprep.mubr.f32.mxu0 0.0
    %3032 = vmatmul.mubr.f32.gmra.mrb[0].mxu0 %v2822
    %v3033 = vpop.f32.mrb[0].mxu0
    %v3034 = vadd.f32 0.0, %v3033
    %v3035 = vpop.f32.mrb[0].mxu0
    %3036 = vmatprep.mubr.f32.mxu0 0.0
    %3037 = vmatmul.mubr.f32.gmra.mrb[0].mxu0 %v2825
    %v3038 = vpop.f32.mrb[0].mxu0
    %v3039 = vadd.f32 0.0, %v3038
    %v3040 = vpop.f32.mrb[0].mxu0
    %3041 = vmatprep.mubr.f32.mxu0 0.0
    %3042 = vmatmul.mubr.f32.gmra.mrb[0].mxu0 %v2828
    %v3043 = vpop.f32.mrb[0].mxu0
    %v3044 = vadd.f32 0.0, %v3043
    %v3045 = vpop.f32.mrb[0].mxu0
    %3046 = vmatprep.mubr.f32.mxu0 0.0
    %3047 = vmatmul.mubr.f32.gmra.mrb[0].mxu0 %v2831
    %v3048 = vpop.f32.mrb[0].mxu0
    %v3049 = vadd.f32 0.0, %v3048
    %v3050 = vpop.f32.mrb[0].mxu0
    %3051 = vmatprep.mubr.f32.mxu0 0.0
    %3052 = vmatmul.mubr.f32.gmra.mrb[0].mxu0 %v2834
    %v3053 = vpop.f32.mrb[0].mxu0
    %v3054 = vadd.f32 0.0, %v3053
    %v3055 = vpop.f32.mrb[0].mxu0
    %3056 = vmatprep.mubr.f32.mxu0 0.0
    %3057 = vmatmul.mubr.f32.gmra.mrb[0].mxu0 %v2837
    %v3058 = vpop.f32.mrb[0].mxu0
    %v3059 = vadd.f32 0.0, %v3058
    %v3060 = vpop.f32.mrb[0].mxu0
    %3061 = vmatprep.mubr.f32.mxu0 0.0
    %3062 = vmatmul.mubr.f32.gmra.mrb[0].mxu0 %v2840
    %v3063 = vpop.f32.mrb[0].mxu0
    %v3064 = vadd.f32 0.0, %v3063
    %v3065 = vpop.f32.mrb[0].mxu0
    %3066 = vdwg.mxu0
    %v3067 = vadd.f32 %v2580, %v2909
    %v3068 = vadd.f32 %v2585, %v2914
    %v3069 = vadd.f32 %v2590, %v2919
    %v3070 = vadd.f32 %v2595, %v2924
    %v3071 = vadd.f32 %v2600, %v2929
    %v3072 = vadd.f32 %v2605, %v2934
    %v3073 = vadd.f32 %v2610, %v2939
    %v3074 = vadd.f32 %v2615, %v2944
    %v3075 = vadd.f32 %v2620, %v2949
    %v3076 = vadd.f32 %v2625, %v2954
    %v3077 = vadd.f32 %v2630, %v2959
    %v3078 = vadd.f32 %v2635, %v2964
    %v3079 = vadd.f32 %v2640, %v2969
    %v3080 = vadd.f32 %v2645, %v2974
    %v3081 = vadd.f32 %v2650, %v2979
    %v3082 = vadd.f32 %v2655, %v2984
    %v3083 = vadd.f32 %v2660, %v2989
    %v3084 = vadd.f32 %v2665, %v2994
    %v3085 = vadd.f32 %v2670, %v2999
    %v3086 = vadd.f32 %v2675, %v3004
    %v3087 = vadd.f32 %v2680, %v3009
    %v3088 = vadd.f32 %v2685, %v3014
    %v3089 = vadd.f32 %v2690, %v3019
    %v3090 = vadd.f32 %v2695, %v3024
    %v3091 = vadd.f32 %v2700, %v3029
    %v3092 = vadd.f32 %v2705, %v3034
    %v3093 = vadd.f32 %v2710, %v3039
    %v3094 = vadd.f32 %v2715, %v3044
    %v3095 = vadd.f32 %v2720, %v3049
    %v3096 = vadd.f32 %v2725, %v3054
    %v3097 = vadd.f32 %v2730, %v3059
    %v3098 = vadd.f32 %v2735, %v3064
    %vm3099 = vcmp.lt.s32.totalorder %v1375, 0
    %v3100 = vsub.s32 0, %v1375
    %v3101 = vsel %vm3099, %v3100, %v1375
    %v3102 = vshrl.u32 %v3101, 6
    %v3103 = vand.u32 %v3101, 63
    %v3104 = vsub.s32 0, %v3103
    %v3105 = vsel %vm3099, %v3104, %v3103
    %vm3106 = vcmp.lt.s32.totalorder %v1376, 0
    %v3107 = vsub.s32 0, %v1376
    %v3108 = vsel %vm3106, %v3107, %v1376
    %v3109 = vshrl.u32 %v3108, 6
    %v3110 = vand.u32 %v3108, 63
    %v3111 = vsub.s32 0, %v3110
    %v3112 = vsel %vm3106, %v3111, %v3110
    %vm3113 = vcmp.lt.s32.totalorder %v1377, 0
    %v3114 = vsub.s32 0, %v1377
    %v3115 = vsel %vm3113, %v3114, %v1377
    %v3116 = vshrl.u32 %v3115, 6
    %v3117 = vand.u32 %v3115, 63
    %v3118 = vsub.s32 0, %v3117
    %v3119 = vsel %vm3113, %v3118, %v3117
    %vm3120 = vcmp.lt.s32.totalorder %v1378, 0
    %v3121 = vsub.s32 0, %v1378
    %v3122 = vsel %vm3120, %v3121, %v1378
    %v3123 = vshrl.u32 %v3122, 6
    %v3124 = vand.u32 %v3122, 63
    %v3125 = vsub.s32 0, %v3124
    %v3126 = vsel %vm3120, %v3125, %v3124
    %vm3127 = vcmp.lt.s32.totalorder %v1379, 0
    %v3128 = vsub.s32 0, %v1379
    %v3129 = vsel %vm3127, %v3128, %v1379
    %v3130 = vshrl.u32 %v3129, 6
    %v3131 = vand.u32 %v3129, 63
    %v3132 = vsub.s32 0, %v3131
    %v3133 = vsel %vm3127, %v3132, %v3131
    %vm3134 = vcmp.lt.s32.totalorder %v1380, 0
    %v3135 = vsub.s32 0, %v1380
    %v3136 = vsel %vm3134, %v3135, %v1380
    %v3137 = vshrl.u32 %v3136, 6
    %v3138 = vand.u32 %v3136, 63
    %v3139 = vsub.s32 0, %v3138
    %v3140 = vsel %vm3134, %v3139, %v3138
    %vm3141 = vcmp.lt.s32.totalorder %v1381, 0
    %v3142 = vsub.s32 0, %v1381
    %v3143 = vsel %vm3141, %v3142, %v1381
    %v3144 = vshrl.u32 %v3143, 6
    %v3145 = vand.u32 %v3143, 63
    %v3146 = vsub.s32 0, %v3145
    %v3147 = vsel %vm3141, %v3146, %v3145
    %vm3148 = vcmp.lt.s32.totalorder %v1382, 0
    %v3149 = vsub.s32 0, %v1382
    %v3150 = vsel %vm3148, %v3149, %v1382
    %v3151 = vshrl.u32 %v3150, 6
    %v3152 = vand.u32 %v3150, 63
    %v3153 = vsub.s32 0, %v3152
    %v3154 = vsel %vm3148, %v3153, %v3152
    %vm3155 = vcmp.lt.s32.totalorder %v1383, 0
    %v3156 = vsub.s32 0, %v1383
    %v3157 = vsel %vm3155, %v3156, %v1383
    %v3158 = vshrl.u32 %v3157, 6
    %v3159 = vand.u32 %v3157, 63
    %v3160 = vsub.s32 0, %v3159
    %v3161 = vsel %vm3155, %v3160, %v3159
    %vm3162 = vcmp.lt.s32.totalorder %v1384, 0
    %v3163 = vsub.s32 0, %v1384
    %v3164 = vsel %vm3162, %v3163, %v1384
    %v3165 = vshrl.u32 %v3164, 6
    %v3166 = vand.u32 %v3164, 63
    %v3167 = vsub.s32 0, %v3166
    %v3168 = vsel %vm3162, %v3167, %v3166
    %vm3169 = vcmp.lt.s32.totalorder %v1385, 0
    %v3170 = vsub.s32 0, %v1385
    %v3171 = vsel %vm3169, %v3170, %v1385
    %v3172 = vshrl.u32 %v3171, 6
    %v3173 = vand.u32 %v3171, 63
    %v3174 = vsub.s32 0, %v3173
    %v3175 = vsel %vm3169, %v3174, %v3173
    %vm3176 = vcmp.lt.s32.totalorder %v1386, 0
    %v3177 = vsub.s32 0, %v1386
    %v3178 = vsel %vm3176, %v3177, %v1386
    %v3179 = vshrl.u32 %v3178, 6
    %v3180 = vand.u32 %v3178, 63
    %v3181 = vsub.s32 0, %v3180
    %v3182 = vsel %vm3176, %v3181, %v3180
    %vm3183 = vcmp.lt.s32.totalorder %v1387, 0
    %v3184 = vsub.s32 0, %v1387
    %v3185 = vsel %vm3183, %v3184, %v1387
    %v3186 = vshrl.u32 %v3185, 6
    %v3187 = vand.u32 %v3185, 63
    %v3188 = vsub.s32 0, %v3187
    %v3189 = vsel %vm3183, %v3188, %v3187
    %vm3190 = vcmp.lt.s32.totalorder %v1388, 0
    %v3191 = vsub.s32 0, %v1388
    %v3192 = vsel %vm3190, %v3191, %v1388
    %v3193 = vshrl.u32 %v3192, 6
    %v3194 = vand.u32 %v3192, 63
    %v3195 = vsub.s32 0, %v3194
    %v3196 = vsel %vm3190, %v3195, %v3194
    %vm3197 = vcmp.lt.s32.totalorder %v1389, 0
    %v3198 = vsub.s32 0, %v1389
    %v3199 = vsel %vm3197, %v3198, %v1389
    %v3200 = vshrl.u32 %v3199, 6
    %v3201 = vand.u32 %v3199, 63
    %v3202 = vsub.s32 0, %v3201
    %v3203 = vsel %vm3197, %v3202, %v3201
    %vm3204 = vcmp.lt.s32.totalorder %v1390, 0
    %v3205 = vsub.s32 0, %v1390
    %v3206 = vsel %vm3204, %v3205, %v1390
    %v3207 = vshrl.u32 %v3206, 6
    %v3208 = vand.u32 %v3206, 63
    %v3209 = vsub.s32 0, %v3208
    %v3210 = vsel %vm3204, %v3209, %v3208
    %vm3211 = vcmp.ne.s32.totalorder %v3105, 0
    %vm3212 = vcmp.ne.s32.totalorder %v3112, 0
    %vm3213 = vcmp.ne.s32.totalorder %v3119, 0
    %vm3214 = vcmp.ne.s32.totalorder %v3126, 0
    %vm3215 = vcmp.ne.s32.totalorder %v3133, 0
    %vm3216 = vcmp.ne.s32.totalorder %v3140, 0
    %vm3217 = vcmp.ne.s32.totalorder %v3147, 0
    %vm3218 = vcmp.ne.s32.totalorder %v3154, 0
    %vm3219 = vcmp.ne.s32.totalorder %v3161, 0
    %vm3220 = vcmp.ne.s32.totalorder %v3168, 0
    %vm3221 = vcmp.ne.s32.totalorder %v3175, 0
    %vm3222 = vcmp.ne.s32.totalorder %v3182, 0
    %vm3223 = vcmp.ne.s32.totalorder %v3189, 0
    %vm3224 = vcmp.ne.s32.totalorder %v3196, 0
    %vm3225 = vcmp.ne.s32.totalorder %v3203, 0
    %vm3226 = vcmp.ne.s32.totalorder %v3210, 0
    %vm3227 = vcmp.lt.s32.totalorder %v3105, 0
    %vm3228 = vcmp.lt.s32.totalorder %v3112, 0
    %vm3229 = vcmp.lt.s32.totalorder %v3119, 0
    %vm3230 = vcmp.lt.s32.totalorder %v3126, 0
    %vm3231 = vcmp.lt.s32.totalorder %v3133, 0
    %vm3232 = vcmp.lt.s32.totalorder %v3140, 0
    %vm3233 = vcmp.lt.s32.totalorder %v3147, 0
    %vm3234 = vcmp.lt.s32.totalorder %v3154, 0
    %vm3235 = vcmp.lt.s32.totalorder %v3161, 0
    %vm3236 = vcmp.lt.s32.totalorder %v3168, 0
    %vm3237 = vcmp.lt.s32.totalorder %v3175, 0
    %vm3238 = vcmp.lt.s32.totalorder %v3182, 0
    %vm3239 = vcmp.lt.s32.totalorder %v3189, 0
    %vm3240 = vcmp.lt.s32.totalorder %v3196, 0
    %vm3241 = vcmp.lt.s32.totalorder %v3203, 0
    %vm3242 = vcmp.lt.s32.totalorder %v3210, 0
    %vm3243 = vmand %vm3227, %vm3211
    %vm3244 = vmand %vm3228, %vm3212
    %vm3245 = vmand %vm3229, %vm3213
    %vm3246 = vmand %vm3230, %vm3214
    %vm3247 = vmand %vm3231, %vm3215
    %vm3248 = vmand %vm3232, %vm3216
    %vm3249 = vmand %vm3233, %vm3217
    %vm3250 = vmand %vm3234, %vm3218
    %vm3251 = vmand %vm3235, %vm3219
    %vm3252 = vmand %vm3236, %vm3220
    %vm3253 = vmand %vm3237, %vm3221
    %vm3254 = vmand %vm3238, %vm3222
    %vm3255 = vmand %vm3239, %vm3223
    %vm3256 = vmand %vm3240, %vm3224
    %vm3257 = vmand %vm3241, %vm3225
    %vm3258 = vmand %vm3242, %vm3226
    %v3259 = vadd.s32 %v3105, 64
    %v3260 = vadd.s32 %v3112, 64
    %v3261 = vadd.s32 %v3119, 64
    %v3262 = vadd.s32 %v3126, 64
    %v3263 = vadd.s32 %v3133, 64
    %v3264 = vadd.s32 %v3140, 64
    %v3265 = vadd.s32 %v3147, 64
    %v3266 = vadd.s32 %v3154, 64
    %v3267 = vadd.s32 %v3161, 64
    %v3268 = vadd.s32 %v3168, 64
    %v3269 = vadd.s32 %v3175, 64
    %v3270 = vadd.s32 %v3182, 64
    %v3271 = vadd.s32 %v3189, 64
    %v3272 = vadd.s32 %v3196, 64
    %v3273 = vadd.s32 %v3203, 64
    %v3274 = vadd.s32 %v3210, 64
    %v3275 = vsel %vm3243, %v3259, %v3105
    %v3276 = vsel %vm3244, %v3260, %v3112
    %v3277 = vsel %vm3245, %v3261, %v3119
    %v3278 = vsel %vm3246, %v3262, %v3126
    %v3279 = vsel %vm3247, %v3263, %v3133
    %v3280 = vsel %vm3248, %v3264, %v3140
    %v3281 = vsel %vm3249, %v3265, %v3147
    %v3282 = vsel %vm3250, %v3266, %v3154
    %v3283 = vsel %vm3251, %v3267, %v3161
    %v3284 = vsel %vm3252, %v3268, %v3168
    %v3285 = vsel %vm3253, %v3269, %v3175
    %v3286 = vsel %vm3254, %v3270, %v3182
    %v3287 = vsel %vm3255, %v3271, %v3189
    %v3288 = vsel %vm3256, %v3272, %v3196
    %v3289 = vsel %vm3257, %v3273, %v3203
    %v3290 = vsel %vm3258, %v3274, %v3210
    %vm3291 = vcmp.ge.s32.totalorder %v3275, 8
    %vm3292 = vcmp.ge.s32.totalorder %v3276, 8
    %vm3293 = vcmp.ge.s32.totalorder %v3277, 8
    %vm3294 = vcmp.ge.s32.totalorder %v3278, 8
    %vm3295 = vcmp.ge.s32.totalorder %v3279, 8
    %vm3296 = vcmp.ge.s32.totalorder %v3280, 8
    %vm3297 = vcmp.ge.s32.totalorder %v3281, 8
    %vm3298 = vcmp.ge.s32.totalorder %v3282, 8
    %vm3299 = vcmp.ge.s32.totalorder %v3283, 8
    %vm3300 = vcmp.ge.s32.totalorder %v3284, 8
    %vm3301 = vcmp.ge.s32.totalorder %v3285, 8
    %vm3302 = vcmp.ge.s32.totalorder %v3286, 8
    %vm3303 = vcmp.ge.s32.totalorder %v3287, 8
    %vm3304 = vcmp.ge.s32.totalorder %v3288, 8
    %vm3305 = vcmp.ge.s32.totalorder %v3289, 8
    %vm3306 = vcmp.ge.s32.totalorder %v3290, 8
    %v3307 = vsel %vm3291, 1, 0
    %v3308 = vsel %vm3292, 1, 0
    %v3309 = vsel %vm3293, 1, 0
    %v3310 = vsel %vm3294, 1, 0
    %v3311 = vsel %vm3295, 1, 0
    %v3312 = vsel %vm3296, 1, 0
    %v3313 = vsel %vm3297, 1, 0
    %v3314 = vsel %vm3298, 1, 0
    %v3315 = vsel %vm3299, 1, 0
    %v3316 = vsel %vm3300, 1, 0
    %v3317 = vsel %vm3301, 1, 0
    %v3318 = vsel %vm3302, 1, 0
    %v3319 = vsel %vm3303, 1, 0
    %v3320 = vsel %vm3304, 1, 0
    %v3321 = vsel %vm3305, 1, 0
    %v3322 = vsel %vm3306, 1, 0
    %vm3323 = vcmp.eq.s32.totalorder %v3307, 1
    %vm3324 = vcmp.eq.s32.totalorder %v3308, 1
    %vm3325 = vcmp.eq.s32.totalorder %v3309, 1
    %vm3326 = vcmp.eq.s32.totalorder %v3310, 1
    %vm3327 = vcmp.eq.s32.totalorder %v3311, 1
    %vm3328 = vcmp.eq.s32.totalorder %v3312, 1
    %vm3329 = vcmp.eq.s32.totalorder %v3313, 1
    %vm3330 = vcmp.eq.s32.totalorder %v3314, 1
    %vm3331 = vcmp.eq.s32.totalorder %v3315, 1
    %vm3332 = vcmp.eq.s32.totalorder %v3316, 1
    %vm3333 = vcmp.eq.s32.totalorder %v3317, 1
    %vm3334 = vcmp.eq.s32.totalorder %v3318, 1
    %vm3335 = vcmp.eq.s32.totalorder %v3319, 1
    %vm3336 = vcmp.eq.s32.totalorder %v3320, 1
    %vm3337 = vcmp.eq.s32.totalorder %v3321, 1
    %vm3338 = vcmp.eq.s32.totalorder %v3322, 1
    %v3339 = vsel %vm3323, %v3098, 0.0
    %v3340 = vsel %vm3324, %v3083, 0.0
    %v3341 = vsel %vm3325, %v3084, 0.0
    %v3342 = vsel %vm3326, %v3085, 0.0
    %v3343 = vsel %vm3327, %v3086, 0.0
    %v3344 = vsel %vm3328, %v3087, 0.0
    %v3345 = vsel %vm3329, %v3088, 0.0
    %v3346 = vsel %vm3330, %v3089, 0.0
    %v3347 = vsel %vm3331, %v3090, 0.0
    %v3348 = vsel %vm3332, %v3091, 0.0
    %v3349 = vsel %vm3333, %v3092, 0.0
    %v3350 = vsel %vm3334, %v3093, 0.0
    %v3351 = vsel %vm3335, %v3094, 0.0
    %v3352 = vsel %vm3336, %v3095, 0.0
    %v3353 = vsel %vm3337, %v3096, 0.0
    %v3354 = vsel %vm3338, %v3097, 0.0
    %v3355 = vld [vmem:[%s7] sm:$0xff]
    %v3356 = vld [vmem:[%s7 + $0x8] sm:$0xff]
    %v3357 = vld [vmem:[%s7 + $0x10] sm:$0xff]
    %v3358 = vld [vmem:[%s7 + $0x18] sm:$0xff]
    %v3359 = vld [vmem:[%s7 + $0x20] sm:$0xff]
    %v3360 = vld [vmem:[%s7 + $0x28] sm:$0xff]
    %v3361 = vld [vmem:[%s7 + $0x30] sm:$0xff]
    %v3362 = vld [vmem:[%s7 + $0x38] sm:$0xff]
    %v3363 = vld [vmem:[%s8] sm:$0xff]
    %v3364 = vld [vmem:[%s8 + $0x8] sm:$0xff]
    %v3365 = vld [vmem:[%s8 + $0x10] sm:$0xff]
    %v3366 = vld [vmem:[%s8 + $0x18] sm:$0xff]
    %v3367 = vld [vmem:[%s8 + $0x20] sm:$0xff]
    %v3368 = vld [vmem:[%s8 + $0x28] sm:$0xff]
    %v3369 = vld [vmem:[%s8 + $0x30] sm:$0xff]
    %v3370 = vld [vmem:[%s8 + $0x38] sm:$0xff]
    %v3372 = vsel %vm771, %v3067, 0
    %v3375 = vsel %vm771, %v3068, 0
    %v3378 = vsel %vm771, %v3069, 0
    %v3381 = vsel %vm771, %v3070, 0
    %v3384 = vsel %vm771, %v3071, 0
    %v3387 = vsel %vm771, %v3072, 0
    %v3390 = vsel %vm771, %v3073, 0
    %v3393 = vsel %vm771, %v3074, 0
    %v3396 = vsel %vm771, %v3075, 0
    %v3399 = vsel %vm771, %v3076, 0
    %v3402 = vsel %vm771, %v3077, 0
    %v3405 = vsel %vm771, %v3078, 0
    %v3408 = vsel %vm771, %v3079, 0
    %v3411 = vsel %vm771, %v3080, 0
    %v3414 = vsel %vm771, %v3081, 0
    %v3417 = vsel %vm771, %v3082, 0
    %3419 = vmatprep.subr.mxu0 0.0
    %3420 = vmatpush1.msra.mxu0 %v3363
    %3421 = vmatprep.subr.mxu0 0.0
    %3422 = vmatpush1.msra.mxu0 %v3364
    %3423 = vmatprep.subr.mxu0 0.0
    %3424 = vmatpush1.msra.mxu0 %v3365
    %3425 = vmatprep.subr.mxu0 0.0
    %3426 = vmatpush1.msra.mxu0 %v3366
    %3427 = vmatprep.subr.mxu0 0.0
    %3428 = vmatpush1.msra.mxu0 %v3367
    %3429 = vmatprep.subr.mxu0 0.0
    %3430 = vmatpush1.msra.mxu0 %v3368
    %3431 = vmatprep.subr.mxu0 0.0
    %3432 = vmatpush1.msra.mxu0 %v3369
    %3433 = vmatprep.subr.mxu0 0.0
    %3434 = vmatpush1.msra.mxu0 %v3370
    %3435 = vmatprep.subr.mxu0 0.0
    %3436 = vmatpush1.msra.mxu0 0.0
    %3437 = vmatprep.subr.mxu0 0.0
    %3438 = vmatpush1.msra.mxu0 0.0
    %3439 = vmatprep.subr.mxu0 0.0
    %3440 = vmatpush1.msra.mxu0 0.0
    %3441 = vmatprep.subr.mxu0 0.0
    %3442 = vmatpush1.msra.mxu0 0.0
    %3443 = vmatprep.subr.mxu0 0.0
    %3444 = vmatpush1.msra.mxu0 0.0
    %3445 = vmatprep.subr.mxu0 0.0
    %3446 = vmatpush1.msra.mxu0 0.0
    %3447 = vmatprep.subr.mxu0 0.0
    %3448 = vmatpush1.msra.mxu0 0.0
    %3449 = vmatprep.subr.mxu0 0.0
    %3450 = vmatpush1.msra.mxu0 0.0
    %3451 = vmatprep.subr.mxu0 0.0
    %3452 = vmatpush1.msra.mxu0 0.0
    %3453 = vmatprep.subr.mxu0 0.0
    %3454 = vmatpush1.msra.mxu0 0.0
    %3455 = vmatprep.subr.mxu0 0.0
    %3456 = vmatpush1.msra.mxu0 0.0
    %3457 = vmatprep.subr.mxu0 0.0
    %3458 = vmatpush1.msra.mxu0 0.0
    %3459 = vmatprep.subr.mxu0 0.0
    %3460 = vmatpush1.msra.mxu0 0.0
    %3461 = vmatprep.subr.mxu0 0.0
    %3462 = vmatpush1.msra.mxu0 0.0
    %3463 = vmatprep.subr.mxu0 0.0
    %3464 = vmatpush1.msra.mxu0 0.0
    %3465 = vmatprep.subr.mxu0 0.0
    %3466 = vmatpush1.msra.mxu0 0.0
    %3467 = vmatprep.subr.mxu0 0.0
    %3468 = vmatpush1.msra.mxu0 0.0
    %3469 = vmatprep.subr.mxu0 0.0
    %3470 = vmatpush1.msra.mxu0 0.0
    %3471 = vmatprep.subr.mxu0 0.0
    %3472 = vmatpush1.msra.mxu0 0.0
    %3473 = vmatprep.subr.mxu0 0.0
    %3474 = vmatpush1.msra.mxu0 0.0
    %3475 = vmatprep.subr.mxu0 0.0
    %3476 = vmatpush1.msra.mxu0 0.0
    %3477 = vmatprep.subr.mxu0 0.0
    %3478 = vmatpush1.msra.mxu0 0.0
    %3479 = vmatprep.subr.mxu0 0.0
    %3480 = vmatpush1.msra.mxu0 0.0
    %3481 = vmatprep.subr.mxu0 0.0
    %3482 = vmatpush1.msra.mxu0 0.0
    %3483 = vmatprep.mubr.f32.mxu0 0.0
    %3484 = vmatmul.mubr.f32.gmra.mrb[0].mxu0 %v3372
    %v3485 = vpop.f32.mrb[0].mxu0
    %v3486 = vadd.f32 0.0, %v3485
    %v3487 = vpop.f32.mrb[0].mxu0
    %3488 = vmatprep.mubr.f32.mxu0 0.0
    %3489 = vmatmul.mubr.f32.gmra.mrb[0].mxu0 %v3375
    %v3490 = vpop.f32.mrb[0].mxu0
    %v3491 = vadd.f32 0.0, %v3490
    %v3492 = vpop.f32.mrb[0].mxu0
    %3493 = vmatprep.mubr.f32.mxu0 0.0
    %3494 = vmatmul.mubr.f32.gmra.mrb[0].mxu0 %v3378
    %v3495 = vpop.f32.mrb[0].mxu0
    %v3496 = vadd.f32 0.0, %v3495
    %v3497 = vpop.f32.mrb[0].mxu0
    %3498 = vmatprep.mubr.f32.mxu0 0.0
    %3499 = vmatmul.mubr.f32.gmra.mrb[0].mxu0 %v3381
    %v3500 = vpop.f32.mrb[0].mxu0
    %v3501 = vadd.f32 0.0, %v3500
    %v3502 = vpop.f32.mrb[0].mxu0
    %3503 = vmatprep.mubr.f32.mxu0 0.0
    %3504 = vmatmul.mubr.f32.gmra.mrb[0].mxu0 %v3384
    %v3505 = vpop.f32.mrb[0].mxu0
    %v3506 = vadd.f32 0.0, %v3505
    %v3507 = vpop.f32.mrb[0].mxu0
    %3508 = vmatprep.mubr.f32.mxu0 0.0
    %3509 = vmatmul.mubr.f32.gmra.mrb[0].mxu0 %v3387
    %v3510 = vpop.f32.mrb[0].mxu0
    %v3511 = vadd.f32 0.0, %v3510
    %v3512 = vpop.f32.mrb[0].mxu0
    %3513 = vmatprep.mubr.f32.mxu0 0.0
    %3514 = vmatmul.mubr.f32.gmra.mrb[0].mxu0 %v3390
    %v3515 = vpop.f32.mrb[0].mxu0
    %v3516 = vadd.f32 0.0, %v3515
    %v3517 = vpop.f32.mrb[0].mxu0
    %3518 = vmatprep.mubr.f32.mxu0 0.0
    %3519 = vmatmul.mubr.f32.gmra.mrb[0].mxu0 %v3393
    %v3520 = vpop.f32.mrb[0].mxu0
    %v3521 = vadd.f32 0.0, %v3520
    %v3522 = vpop.f32.mrb[0].mxu0
    %3523 = vmatprep.mubr.f32.mxu0 0.0
    %3524 = vmatmul.mubr.f32.gmra.mrb[0].mxu0 %v3396
    %v3525 = vpop.f32.mrb[0].mxu0
    %v3526 = vadd.f32 0.0, %v3525
    %v3527 = vpop.f32.mrb[0].mxu0
    %3528 = vmatprep.mubr.f32.mxu0 0.0
    %3529 = vmatmul.mubr.f32.gmra.mrb[0].mxu0 %v3399
    %v3530 = vpop.f32.mrb[0].mxu0
    %v3531 = vadd.f32 0.0, %v3530
    %v3532 = vpop.f32.mrb[0].mxu0
    %3533 = vmatprep.mubr.f32.mxu0 0.0
    %3534 = vmatmul.mubr.f32.gmra.mrb[0].mxu0 %v3402
    %v3535 = vpop.f32.mrb[0].mxu0
    %v3536 = vadd.f32 0.0, %v3535
    %v3537 = vpop.f32.mrb[0].mxu0
    %3538 = vmatprep.mubr.f32.mxu0 0.0
    %3539 = vmatmul.mubr.f32.gmra.mrb[0].mxu0 %v3405
    %v3540 = vpop.f32.mrb[0].mxu0
    %v3541 = vadd.f32 0.0, %v3540
    %v3542 = vpop.f32.mrb[0].mxu0
    %3543 = vmatprep.mubr.f32.mxu0 0.0
    %3544 = vmatmul.mubr.f32.gmra.mrb[0].mxu0 %v3408
    %v3545 = vpop.f32.mrb[0].mxu0
    %v3546 = vadd.f32 0.0, %v3545
    %v3547 = vpop.f32.mrb[0].mxu0
    %3548 = vmatprep.mubr.f32.mxu0 0.0
    %3549 = vmatmul.mubr.f32.gmra.mrb[0].mxu0 %v3411
    %v3550 = vpop.f32.mrb[0].mxu0
    %v3551 = vadd.f32 0.0, %v3550
    %v3552 = vpop.f32.mrb[0].mxu0
    %3553 = vmatprep.mubr.f32.mxu0 0.0
    %3554 = vmatmul.mubr.f32.gmra.mrb[0].mxu0 %v3414
    %v3555 = vpop.f32.mrb[0].mxu0
    %v3556 = vadd.f32 0.0, %v3555
    %v3557 = vpop.f32.mrb[0].mxu0
    %3558 = vmatprep.mubr.f32.mxu0 0.0
    %3559 = vmatmul.mubr.f32.gmra.mrb[0].mxu0 %v3417
    %v3560 = vpop.f32.mrb[0].mxu0
    %v3561 = vadd.f32 0.0, %v3560
    %v3562 = vpop.f32.mrb[0].mxu0
    %3563 = vdwg.mxu0
    %v3565 = vsel %vm771, %v3339, 0
    %v3568 = vsel %vm771, %v3340, 0
    %v3571 = vsel %vm771, %v3341, 0
    %v3574 = vsel %vm771, %v3342, 0
    %v3577 = vsel %vm771, %v3343, 0
    %v3580 = vsel %vm771, %v3344, 0
    %v3583 = vsel %vm771, %v3345, 0
    %v3586 = vsel %vm771, %v3346, 0
    %v3589 = vsel %vm771, %v3347, 0
    %v3592 = vsel %vm771, %v3348, 0
    %v3595 = vsel %vm771, %v3349, 0
    %v3598 = vsel %vm771, %v3350, 0
    %v3601 = vsel %vm771, %v3351, 0
    %v3604 = vsel %vm771, %v3352, 0
    %v3607 = vsel %vm771, %v3353, 0
    %v3610 = vsel %vm771, %v3354, 0
    %3612 = vmatprep.subr.mxu0 0.0
    %3613 = vmatpush1.msra.mxu0 %v3355
    %3614 = vmatprep.subr.mxu0 0.0
    %3615 = vmatpush1.msra.mxu0 %v3356
    %3616 = vmatprep.subr.mxu0 0.0
    %3617 = vmatpush1.msra.mxu0 %v3357
    %3618 = vmatprep.subr.mxu0 0.0
    %3619 = vmatpush1.msra.mxu0 %v3358
    %3620 = vmatprep.subr.mxu0 0.0
    %3621 = vmatpush1.msra.mxu0 %v3359
    %3622 = vmatprep.subr.mxu0 0.0
    %3623 = vmatpush1.msra.mxu0 %v3360
    %3624 = vmatprep.subr.mxu0 0.0
    %3625 = vmatpush1.msra.mxu0 %v3361
    %3626 = vmatprep.subr.mxu0 0.0
    %3627 = vmatpush1.msra.mxu0 %v3362
    %3628 = vmatprep.subr.mxu0 0.0
    %3629 = vmatpush1.msra.mxu0 0.0
    %3630 = vmatprep.subr.mxu0 0.0
    %3631 = vmatpush1.msra.mxu0 0.0
    %3632 = vmatprep.subr.mxu0 0.0
    %3633 = vmatpush1.msra.mxu0 0.0
    %3634 = vmatprep.subr.mxu0 0.0
    %3635 = vmatpush1.msra.mxu0 0.0
    %3636 = vmatprep.subr.mxu0 0.0
    %3637 = vmatpush1.msra.mxu0 0.0
    %3638 = vmatprep.subr.mxu0 0.0
    %3639 = vmatpush1.msra.mxu0 0.0
    %3640 = vmatprep.subr.mxu0 0.0
    %3641 = vmatpush1.msra.mxu0 0.0
    %3642 = vmatprep.subr.mxu0 0.0
    %3643 = vmatpush1.msra.mxu0 0.0
    %3644 = vmatprep.subr.mxu0 0.0
    %3645 = vmatpush1.msra.mxu0 0.0
    %3646 = vmatprep.subr.mxu0 0.0
    %3647 = vmatpush1.msra.mxu0 0.0
    %3648 = vmatprep.subr.mxu0 0.0
    %3649 = vmatpush1.msra.mxu0 0.0
    %3650 = vmatprep.subr.mxu0 0.0
    %3651 = vmatpush1.msra.mxu0 0.0
    %3652 = vmatprep.subr.mxu0 0.0
    %3653 = vmatpush1.msra.mxu0 0.0
    %3654 = vmatprep.subr.mxu0 0.0
    %3655 = vmatpush1.msra.mxu0 0.0
    %3656 = vmatprep.subr.mxu0 0.0
    %3657 = vmatpush1.msra.mxu0 0.0
    %3658 = vmatprep.subr.mxu0 0.0
    %3659 = vmatpush1.msra.mxu0 0.0
    %3660 = vmatprep.subr.mxu0 0.0
    %3661 = vmatpush1.msra.mxu0 0.0
    %3662 = vmatprep.subr.mxu0 0.0
    %3663 = vmatpush1.msra.mxu0 0.0
    %3664 = vmatprep.subr.mxu0 0.0
    %3665 = vmatpush1.msra.mxu0 0.0
    %3666 = vmatprep.subr.mxu0 0.0
    %3667 = vmatpush1.msra.mxu0 0.0
    %3668 = vmatprep.subr.mxu0 0.0
    %3669 = vmatpush1.msra.mxu0 0.0
    %3670 = vmatprep.subr.mxu0 0.0
    %3671 = vmatpush1.msra.mxu0 0.0
    %3672 = vmatprep.subr.mxu0 0.0
    %3673 = vmatpush1.msra.mxu0 0.0
    %3674 = vmatprep.subr.mxu0 0.0
    %3675 = vmatpush1.msra.mxu0 0.0
    %3676 = vmatprep.mubr.f32.mxu0 0.0
    %3677 = vmatmul.mubr.f32.gmra.mrb[0].mxu0 %v3565
    %v3678 = vpop.f32.mrb[0].mxu0
    %v3679 = vadd.f32 %v3486, %v3678
    %v3680 = vpop.f32.mrb[0].mxu0
    %3681 = vmatprep.mubr.f32.mxu0 0.0
    %3682 = vmatmul.mubr.f32.gmra.mrb[0].mxu0 %v3568
    %v3683 = vpop.f32.mrb[0].mxu0
    %v3684 = vadd.f32 %v3491, %v3683
    %v3685 = vpop.f32.mrb[0].mxu0
    %3686 = vmatprep.mubr.f32.mxu0 0.0
    %3687 = vmatmul.mubr.f32.gmra.mrb[0].mxu0 %v3571
    %v3688 = vpop.f32.mrb[0].mxu0
    %v3689 = vadd.f32 %v3496, %v3688
    %v3690 = vpop.f32.mrb[0].mxu0
    %3691 = vmatprep.mubr.f32.mxu0 0.0
    %3692 = vmatmul.mubr.f32.gmra.mrb[0].mxu0 %v3574
    %v3693 = vpop.f32.mrb[0].mxu0
    %v3694 = vadd.f32 %v3501, %v3693
    %v3695 = vpop.f32.mrb[0].mxu0
    %3696 = vmatprep.mubr.f32.mxu0 0.0
    %3697 = vmatmul.mubr.f32.gmra.mrb[0].mxu0 %v3577
    %v3698 = vpop.f32.mrb[0].mxu0
    %v3699 = vadd.f32 %v3506, %v3698
    %v3700 = vpop.f32.mrb[0].mxu0
    %3701 = vmatprep.mubr.f32.mxu0 0.0
    %3702 = vmatmul.mubr.f32.gmra.mrb[0].mxu0 %v3580
    %v3703 = vpop.f32.mrb[0].mxu0
    %v3704 = vadd.f32 %v3511, %v3703
    %v3705 = vpop.f32.mrb[0].mxu0
    %3706 = vmatprep.mubr.f32.mxu0 0.0
    %3707 = vmatmul.mubr.f32.gmra.mrb[0].mxu0 %v3583
    %v3708 = vpop.f32.mrb[0].mxu0
    %v3709 = vadd.f32 %v3516, %v3708
    %v3710 = vpop.f32.mrb[0].mxu0
    %3711 = vmatprep.mubr.f32.mxu0 0.0
    %3712 = vmatmul.mubr.f32.gmra.mrb[0].mxu0 %v3586
    %v3713 = vpop.f32.mrb[0].mxu0
    %v3714 = vadd.f32 %v3521, %v3713
    %v3715 = vpop.f32.mrb[0].mxu0
    %3716 = vmatprep.mubr.f32.mxu0 0.0
    %3717 = vmatmul.mubr.f32.gmra.mrb[0].mxu0 %v3589
    %v3718 = vpop.f32.mrb[0].mxu0
    %v3719 = vadd.f32 %v3526, %v3718
    %v3720 = vpop.f32.mrb[0].mxu0
    %3721 = vmatprep.mubr.f32.mxu0 0.0
    %3722 = vmatmul.mubr.f32.gmra.mrb[0].mxu0 %v3592
    %v3723 = vpop.f32.mrb[0].mxu0
    %v3724 = vadd.f32 %v3531, %v3723
    %v3725 = vpop.f32.mrb[0].mxu0
    %3726 = vmatprep.mubr.f32.mxu0 0.0
    %3727 = vmatmul.mubr.f32.gmra.mrb[0].mxu0 %v3595
    %v3728 = vpop.f32.mrb[0].mxu0
    %v3729 = vadd.f32 %v3536, %v3728
    %v3730 = vpop.f32.mrb[0].mxu0
    %3731 = vmatprep.mubr.f32.mxu0 0.0
    %3732 = vmatmul.mubr.f32.gmra.mrb[0].mxu0 %v3598
    %v3733 = vpop.f32.mrb[0].mxu0
    %v3734 = vadd.f32 %v3541, %v3733
    %v3735 = vpop.f32.mrb[0].mxu0
    %3736 = vmatprep.mubr.f32.mxu0 0.0
    %3737 = vmatmul.mubr.f32.gmra.mrb[0].mxu0 %v3601
    %v3738 = vpop.f32.mrb[0].mxu0
    %v3739 = vadd.f32 %v3546, %v3738
    %v3740 = vpop.f32.mrb[0].mxu0
    %3741 = vmatprep.mubr.f32.mxu0 0.0
    %3742 = vmatmul.mubr.f32.gmra.mrb[0].mxu0 %v3604
    %v3743 = vpop.f32.mrb[0].mxu0
    %v3744 = vadd.f32 %v3551, %v3743
    %v3745 = vpop.f32.mrb[0].mxu0
    %3746 = vmatprep.mubr.f32.mxu0 0.0
    %3747 = vmatmul.mubr.f32.gmra.mrb[0].mxu0 %v3607
    %v3748 = vpop.f32.mrb[0].mxu0
    %v3749 = vadd.f32 %v3556, %v3748
    %v3750 = vpop.f32.mrb[0].mxu0
    %3751 = vmatprep.mubr.f32.mxu0 0.0
    %3752 = vmatmul.mubr.f32.gmra.mrb[0].mxu0 %v3610
    %v3753 = vpop.f32.mrb[0].mxu0
    %v3754 = vadd.f32 %v3561, %v3753
    %v3755 = vpop.f32.mrb[0].mxu0
    %3756 = vdwg.mxu0
    %v3757 = vld [vmem:[%s9] sm:$0xff]
    %v3758 = vld [vmem:[%s9 + $0x8] sm:$0xff]
    %v3759 = vld [vmem:[%s9 + $0x10] sm:$0xff]
    %v3760 = vld [vmem:[%s9 + $0x18] sm:$0xff]
    %v3761 = vld [vmem:[%s9 + $0x20] sm:$0xff]
    %v3762 = vld [vmem:[%s9 + $0x28] sm:$0xff]
    %v3763 = vld [vmem:[%s9 + $0x30] sm:$0xff]
    %v3764 = vld [vmem:[%s9 + $0x38] sm:$0xff]
    %v3766 = vsel %vm771, %v3083, 0
    %v3769 = vsel %vm771, %v3084, 0
    %v3772 = vsel %vm771, %v3085, 0
    %v3775 = vsel %vm771, %v3086, 0
    %v3778 = vsel %vm771, %v3087, 0
    %v3781 = vsel %vm771, %v3088, 0
    %v3784 = vsel %vm771, %v3089, 0
    %v3787 = vsel %vm771, %v3090, 0
    %v3790 = vsel %vm771, %v3091, 0
    %v3793 = vsel %vm771, %v3092, 0
    %v3796 = vsel %vm771, %v3093, 0
    %v3799 = vsel %vm771, %v3094, 0
    %v3802 = vsel %vm771, %v3095, 0
    %v3805 = vsel %vm771, %v3096, 0
    %v3808 = vsel %vm771, %v3097, 0
    %v3811 = vsel %vm771, %v3098, 0
    %3813 = vmatprep.subr.mxu0 0.0
    %3814 = vmatpush1.msra.mxu0 %v3757
    %3815 = vmatprep.subr.mxu0 0.0
    %3816 = vmatpush1.msra.mxu0 %v3758
    %3817 = vmatprep.subr.mxu0 0.0
    %3818 = vmatpush1.msra.mxu0 %v3759
    %3819 = vmatprep.subr.mxu0 0.0
    %3820 = vmatpush1.msra.mxu0 %v3760
    %3821 = vmatprep.subr.mxu0 0.0
    %3822 = vmatpush1.msra.mxu0 %v3761
    %3823 = vmatprep.subr.mxu0 0.0
    %3824 = vmatpush1.msra.mxu0 %v3762
    %3825 = vmatprep.subr.mxu0 0.0
    %3826 = vmatpush1.msra.mxu0 %v3763
    %3827 = vmatprep.subr.mxu0 0.0
    %3828 = vmatpush1.msra.mxu0 %v3764
    %3829 = vmatprep.subr.mxu0 0.0
    %3830 = vmatpush1.msra.mxu0 0.0
    %3831 = vmatprep.subr.mxu0 0.0
    %3832 = vmatpush1.msra.mxu0 0.0
    %3833 = vmatprep.subr.mxu0 0.0
    %3834 = vmatpush1.msra.mxu0 0.0
    %3835 = vmatprep.subr.mxu0 0.0
    %3836 = vmatpush1.msra.mxu0 0.0
    %3837 = vmatprep.subr.mxu0 0.0
    %3838 = vmatpush1.msra.mxu0 0.0
    %3839 = vmatprep.subr.mxu0 0.0
    %3840 = vmatpush1.msra.mxu0 0.0
    %3841 = vmatprep.subr.mxu0 0.0
    %3842 = vmatpush1.msra.mxu0 0.0
    %3843 = vmatprep.subr.mxu0 0.0
    %3844 = vmatpush1.msra.mxu0 0.0
    %3845 = vmatprep.subr.mxu0 0.0
    %3846 = vmatpush1.msra.mxu0 0.0
    %3847 = vmatprep.subr.mxu0 0.0
    %3848 = vmatpush1.msra.mxu0 0.0
    %3849 = vmatprep.subr.mxu0 0.0
    %3850 = vmatpush1.msra.mxu0 0.0
    %3851 = vmatprep.subr.mxu0 0.0
    %3852 = vmatpush1.msra.mxu0 0.0
    %3853 = vmatprep.subr.mxu0 0.0
    %3854 = vmatpush1.msra.mxu0 0.0
    %3855 = vmatprep.subr.mxu0 0.0
    %3856 = vmatpush1.msra.mxu0 0.0
    %3857 = vmatprep.subr.mxu0 0.0
    %3858 = vmatpush1.msra.mxu0 0.0
    %3859 = vmatprep.subr.mxu0 0.0
    %3860 = vmatpush1.msra.mxu0 0.0
    %3861 = vmatprep.subr.mxu0 0.0
    %3862 = vmatpush1.msra.mxu0 0.0
    %3863 = vmatprep.subr.mxu0 0.0
    %3864 = vmatpush1.msra.mxu0 0.0
    %3865 = vmatprep.subr.mxu0 0.0
    %3866 = vmatpush1.msra.mxu0 0.0
    %3867 = vmatprep.subr.mxu0 0.0
    %3868 = vmatpush1.msra.mxu0 0.0
    %3869 = vmatprep.subr.mxu0 0.0
    %3870 = vmatpush1.msra.mxu0 0.0
    %3871 = vmatprep.subr.mxu0 0.0
    %3872 = vmatpush1.msra.mxu0 0.0
    %3873 = vmatprep.subr.mxu0 0.0
    %3874 = vmatpush1.msra.mxu0 0.0
    %3875 = vmatprep.subr.mxu0 0.0
    %3876 = vmatpush1.msra.mxu0 0.0
    %3877 = vmatprep.mubr.f32.mxu0 0.0
    %3878 = vmatmul.mubr.f32.gmra.mrb[0].mxu0 %v3766
    %v3879 = vpop.f32.mrb[0].mxu0
    %v3880 = vadd.f32 0.0, %v3879
    %v3881 = vpop.f32.mrb[0].mxu0
    %3882 = vmatprep.mubr.f32.mxu0 0.0
    %3883 = vmatmul.mubr.f32.gmra.mrb[0].mxu0 %v3769
    %v3884 = vpop.f32.mrb[0].mxu0
    %v3885 = vadd.f32 0.0, %v3884
    %v3886 = vpop.f32.mrb[0].mxu0
    %3887 = vmatprep.mubr.f32.mxu0 0.0
    %3888 = vmatmul.mubr.f32.gmra.mrb[0].mxu0 %v3772
    %v3889 = vpop.f32.mrb[0].mxu0
    %v3890 = vadd.f32 0.0, %v3889
    %v3891 = vpop.f32.mrb[0].mxu0
    %3892 = vmatprep.mubr.f32.mxu0 0.0
    %3893 = vmatmul.mubr.f32.gmra.mrb[0].mxu0 %v3775
    %v3894 = vpop.f32.mrb[0].mxu0
    %v3895 = vadd.f32 0.0, %v3894
    %v3896 = vpop.f32.mrb[0].mxu0
    %3897 = vmatprep.mubr.f32.mxu0 0.0
    %3898 = vmatmul.mubr.f32.gmra.mrb[0].mxu0 %v3778
    %v3899 = vpop.f32.mrb[0].mxu0
    %v3900 = vadd.f32 0.0, %v3899
    %v3901 = vpop.f32.mrb[0].mxu0
    %3902 = vmatprep.mubr.f32.mxu0 0.0
    %3903 = vmatmul.mubr.f32.gmra.mrb[0].mxu0 %v3781
    %v3904 = vpop.f32.mrb[0].mxu0
    %v3905 = vadd.f32 0.0, %v3904
    %v3906 = vpop.f32.mrb[0].mxu0
    %3907 = vmatprep.mubr.f32.mxu0 0.0
    %3908 = vmatmul.mubr.f32.gmra.mrb[0].mxu0 %v3784
    %v3909 = vpop.f32.mrb[0].mxu0
    %v3910 = vadd.f32 0.0, %v3909
    %v3911 = vpop.f32.mrb[0].mxu0
    %3912 = vmatprep.mubr.f32.mxu0 0.0
    %3913 = vmatmul.mubr.f32.gmra.mrb[0].mxu0 %v3787
    %v3914 = vpop.f32.mrb[0].mxu0
    %v3915 = vadd.f32 0.0, %v3914
    %v3916 = vpop.f32.mrb[0].mxu0
    %3917 = vmatprep.mubr.f32.mxu0 0.0
    %3918 = vmatmul.mubr.f32.gmra.mrb[0].mxu0 %v3790
    %v3919 = vpop.f32.mrb[0].mxu0
    %v3920 = vadd.f32 0.0, %v3919
    %v3921 = vpop.f32.mrb[0].mxu0
    %3922 = vmatprep.mubr.f32.mxu0 0.0
    %3923 = vmatmul.mubr.f32.gmra.mrb[0].mxu0 %v3793
    %v3924 = vpop.f32.mrb[0].mxu0
    %v3925 = vadd.f32 0.0, %v3924
    %v3926 = vpop.f32.mrb[0].mxu0
    %3927 = vmatprep.mubr.f32.mxu0 0.0
    %3928 = vmatmul.mubr.f32.gmra.mrb[0].mxu0 %v3796
    %v3929 = vpop.f32.mrb[0].mxu0
    %v3930 = vadd.f32 0.0, %v3929
    %v3931 = vpop.f32.mrb[0].mxu0
    %3932 = vmatprep.mubr.f32.mxu0 0.0
    %3933 = vmatmul.mubr.f32.gmra.mrb[0].mxu0 %v3799
    %v3934 = vpop.f32.mrb[0].mxu0
    %v3935 = vadd.f32 0.0, %v3934
    %v3936 = vpop.f32.mrb[0].mxu0
    %3937 = vmatprep.mubr.f32.mxu0 0.0
    %3938 = vmatmul.mubr.f32.gmra.mrb[0].mxu0 %v3802
    %v3939 = vpop.f32.mrb[0].mxu0
    %v3940 = vadd.f32 0.0, %v3939
    %v3941 = vpop.f32.mrb[0].mxu0
    %3942 = vmatprep.mubr.f32.mxu0 0.0
    %3943 = vmatmul.mubr.f32.gmra.mrb[0].mxu0 %v3805
    %v3944 = vpop.f32.mrb[0].mxu0
    %v3945 = vadd.f32 0.0, %v3944
    %v3946 = vpop.f32.mrb[0].mxu0
    %3947 = vmatprep.mubr.f32.mxu0 0.0
    %3948 = vmatmul.mubr.f32.gmra.mrb[0].mxu0 %v3808
    %v3949 = vpop.f32.mrb[0].mxu0
    %v3950 = vadd.f32 0.0, %v3949
    %v3951 = vpop.f32.mrb[0].mxu0
    %3952 = vmatprep.mubr.f32.mxu0 0.0
    %3953 = vmatmul.mubr.f32.gmra.mrb[0].mxu0 %v3811
    %v3954 = vpop.f32.mrb[0].mxu0
    %v3955 = vadd.f32 0.0, %v3954
    %v3956 = vpop.f32.mrb[0].mxu0
    %3957 = vdwg.mxu0
    %v3958 = vadd.f32 %v3679, %v3880
    %v3959 = vadd.f32 %v3684, %v3885
    %v3960 = vadd.f32 %v3689, %v3890
    %v3961 = vadd.f32 %v3694, %v3895
    %v3962 = vadd.f32 %v3699, %v3900
    %v3963 = vadd.f32 %v3704, %v3905
    %v3964 = vadd.f32 %v3709, %v3910
    %v3965 = vadd.f32 %v3714, %v3915
    %v3966 = vadd.f32 %v3719, %v3920
    %v3967 = vadd.f32 %v3724, %v3925
    %v3968 = vadd.f32 %v3729, %v3930
    %v3969 = vadd.f32 %v3734, %v3935
    %v3970 = vadd.f32 %v3739, %v3940
    %v3971 = vadd.f32 %v3744, %v3945
    %v3972 = vadd.f32 %v3749, %v3950
    %v3973 = vadd.f32 %v3754, %v3955
    %v3974 = vld [vmem:[%s10] sm:$0x1]
    %v3975 = vld [vmem:[%s11] sm:$0x1]
    %v3976 = vsel %vm771, %v3958, 0.0
    %v3977 = vsel %vm771, %v3959, 0.0
    %v3978 = vadd.f32 %v3976, %v3977
    %v3979 = vsel %vm771, %v3960, 0.0
    %v3980 = vadd.f32 %v3978, %v3979
    %v3981 = vsel %vm771, %v3961, 0.0
    %v3982 = vadd.f32 %v3980, %v3981
    %v3983 = vsel %vm771, %v3962, 0.0
    %v3984 = vadd.f32 %v3982, %v3983
    %v3985 = vsel %vm771, %v3963, 0.0
    %v3986 = vadd.f32 %v3984, %v3985
    %v3987 = vsel %vm771, %v3964, 0.0
    %v3988 = vadd.f32 %v3986, %v3987
    %v3989 = vsel %vm771, %v3965, 0.0
    %v3990 = vadd.f32 %v3988, %v3989
    %v3991 = vsel %vm771, %v3966, 0.0
    %v3992 = vadd.f32 %v3990, %v3991
    %v3993 = vsel %vm771, %v3967, 0.0
    %v3994 = vadd.f32 %v3992, %v3993
    %v3995 = vsel %vm771, %v3968, 0.0
    %v3996 = vadd.f32 %v3994, %v3995
    %v3997 = vsel %vm771, %v3969, 0.0
    %v3998 = vadd.f32 %v3996, %v3997
    %v3999 = vsel %vm771, %v3970, 0.0
    %v4000 = vadd.f32 %v3998, %v3999
    %v4001 = vsel %vm771, %v3971, 0.0
    %v4002 = vadd.f32 %v4000, %v4001
    %v4003 = vsel %vm771, %v3972, 0.0
    %v4004 = vadd.f32 %v4002, %v4003
    %v4005 = vsel %vm771, %v3973, 0.0
    %v4006 = vadd.f32 %v4004, %v4005
    %v4007 = vrot.slane %v4006, 4
    %v4008 = vadd.f32 %v4006, %v4007
    %v4009 = vrot.slane %v4008, 2
    %v4010 = vadd.f32 %v4008, %v4009
    %v4011 = vrot.slane %v4010, 1
    %v4012 = vadd.f32 %v4010, %v4011
    %v4013 = vmul.f32 %v4012, 0.0078125
    %v4014 = vsub.f32 %v3958, %v4013
    %v4015 = vsub.f32 %v3959, %v4013
    %v4016 = vsub.f32 %v3960, %v4013
    %v4017 = vsub.f32 %v3961, %v4013
    %v4018 = vsub.f32 %v3962, %v4013
    %v4019 = vsub.f32 %v3963, %v4013
    %v4020 = vsub.f32 %v3964, %v4013
    %v4021 = vsub.f32 %v3965, %v4013
    %v4022 = vsub.f32 %v3966, %v4013
    %v4023 = vsub.f32 %v3967, %v4013
    %v4024 = vsub.f32 %v3968, %v4013
    %v4025 = vsub.f32 %v3969, %v4013
    %v4026 = vsub.f32 %v3970, %v4013
    %v4027 = vsub.f32 %v3971, %v4013
    %v4028 = vsub.f32 %v3972, %v4013
    %v4029 = vsub.f32 %v3973, %v4013
    %v4030 = vmul.f32 %v4014, %v4014
    %v4031 = vmul.f32 %v4015, %v4015
    %v4032 = vmul.f32 %v4016, %v4016
    %v4033 = vmul.f32 %v4017, %v4017
    %v4034 = vmul.f32 %v4018, %v4018
    %v4035 = vmul.f32 %v4019, %v4019
    %v4036 = vmul.f32 %v4020, %v4020
    %v4037 = vmul.f32 %v4021, %v4021
    %v4038 = vmul.f32 %v4022, %v4022
    %v4039 = vmul.f32 %v4023, %v4023
    %v4040 = vmul.f32 %v4024, %v4024
    %v4041 = vmul.f32 %v4025, %v4025
    %v4042 = vmul.f32 %v4026, %v4026
    %v4043 = vmul.f32 %v4027, %v4027
    %v4044 = vmul.f32 %v4028, %v4028
    %v4045 = vmul.f32 %v4029, %v4029
    %v4046 = vsel %vm771, %v4030, 0.0
    %v4047 = vsel %vm771, %v4031, 0.0
    %v4048 = vadd.f32 %v4046, %v4047
    %v4049 = vsel %vm771, %v4032, 0.0
    %v4050 = vadd.f32 %v4048, %v4049
    %v4051 = vsel %vm771, %v4033, 0.0
    %v4052 = vadd.f32 %v4050, %v4051
    %v4053 = vsel %vm771, %v4034, 0.0
    %v4054 = vadd.f32 %v4052, %v4053
    %v4055 = vsel %vm771, %v4035, 0.0
    %v4056 = vadd.f32 %v4054, %v4055
    %v4057 = vsel %vm771, %v4036, 0.0
    %v4058 = vadd.f32 %v4056, %v4057
    %v4059 = vsel %vm771, %v4037, 0.0
    %v4060 = vadd.f32 %v4058, %v4059
    %v4061 = vsel %vm771, %v4038, 0.0
    %v4062 = vadd.f32 %v4060, %v4061
    %v4063 = vsel %vm771, %v4039, 0.0
    %v4064 = vadd.f32 %v4062, %v4063
    %v4065 = vsel %vm771, %v4040, 0.0
    %v4066 = vadd.f32 %v4064, %v4065
    %v4067 = vsel %vm771, %v4041, 0.0
    %v4068 = vadd.f32 %v4066, %v4067
    %v4069 = vsel %vm771, %v4042, 0.0
    %v4070 = vadd.f32 %v4068, %v4069
    %v4071 = vsel %vm771, %v4043, 0.0
    %v4072 = vadd.f32 %v4070, %v4071
    %v4073 = vsel %vm771, %v4044, 0.0
    %v4074 = vadd.f32 %v4072, %v4073
    %v4075 = vsel %vm771, %v4045, 0.0
    %v4076 = vadd.f32 %v4074, %v4075
    %v4077 = vrot.slane %v4076, 4
    %v4078 = vadd.f32 %v4076, %v4077
    %v4079 = vrot.slane %v4078, 2
    %v4080 = vadd.f32 %v4078, %v4079
    %v4081 = vrot.slane %v4080, 1
    %v4082 = vadd.f32 %v4080, %v4081
    %v4083 = vmul.f32 %v4082, 0.0078125
    %v4084 = vadd.f32 %v4083, 1e-05
    %v4085 = vrsqrt.pop %v4084
    %v4086 = vmul.f32 %v4014, %v4085
    %v4087 = vmul.f32 %v4015, %v4085
    %v4088 = vmul.f32 %v4016, %v4085
    %v4089 = vmul.f32 %v4017, %v4085
    %v4090 = vmul.f32 %v4018, %v4085
    %v4091 = vmul.f32 %v4019, %v4085
    %v4092 = vmul.f32 %v4020, %v4085
    %v4093 = vmul.f32 %v4021, %v4085
    %v4094 = vmul.f32 %v4022, %v4085
    %v4095 = vmul.f32 %v4023, %v4085
    %v4096 = vmul.f32 %v4024, %v4085
    %v4097 = vmul.f32 %v4025, %v4085
    %v4098 = vmul.f32 %v4026, %v4085
    %v4099 = vmul.f32 %v4027, %v4085
    %v4100 = vmul.f32 %v4028, %v4085
    %v4101 = vmul.f32 %v4029, %v4085
    %v4103 = vlaneseq
    %v4104 = vshrl.u32 %v4103, 7
    %v4105 = vsub.s32 0, %v4104
    %v4106 = vrot.slane %v3974, %v4105
    %v4108 = vmul.f32 %v4086, %v4106
    %v4109 = vmul.f32 %v4087, %v4106
    %v4110 = vmul.f32 %v4088, %v4106
    %v4111 = vmul.f32 %v4089, %v4106
    %v4112 = vmul.f32 %v4090, %v4106
    %v4113 = vmul.f32 %v4091, %v4106
    %v4114 = vmul.f32 %v4092, %v4106
    %v4115 = vmul.f32 %v4093, %v4106
    %v4116 = vmul.f32 %v4094, %v4106
    %v4117 = vmul.f32 %v4095, %v4106
    %v4118 = vmul.f32 %v4096, %v4106
    %v4119 = vmul.f32 %v4097, %v4106
    %v4120 = vmul.f32 %v4098, %v4106
    %v4121 = vmul.f32 %v4099, %v4106
    %v4122 = vmul.f32 %v4100, %v4106
    %v4123 = vmul.f32 %v4101, %v4106
    %v4125 = vlaneseq
    %v4126 = vshrl.u32 %v4125, 7
    %v4127 = vsub.s32 0, %v4126
    %v4128 = vrot.slane %v3975, %v4127
    %v4130 = vadd.f32 %v4108, %v4128
    %v4131 = vadd.f32 %v4109, %v4128
    %v4132 = vadd.f32 %v4110, %v4128
    %v4133 = vadd.f32 %v4111, %v4128
    %v4134 = vadd.f32 %v4112, %v4128
    %v4135 = vadd.f32 %v4113, %v4128
    %v4136 = vadd.f32 %v4114, %v4128
    %v4137 = vadd.f32 %v4115, %v4128
    %v4138 = vadd.f32 %v4116, %v4128
    %v4139 = vadd.f32 %v4117, %v4128
    %v4140 = vadd.f32 %v4118, %v4128
    %v4141 = vadd.f32 %v4119, %v4128
    %v4142 = vadd.f32 %v4120, %v4128
    %v4143 = vadd.f32 %v4121, %v4128
    %v4144 = vadd.f32 %v4122, %v4128
    %v4145 = vadd.f32 %v4123, %v4128
    %v4146 = vmax.f32 %v4130, 0.0
    %v4147 = vmax.f32 %v4131, 0.0
    %v4148 = vmax.f32 %v4132, 0.0
    %v4149 = vmax.f32 %v4133, 0.0
    %v4150 = vmax.f32 %v4134, 0.0
    %v4151 = vmax.f32 %v4135, 0.0
    %v4152 = vmax.f32 %v4136, 0.0
    %v4153 = vmax.f32 %v4137, 0.0
    %v4154 = vmax.f32 %v4138, 0.0
    %v4155 = vmax.f32 %v4139, 0.0
    %v4156 = vmax.f32 %v4140, 0.0
    %v4157 = vmax.f32 %v4141, 0.0
    %v4158 = vmax.f32 %v4142, 0.0
    %v4159 = vmax.f32 %v4143, 0.0
    %v4160 = vmax.f32 %v4144, 0.0
    %v4161 = vmax.f32 %v4145, 0.0
    %v4162 = vld [vmem:[%s12] sm:$0xff]
    %v4163 = vld [vmem:[%s12 + $0x8] sm:$0xff]
    %v4164 = vld [vmem:[%s12 + $0x10] sm:$0xff]
    %v4165 = vld [vmem:[%s12 + $0x18] sm:$0xff]
    %v4166 = vld [vmem:[%s12 + $0x20] sm:$0xff]
    %v4167 = vld [vmem:[%s12 + $0x28] sm:$0xff]
    %v4168 = vld [vmem:[%s12 + $0x30] sm:$0xff]
    %v4169 = vld [vmem:[%s12 + $0x38] sm:$0xff]
    %v4171 = vsel %vm771, %v4146, 0
    %v4174 = vsel %vm771, %v4147, 0
    %v4177 = vsel %vm771, %v4148, 0
    %v4180 = vsel %vm771, %v4149, 0
    %v4183 = vsel %vm771, %v4150, 0
    %v4186 = vsel %vm771, %v4151, 0
    %v4189 = vsel %vm771, %v4152, 0
    %v4192 = vsel %vm771, %v4153, 0
    %v4195 = vsel %vm771, %v4154, 0
    %v4198 = vsel %vm771, %v4155, 0
    %v4201 = vsel %vm771, %v4156, 0
    %v4204 = vsel %vm771, %v4157, 0
    %v4207 = vsel %vm771, %v4158, 0
    %v4210 = vsel %vm771, %v4159, 0
    %v4213 = vsel %vm771, %v4160, 0
    %v4216 = vsel %vm771, %v4161, 0
    %4218 = vmatprep.subr.mxu0 0.0
    %4219 = vmatpush1.msra.mxu0 %v4162
    %4220 = vmatprep.subr.mxu0 0.0
    %4221 = vmatpush1.msra.mxu0 %v4163
    %4222 = vmatprep.subr.mxu0 0.0
    %4223 = vmatpush1.msra.mxu0 %v4164
    %4224 = vmatprep.subr.mxu0 0.0
    %4225 = vmatpush1.msra.mxu0 %v4165
    %4226 = vmatprep.subr.mxu0 0.0
    %4227 = vmatpush1.msra.mxu0 %v4166
    %4228 = vmatprep.subr.mxu0 0.0
    %4229 = vmatpush1.msra.mxu0 %v4167
    %4230 = vmatprep.subr.mxu0 0.0
    %4231 = vmatpush1.msra.mxu0 %v4168
    %4232 = vmatprep.subr.mxu0 0.0
    %4233 = vmatpush1.msra.mxu0 %v4169
    %4234 = vmatprep.subr.mxu0 0.0
    %4235 = vmatpush1.msra.mxu0 0.0
    %4236 = vmatprep.subr.mxu0 0.0
    %4237 = vmatpush1.msra.mxu0 0.0
    %4238 = vmatprep.subr.mxu0 0.0
    %4239 = vmatpush1.msra.mxu0 0.0
    %4240 = vmatprep.subr.mxu0 0.0
    %4241 = vmatpush1.msra.mxu0 0.0
    %4242 = vmatprep.subr.mxu0 0.0
    %4243 = vmatpush1.msra.mxu0 0.0
    %4244 = vmatprep.subr.mxu0 0.0
    %4245 = vmatpush1.msra.mxu0 0.0
    %4246 = vmatprep.subr.mxu0 0.0
    %4247 = vmatpush1.msra.mxu0 0.0
    %4248 = vmatprep.subr.mxu0 0.0
    %4249 = vmatpush1.msra.mxu0 0.0
    %4250 = vmatprep.subr.mxu0 0.0
    %4251 = vmatpush1.msra.mxu0 0.0
    %4252 = vmatprep.subr.mxu0 0.0
    %4253 = vmatpush1.msra.mxu0 0.0
    %4254 = vmatprep.subr.mxu0 0.0
    %4255 = vmatpush1.msra.mxu0 0.0
    %4256 = vmatprep.subr.mxu0 0.0
    %4257 = vmatpush1.msra.mxu0 0.0
    %4258 = vmatprep.subr.mxu0 0.0
    %4259 = vmatpush1.msra.mxu0 0.0
    %4260 = vmatprep.subr.mxu0 0.0
    %4261 = vmatpush1.msra.mxu0 0.0
    %4262 = vmatprep.subr.mxu0 0.0
    %4263 = vmatpush1.msra.mxu0 0.0
    %4264 = vmatprep.subr.mxu0 0.0
    %4265 = vmatpush1.msra.mxu0 0.0
    %4266 = vmatprep.subr.mxu0 0.0
    %4267 = vmatpush1.msra.mxu0 0.0
    %4268 = vmatprep.subr.mxu0 0.0
    %4269 = vmatpush1.msra.mxu0 0.0
    %4270 = vmatprep.subr.mxu0 0.0
    %4271 = vmatpush1.msra.mxu0 0.0
    %4272 = vmatprep.subr.mxu0 0.0
    %4273 = vmatpush1.msra.mxu0 0.0
    %4274 = vmatprep.subr.mxu0 0.0
    %4275 = vmatpush1.msra.mxu0 0.0
    %4276 = vmatprep.subr.mxu0 0.0
    %4277 = vmatpush1.msra.mxu0 0.0
    %4278 = vmatprep.subr.mxu0 0.0
    %4279 = vmatpush1.msra.mxu0 0.0
    %4280 = vmatprep.subr.mxu0 0.0
    %4281 = vmatpush1.msra.mxu0 0.0
    %4282 = vmatprep.mubr.f32.mxu0 0.0
    %4283 = vmatmul.mubr.f32.gmra.mrb[0].mxu0 %v4171
    %v4284 = vpop.f32.mrb[0].mxu0
    %v4285 = vadd.f32 0.0, %v4284
    %v4286 = vpop.f32.mrb[0].mxu0
    %4287 = vmatprep.mubr.f32.mxu0 0.0
    %4288 = vmatmul.mubr.f32.gmra.mrb[0].mxu0 %v4174
    %v4289 = vpop.f32.mrb[0].mxu0
    %v4290 = vadd.f32 0.0, %v4289
    %v4291 = vpop.f32.mrb[0].mxu0
    %4292 = vmatprep.mubr.f32.mxu0 0.0
    %4293 = vmatmul.mubr.f32.gmra.mrb[0].mxu0 %v4177
    %v4294 = vpop.f32.mrb[0].mxu0
    %v4295 = vadd.f32 0.0, %v4294
    %v4296 = vpop.f32.mrb[0].mxu0
    %4297 = vmatprep.mubr.f32.mxu0 0.0
    %4298 = vmatmul.mubr.f32.gmra.mrb[0].mxu0 %v4180
    %v4299 = vpop.f32.mrb[0].mxu0
    %v4300 = vadd.f32 0.0, %v4299
    %v4301 = vpop.f32.mrb[0].mxu0
    %4302 = vmatprep.mubr.f32.mxu0 0.0
    %4303 = vmatmul.mubr.f32.gmra.mrb[0].mxu0 %v4183
    %v4304 = vpop.f32.mrb[0].mxu0
    %v4305 = vadd.f32 0.0, %v4304
    %v4306 = vpop.f32.mrb[0].mxu0
    %4307 = vmatprep.mubr.f32.mxu0 0.0
    %4308 = vmatmul.mubr.f32.gmra.mrb[0].mxu0 %v4186
    %v4309 = vpop.f32.mrb[0].mxu0
    %v4310 = vadd.f32 0.0, %v4309
    %v4311 = vpop.f32.mrb[0].mxu0
    %4312 = vmatprep.mubr.f32.mxu0 0.0
    %4313 = vmatmul.mubr.f32.gmra.mrb[0].mxu0 %v4189
    %v4314 = vpop.f32.mrb[0].mxu0
    %v4315 = vadd.f32 0.0, %v4314
    %v4316 = vpop.f32.mrb[0].mxu0
    %4317 = vmatprep.mubr.f32.mxu0 0.0
    %4318 = vmatmul.mubr.f32.gmra.mrb[0].mxu0 %v4192
    %v4319 = vpop.f32.mrb[0].mxu0
    %v4320 = vadd.f32 0.0, %v4319
    %v4321 = vpop.f32.mrb[0].mxu0
    %4322 = vmatprep.mubr.f32.mxu0 0.0
    %4323 = vmatmul.mubr.f32.gmra.mrb[0].mxu0 %v4195
    %v4324 = vpop.f32.mrb[0].mxu0
    %v4325 = vadd.f32 0.0, %v4324
    %v4326 = vpop.f32.mrb[0].mxu0
    %4327 = vmatprep.mubr.f32.mxu0 0.0
    %4328 = vmatmul.mubr.f32.gmra.mrb[0].mxu0 %v4198
    %v4329 = vpop.f32.mrb[0].mxu0
    %v4330 = vadd.f32 0.0, %v4329
    %v4331 = vpop.f32.mrb[0].mxu0
    %4332 = vmatprep.mubr.f32.mxu0 0.0
    %4333 = vmatmul.mubr.f32.gmra.mrb[0].mxu0 %v4201
    %v4334 = vpop.f32.mrb[0].mxu0
    %v4335 = vadd.f32 0.0, %v4334
    %v4336 = vpop.f32.mrb[0].mxu0
    %4337 = vmatprep.mubr.f32.mxu0 0.0
    %4338 = vmatmul.mubr.f32.gmra.mrb[0].mxu0 %v4204
    %v4339 = vpop.f32.mrb[0].mxu0
    %v4340 = vadd.f32 0.0, %v4339
    %v4341 = vpop.f32.mrb[0].mxu0
    %4342 = vmatprep.mubr.f32.mxu0 0.0
    %4343 = vmatmul.mubr.f32.gmra.mrb[0].mxu0 %v4207
    %v4344 = vpop.f32.mrb[0].mxu0
    %v4345 = vadd.f32 0.0, %v4344
    %v4346 = vpop.f32.mrb[0].mxu0
    %4347 = vmatprep.mubr.f32.mxu0 0.0
    %4348 = vmatmul.mubr.f32.gmra.mrb[0].mxu0 %v4210
    %v4349 = vpop.f32.mrb[0].mxu0
    %v4350 = vadd.f32 0.0, %v4349
    %v4351 = vpop.f32.mrb[0].mxu0
    %4352 = vmatprep.mubr.f32.mxu0 0.0
    %4353 = vmatmul.mubr.f32.gmra.mrb[0].mxu0 %v4213
    %v4354 = vpop.f32.mrb[0].mxu0
    %v4355 = vadd.f32 0.0, %v4354
    %v4356 = vpop.f32.mrb[0].mxu0
    %4357 = vmatprep.mubr.f32.mxu0 0.0
    %4358 = vmatmul.mubr.f32.gmra.mrb[0].mxu0 %v4216
    %v4359 = vpop.f32.mrb[0].mxu0
    %v4360 = vadd.f32 0.0, %v4359
    %v4361 = vpop.f32.mrb[0].mxu0
    %4362 = vdwg.mxu0
    %v4363 = vld [vmem:[%s13] sm:$0x1]
    %v4364 = vld [vmem:[%s14] sm:$0x1]
    %v4365 = vsel %vm771, %v4285, 0.0
    %v4366 = vsel %vm771, %v4290, 0.0
    %v4367 = vadd.f32 %v4365, %v4366
    %v4368 = vsel %vm771, %v4295, 0.0
    %v4369 = vadd.f32 %v4367, %v4368
    %v4370 = vsel %vm771, %v4300, 0.0
    %v4371 = vadd.f32 %v4369, %v4370
    %v4372 = vsel %vm771, %v4305, 0.0
    %v4373 = vadd.f32 %v4371, %v4372
    %v4374 = vsel %vm771, %v4310, 0.0
    %v4375 = vadd.f32 %v4373, %v4374
    %v4376 = vsel %vm771, %v4315, 0.0
    %v4377 = vadd.f32 %v4375, %v4376
    %v4378 = vsel %vm771, %v4320, 0.0
    %v4379 = vadd.f32 %v4377, %v4378
    %v4380 = vsel %vm771, %v4325, 0.0
    %v4381 = vadd.f32 %v4379, %v4380
    %v4382 = vsel %vm771, %v4330, 0.0
    %v4383 = vadd.f32 %v4381, %v4382
    %v4384 = vsel %vm771, %v4335, 0.0
    %v4385 = vadd.f32 %v4383, %v4384
    %v4386 = vsel %vm771, %v4340, 0.0
    %v4387 = vadd.f32 %v4385, %v4386
    %v4388 = vsel %vm771, %v4345, 0.0
    %v4389 = vadd.f32 %v4387, %v4388
    %v4390 = vsel %vm771, %v4350, 0.0
    %v4391 = vadd.f32 %v4389, %v4390
    %v4392 = vsel %vm771, %v4355, 0.0
    %v4393 = vadd.f32 %v4391, %v4392
    %v4394 = vsel %vm771, %v4360, 0.0
    %v4395 = vadd.f32 %v4393, %v4394
    %v4396 = vrot.slane %v4395, 4
    %v4397 = vadd.f32 %v4395, %v4396
    %v4398 = vrot.slane %v4397, 2
    %v4399 = vadd.f32 %v4397, %v4398
    %v4400 = vrot.slane %v4399, 1
    %v4401 = vadd.f32 %v4399, %v4400
    %v4402 = vmul.f32 %v4401, 0.0078125
    %v4403 = vsub.f32 %v4285, %v4402
    %v4404 = vsub.f32 %v4290, %v4402
    %v4405 = vsub.f32 %v4295, %v4402
    %v4406 = vsub.f32 %v4300, %v4402
    %v4407 = vsub.f32 %v4305, %v4402
    %v4408 = vsub.f32 %v4310, %v4402
    %v4409 = vsub.f32 %v4315, %v4402
    %v4410 = vsub.f32 %v4320, %v4402
    %v4411 = vsub.f32 %v4325, %v4402
    %v4412 = vsub.f32 %v4330, %v4402
    %v4413 = vsub.f32 %v4335, %v4402
    %v4414 = vsub.f32 %v4340, %v4402
    %v4415 = vsub.f32 %v4345, %v4402
    %v4416 = vsub.f32 %v4350, %v4402
    %v4417 = vsub.f32 %v4355, %v4402
    %v4418 = vsub.f32 %v4360, %v4402
    %v4419 = vmul.f32 %v4403, %v4403
    %v4420 = vmul.f32 %v4404, %v4404
    %v4421 = vmul.f32 %v4405, %v4405
    %v4422 = vmul.f32 %v4406, %v4406
    %v4423 = vmul.f32 %v4407, %v4407
    %v4424 = vmul.f32 %v4408, %v4408
    %v4425 = vmul.f32 %v4409, %v4409
    %v4426 = vmul.f32 %v4410, %v4410
    %v4427 = vmul.f32 %v4411, %v4411
    %v4428 = vmul.f32 %v4412, %v4412
    %v4429 = vmul.f32 %v4413, %v4413
    %v4430 = vmul.f32 %v4414, %v4414
    %v4431 = vmul.f32 %v4415, %v4415
    %v4432 = vmul.f32 %v4416, %v4416
    %v4433 = vmul.f32 %v4417, %v4417
    %v4434 = vmul.f32 %v4418, %v4418
    %v4435 = vsel %vm771, %v4419, 0.0
    %v4436 = vsel %vm771, %v4420, 0.0
    %v4437 = vadd.f32 %v4435, %v4436
    %v4438 = vsel %vm771, %v4421, 0.0
    %v4439 = vadd.f32 %v4437, %v4438
    %v4440 = vsel %vm771, %v4422, 0.0
    %v4441 = vadd.f32 %v4439, %v4440
    %v4442 = vsel %vm771, %v4423, 0.0
    %v4443 = vadd.f32 %v4441, %v4442
    %v4444 = vsel %vm771, %v4424, 0.0
    %v4445 = vadd.f32 %v4443, %v4444
    %v4446 = vsel %vm771, %v4425, 0.0
    %v4447 = vadd.f32 %v4445, %v4446
    %v4448 = vsel %vm771, %v4426, 0.0
    %v4449 = vadd.f32 %v4447, %v4448
    %v4450 = vsel %vm771, %v4427, 0.0
    %v4451 = vadd.f32 %v4449, %v4450
    %v4452 = vsel %vm771, %v4428, 0.0
    %v4453 = vadd.f32 %v4451, %v4452
    %v4454 = vsel %vm771, %v4429, 0.0
    %v4455 = vadd.f32 %v4453, %v4454
    %v4456 = vsel %vm771, %v4430, 0.0
    %v4457 = vadd.f32 %v4455, %v4456
    %v4458 = vsel %vm771, %v4431, 0.0
    %v4459 = vadd.f32 %v4457, %v4458
    %v4460 = vsel %vm771, %v4432, 0.0
    %v4461 = vadd.f32 %v4459, %v4460
    %v4462 = vsel %vm771, %v4433, 0.0
    %v4463 = vadd.f32 %v4461, %v4462
    %v4464 = vsel %vm771, %v4434, 0.0
    %v4465 = vadd.f32 %v4463, %v4464
    %v4466 = vrot.slane %v4465, 4
    %v4467 = vadd.f32 %v4465, %v4466
    %v4468 = vrot.slane %v4467, 2
    %v4469 = vadd.f32 %v4467, %v4468
    %v4470 = vrot.slane %v4469, 1
    %v4471 = vadd.f32 %v4469, %v4470
    %v4472 = vmul.f32 %v4471, 0.0078125
    %v4473 = vadd.f32 %v4472, 1e-05
    %v4474 = vrsqrt.pop %v4473
    %v4475 = vmul.f32 %v4403, %v4474
    %v4476 = vmul.f32 %v4404, %v4474
    %v4477 = vmul.f32 %v4405, %v4474
    %v4478 = vmul.f32 %v4406, %v4474
    %v4479 = vmul.f32 %v4407, %v4474
    %v4480 = vmul.f32 %v4408, %v4474
    %v4481 = vmul.f32 %v4409, %v4474
    %v4482 = vmul.f32 %v4410, %v4474
    %v4483 = vmul.f32 %v4411, %v4474
    %v4484 = vmul.f32 %v4412, %v4474
    %v4485 = vmul.f32 %v4413, %v4474
    %v4486 = vmul.f32 %v4414, %v4474
    %v4487 = vmul.f32 %v4415, %v4474
    %v4488 = vmul.f32 %v4416, %v4474
    %v4489 = vmul.f32 %v4417, %v4474
    %v4490 = vmul.f32 %v4418, %v4474
    %v4492 = vlaneseq
    %v4493 = vshrl.u32 %v4492, 7
    %v4494 = vsub.s32 0, %v4493
    %v4495 = vrot.slane %v4363, %v4494
    %v4497 = vmul.f32 %v4475, %v4495
    %v4498 = vmul.f32 %v4476, %v4495
    %v4499 = vmul.f32 %v4477, %v4495
    %v4500 = vmul.f32 %v4478, %v4495
    %v4501 = vmul.f32 %v4479, %v4495
    %v4502 = vmul.f32 %v4480, %v4495
    %v4503 = vmul.f32 %v4481, %v4495
    %v4504 = vmul.f32 %v4482, %v4495
    %v4505 = vmul.f32 %v4483, %v4495
    %v4506 = vmul.f32 %v4484, %v4495
    %v4507 = vmul.f32 %v4485, %v4495
    %v4508 = vmul.f32 %v4486, %v4495
    %v4509 = vmul.f32 %v4487, %v4495
    %v4510 = vmul.f32 %v4488, %v4495
    %v4511 = vmul.f32 %v4489, %v4495
    %v4512 = vmul.f32 %v4490, %v4495
    %v4514 = vlaneseq
    %v4515 = vshrl.u32 %v4514, 7
    %v4516 = vsub.s32 0, %v4515
    %v4517 = vrot.slane %v4364, %v4516
    %v4519 = vadd.f32 %v4497, %v4517
    %v4520 = vadd.f32 %v4498, %v4517
    %v4521 = vadd.f32 %v4499, %v4517
    %v4522 = vadd.f32 %v4500, %v4517
    %v4523 = vadd.f32 %v4501, %v4517
    %v4524 = vadd.f32 %v4502, %v4517
    %v4525 = vadd.f32 %v4503, %v4517
    %v4526 = vadd.f32 %v4504, %v4517
    %v4527 = vadd.f32 %v4505, %v4517
    %v4528 = vadd.f32 %v4506, %v4517
    %v4529 = vadd.f32 %v4507, %v4517
    %v4530 = vadd.f32 %v4508, %v4517
    %v4531 = vadd.f32 %v4509, %v4517
    %v4532 = vadd.f32 %v4510, %v4517
    %v4533 = vadd.f32 %v4511, %v4517
    %v4534 = vadd.f32 %v4512, %v4517
    %v4535 = vmax.f32 %v1310, %v1342
    %v4536 = vmax.f32 %v1311, %v1343
    %v4537 = vmax.f32 %v1312, %v1344
    %v4538 = vmax.f32 %v1313, %v1345
    %v4539 = vmax.f32 %v1314, %v1346
    %v4540 = vmax.f32 %v1315, %v1347
    %v4541 = vmax.f32 %v1316, %v1348
    %v4542 = vmax.f32 %v1317, %v1349
    %v4543 = vmax.f32 %v1318, %v1350
    %v4544 = vmax.f32 %v1319, %v1351
    %v4545 = vmax.f32 %v1320, %v1352
    %v4546 = vmax.f32 %v1321, %v1353
    %v4547 = vmax.f32 %v1322, %v1354
    %v4548 = vmax.f32 %v1323, %v1355
    %v4549 = vmax.f32 %v1324, %v1356
    %v4550 = vmax.f32 %v1325, %v1357
    %v4551 = vmax.f32 %v1326, %v1358
    %v4552 = vmax.f32 %v1327, %v1359
    %v4553 = vmax.f32 %v1328, %v1360
    %v4554 = vmax.f32 %v1329, %v1361
    %v4555 = vmax.f32 %v1330, %v1362
    %v4556 = vmax.f32 %v1331, %v1363
    %v4557 = vmax.f32 %v1332, %v1364
    %v4558 = vmax.f32 %v1333, %v1365
    %v4559 = vmax.f32 %v1334, %v1366
    %v4560 = vmax.f32 %v1335, %v1367
    %v4561 = vmax.f32 %v1336, %v1368
    %v4562 = vmax.f32 %v1337, %v1369
    %v4563 = vmax.f32 %v1338, %v1370
    %v4564 = vmax.f32 %v1339, %v1371
    %v4565 = vmax.f32 %v1340, %v1372
    %v4566 = vmax.f32 %v1341, %v1373
    %v4567 = vsel %vm2016, %v1887, %v4535
    %v4568 = vsel %vm2017, %v1886, %v4536
    %v4569 = vsel %vm2018, %v1885, %v4537
    %v4570 = vsel %vm2019, %v1884, %v4538
    %v4571 = vsel %vm2020, %v1883, %v4539
    %v4572 = vsel %vm2021, %v1882, %v4540
    %v4573 = vsel %vm2022, %v1881, %v4541
    %v4574 = vsel %vm2023, %v1880, %v4542
    %v4575 = vsel %vm2024, %v1879, %v4543
    %v4576 = vsel %vm2025, %v1878, %v4544
    %v4577 = vsel %vm2026, %v1877, %v4545
    %v4578 = vsel %vm2027, %v1876, %v4546
    %v4579 = vsel %vm2028, %v1875, %v4547
    %v4580 = vsel %vm2029, %v1874, %v4548
    %v4581 = vsel %vm2030, %v1873, %v4549
    %v4582 = vsel %vm2031, %v1872, %v4550
    %v4583 = vsel %vm2032, %v1871, %v4551
    %v4584 = vsel %vm2033, %v1870, %v4552
    %v4585 = vsel %vm2034, %v1869, %v4553
    %v4586 = vsel %vm2035, %v1868, %v4554
    %v4587 = vsel %vm2036, %v1867, %v4555
    %v4588 = vsel %vm2037, %v1866, %v4556
    %v4589 = vsel %vm2038, %v1865, %v4557
    %v4590 = vsel %vm2039, %v1864, %v4558
    %v4591 = vsel %vm2040, %v1863, %v4559
    %v4592 = vsel %vm2041, %v1862, %v4560
    %v4593 = vsel %vm2042, %v1861, %v4561
    %v4594 = vsel %vm2043, %v1860, %v4562
    %v4595 = vsel %vm2044, %v1859, %v4563
    %v4596 = vsel %vm2045, %v1858, %v4564
    %v4597 = vsel %vm2046, %v1857, %v4565
    %v4598 = vsel %vm2047, %v1856, %v4566
    %v4599 = vmax.f32 %v4535, %v4567
    %v4600 = vmax.f32 %v4536, %v4568
    %v4601 = vmax.f32 %v4537, %v4569
    %v4602 = vmax.f32 %v4538, %v4570
    %v4603 = vmax.f32 %v4539, %v4571
    %v4604 = vmax.f32 %v4540, %v4572
    %v4605 = vmax.f32 %v4541, %v4573
    %v4606 = vmax.f32 %v4542, %v4574
    %v4607 = vmax.f32 %v4543, %v4575
    %v4608 = vmax.f32 %v4544, %v4576
    %v4609 = vmax.f32 %v4545, %v4577
    %v4610 = vmax.f32 %v4546, %v4578
    %v4611 = vmax.f32 %v4547, %v4579
    %v4612 = vmax.f32 %v4548, %v4580
    %v4613 = vmax.f32 %v4549, %v4581
    %v4614 = vmax.f32 %v4550, %v4582
    %v4615 = vmax.f32 %v4551, %v4583
    %v4616 = vmax.f32 %v4552, %v4584
    %v4617 = vmax.f32 %v4553, %v4585
    %v4618 = vmax.f32 %v4554, %v4586
    %v4619 = vmax.f32 %v4555, %v4587
    %v4620 = vmax.f32 %v4556, %v4588
    %v4621 = vmax.f32 %v4557, %v4589
    %v4622 = vmax.f32 %v4558, %v4590
    %v4623 = vmax.f32 %v4559, %v4591
    %v4624 = vmax.f32 %v4560, %v4592
    %v4625 = vmax.f32 %v4561, %v4593
    %v4626 = vmax.f32 %v4562, %v4594
    %v4627 = vmax.f32 %v4563, %v4595
    %v4628 = vmax.f32 %v4564, %v4596
    %v4629 = vmax.f32 %v4565, %v4597
    %v4630 = vmax.f32 %v4566, %v4598
    %v4631 = vmax.f32 %v4599, %v4615
    %v4632 = vmax.f32 %v4600, %v4616
    %v4633 = vmax.f32 %v4601, %v4617
    %v4634 = vmax.f32 %v4602, %v4618
    %v4635 = vmax.f32 %v4603, %v4619
    %v4636 = vmax.f32 %v4604, %v4620
    %v4637 = vmax.f32 %v4605, %v4621
    %v4638 = vmax.f32 %v4606, %v4622
    %v4639 = vmax.f32 %v4607, %v4623
    %v4640 = vmax.f32 %v4608, %v4624
    %v4641 = vmax.f32 %v4609, %v4625
    %v4642 = vmax.f32 %v4610, %v4626
    %v4643 = vmax.f32 %v4611, %v4627
    %v4644 = vmax.f32 %v4612, %v4628
    %v4645 = vmax.f32 %v4613, %v4629
    %v4646 = vmax.f32 %v4614, %v4630
    %v4647 = vsel %vm3323, %v4630, %v4631
    %v4648 = vsel %vm3324, %v4615, %v4632
    %v4649 = vsel %vm3325, %v4616, %v4633
    %v4650 = vsel %vm3326, %v4617, %v4634
    %v4651 = vsel %vm3327, %v4618, %v4635
    %v4652 = vsel %vm3328, %v4619, %v4636
    %v4653 = vsel %vm3329, %v4620, %v4637
    %v4654 = vsel %vm3330, %v4621, %v4638
    %v4655 = vsel %vm3331, %v4622, %v4639
    %v4656 = vsel %vm3332, %v4623, %v4640
    %v4657 = vsel %vm3333, %v4624, %v4641
    %v4658 = vsel %vm3334, %v4625, %v4642
    %v4659 = vsel %vm3335, %v4626, %v4643
    %v4660 = vsel %vm3336, %v4627, %v4644
    %v4661 = vsel %vm3337, %v4628, %v4645
    %v4662 = vsel %vm3338, %v4629, %v4646
    %v4663 = vmax.f32 %v4631, %v4647
    %v4664 = vmax.f32 %v4632, %v4648
    %v4665 = vmax.f32 %v4633, %v4649
    %v4666 = vmax.f32 %v4634, %v4650
    %v4667 = vmax.f32 %v4635, %v4651
    %v4668 = vmax.f32 %v4636, %v4652
    %v4669 = vmax.f32 %v4637, %v4653
    %v4670 = vmax.f32 %v4638, %v4654
    %v4671 = vmax.f32 %v4639, %v4655
    %v4672 = vmax.f32 %v4640, %v4656
    %v4673 = vmax.f32 %v4641, %v4657
    %v4674 = vmax.f32 %v4642, %v4658
    %v4675 = vmax.f32 %v4643, %v4659
    %v4676 = vmax.f32 %v4644, %v4660
    %v4677 = vmax.f32 %v4645, %v4661
    %v4678 = vmax.f32 %v4646, %v4662
    %v4679 = vld [vmem:[%s15] sm:$0x1]
    %v4680 = vld [vmem:[%s16] sm:$0x1]
    %v4681 = vsel %vm771, %v4663, 0.0
    %v4682 = vsel %vm771, %v4664, 0.0
    %v4683 = vadd.f32 %v4681, %v4682
    %v4684 = vsel %vm771, %v4665, 0.0
    %v4685 = vadd.f32 %v4683, %v4684
    %v4686 = vsel %vm771, %v4666, 0.0
    %v4687 = vadd.f32 %v4685, %v4686
    %v4688 = vsel %vm771, %v4667, 0.0
    %v4689 = vadd.f32 %v4687, %v4688
    %v4690 = vsel %vm771, %v4668, 0.0
    %v4691 = vadd.f32 %v4689, %v4690
    %v4692 = vsel %vm771, %v4669, 0.0
    %v4693 = vadd.f32 %v4691, %v4692
    %v4694 = vsel %vm771, %v4670, 0.0
    %v4695 = vadd.f32 %v4693, %v4694
    %v4696 = vsel %vm771, %v4671, 0.0
    %v4697 = vadd.f32 %v4695, %v4696
    %v4698 = vsel %vm771, %v4672, 0.0
    %v4699 = vadd.f32 %v4697, %v4698
    %v4700 = vsel %vm771, %v4673, 0.0
    %v4701 = vadd.f32 %v4699, %v4700
    %v4702 = vsel %vm771, %v4674, 0.0
    %v4703 = vadd.f32 %v4701, %v4702
    %v4704 = vsel %vm771, %v4675, 0.0
    %v4705 = vadd.f32 %v4703, %v4704
    %v4706 = vsel %vm771, %v4676, 0.0
    %v4707 = vadd.f32 %v4705, %v4706
    %v4708 = vsel %vm771, %v4677, 0.0
    %v4709 = vadd.f32 %v4707, %v4708
    %v4710 = vsel %vm771, %v4678, 0.0
    %v4711 = vadd.f32 %v4709, %v4710
    %v4712 = vrot.slane %v4711, 4
    %v4713 = vadd.f32 %v4711, %v4712
    %v4714 = vrot.slane %v4713, 2
    %v4715 = vadd.f32 %v4713, %v4714
    %v4716 = vrot.slane %v4715, 1
    %v4717 = vadd.f32 %v4715, %v4716
    %v4718 = vmul.f32 %v4717, 0.0078125
    %v4719 = vsub.f32 %v4663, %v4718
    %v4720 = vsub.f32 %v4664, %v4718
    %v4721 = vsub.f32 %v4665, %v4718
    %v4722 = vsub.f32 %v4666, %v4718
    %v4723 = vsub.f32 %v4667, %v4718
    %v4724 = vsub.f32 %v4668, %v4718
    %v4725 = vsub.f32 %v4669, %v4718
    %v4726 = vsub.f32 %v4670, %v4718
    %v4727 = vsub.f32 %v4671, %v4718
    %v4728 = vsub.f32 %v4672, %v4718
    %v4729 = vsub.f32 %v4673, %v4718
    %v4730 = vsub.f32 %v4674, %v4718
    %v4731 = vsub.f32 %v4675, %v4718
    %v4732 = vsub.f32 %v4676, %v4718
    %v4733 = vsub.f32 %v4677, %v4718
    %v4734 = vsub.f32 %v4678, %v4718
    %v4735 = vmul.f32 %v4719, %v4719
    %v4736 = vmul.f32 %v4720, %v4720
    %v4737 = vmul.f32 %v4721, %v4721
    %v4738 = vmul.f32 %v4722, %v4722
    %v4739 = vmul.f32 %v4723, %v4723
    %v4740 = vmul.f32 %v4724, %v4724
    %v4741 = vmul.f32 %v4725, %v4725
    %v4742 = vmul.f32 %v4726, %v4726
    %v4743 = vmul.f32 %v4727, %v4727
    %v4744 = vmul.f32 %v4728, %v4728
    %v4745 = vmul.f32 %v4729, %v4729
    %v4746 = vmul.f32 %v4730, %v4730
    %v4747 = vmul.f32 %v4731, %v4731
    %v4748 = vmul.f32 %v4732, %v4732
    %v4749 = vmul.f32 %v4733, %v4733
    %v4750 = vmul.f32 %v4734, %v4734
    %v4751 = vsel %vm771, %v4735, 0.0
    %v4752 = vsel %vm771, %v4736, 0.0
    %v4753 = vadd.f32 %v4751, %v4752
    %v4754 = vsel %vm771, %v4737, 0.0
    %v4755 = vadd.f32 %v4753, %v4754
    %v4756 = vsel %vm771, %v4738, 0.0
    %v4757 = vadd.f32 %v4755, %v4756
    %v4758 = vsel %vm771, %v4739, 0.0
    %v4759 = vadd.f32 %v4757, %v4758
    %v4760 = vsel %vm771, %v4740, 0.0
    %v4761 = vadd.f32 %v4759, %v4760
    %v4762 = vsel %vm771, %v4741, 0.0
    %v4763 = vadd.f32 %v4761, %v4762
    %v4764 = vsel %vm771, %v4742, 0.0
    %v4765 = vadd.f32 %v4763, %v4764
    %v4766 = vsel %vm771, %v4743, 0.0
    %v4767 = vadd.f32 %v4765, %v4766
    %v4768 = vsel %vm771, %v4744, 0.0
    %v4769 = vadd.f32 %v4767, %v4768
    %v4770 = vsel %vm771, %v4745, 0.0
    %v4771 = vadd.f32 %v4769, %v4770
    %v4772 = vsel %vm771, %v4746, 0.0
    %v4773 = vadd.f32 %v4771, %v4772
    %v4774 = vsel %vm771, %v4747, 0.0
    %v4775 = vadd.f32 %v4773, %v4774
    %v4776 = vsel %vm771, %v4748, 0.0
    %v4777 = vadd.f32 %v4775, %v4776
    %v4778 = vsel %vm771, %v4749, 0.0
    %v4779 = vadd.f32 %v4777, %v4778
    %v4780 = vsel %vm771, %v4750, 0.0
    %v4781 = vadd.f32 %v4779, %v4780
    %v4782 = vrot.slane %v4781, 4
    %v4783 = vadd.f32 %v4781, %v4782
    %v4784 = vrot.slane %v4783, 2
    %v4785 = vadd.f32 %v4783, %v4784
    %v4786 = vrot.slane %v4785, 1
    %v4787 = vadd.f32 %v4785, %v4786
    %v4788 = vmul.f32 %v4787, 0.0078125
    %v4789 = vadd.f32 %v4788, 1e-05
    %v4790 = vrsqrt.pop %v4789
    %v4791 = vmul.f32 %v4719, %v4790
    %v4792 = vmul.f32 %v4720, %v4790
    %v4793 = vmul.f32 %v4721, %v4790
    %v4794 = vmul.f32 %v4722, %v4790
    %v4795 = vmul.f32 %v4723, %v4790
    %v4796 = vmul.f32 %v4724, %v4790
    %v4797 = vmul.f32 %v4725, %v4790
    %v4798 = vmul.f32 %v4726, %v4790
    %v4799 = vmul.f32 %v4727, %v4790
    %v4800 = vmul.f32 %v4728, %v4790
    %v4801 = vmul.f32 %v4729, %v4790
    %v4802 = vmul.f32 %v4730, %v4790
    %v4803 = vmul.f32 %v4731, %v4790
    %v4804 = vmul.f32 %v4732, %v4790
    %v4805 = vmul.f32 %v4733, %v4790
    %v4806 = vmul.f32 %v4734, %v4790
    %v4808 = vlaneseq
    %v4809 = vshrl.u32 %v4808, 7
    %v4810 = vsub.s32 0, %v4809
    %v4811 = vrot.slane %v4679, %v4810
    %v4813 = vmul.f32 %v4791, %v4811
    %v4814 = vmul.f32 %v4792, %v4811
    %v4815 = vmul.f32 %v4793, %v4811
    %v4816 = vmul.f32 %v4794, %v4811
    %v4817 = vmul.f32 %v4795, %v4811
    %v4818 = vmul.f32 %v4796, %v4811
    %v4819 = vmul.f32 %v4797, %v4811
    %v4820 = vmul.f32 %v4798, %v4811
    %v4821 = vmul.f32 %v4799, %v4811
    %v4822 = vmul.f32 %v4800, %v4811
    %v4823 = vmul.f32 %v4801, %v4811
    %v4824 = vmul.f32 %v4802, %v4811
    %v4825 = vmul.f32 %v4803, %v4811
    %v4826 = vmul.f32 %v4804, %v4811
    %v4827 = vmul.f32 %v4805, %v4811
    %v4828 = vmul.f32 %v4806, %v4811
    %v4830 = vlaneseq
    %v4831 = vshrl.u32 %v4830, 7
    %v4832 = vsub.s32 0, %v4831
    %v4833 = vrot.slane %v4680, %v4832
    %v4835 = vadd.f32 %v4813, %v4833
    %v4836 = vadd.f32 %v4814, %v4833
    %v4837 = vadd.f32 %v4815, %v4833
    %v4838 = vadd.f32 %v4816, %v4833
    %v4839 = vadd.f32 %v4817, %v4833
    %v4840 = vadd.f32 %v4818, %v4833
    %v4841 = vadd.f32 %v4819, %v4833
    %v4842 = vadd.f32 %v4820, %v4833
    %v4843 = vadd.f32 %v4821, %v4833
    %v4844 = vadd.f32 %v4822, %v4833
    %v4845 = vadd.f32 %v4823, %v4833
    %v4846 = vadd.f32 %v4824, %v4833
    %v4847 = vadd.f32 %v4825, %v4833
    %v4848 = vadd.f32 %v4826, %v4833
    %v4849 = vadd.f32 %v4827, %v4833
    %v4850 = vadd.f32 %v4828, %v4833
    %4851 = vst.msk [vmem:[#allocation2] sm:$0xff] %vm771, %v4519
    %4852 = vst.msk [vmem:[#allocation2 + $0x8] sm:$0xff] %vm771, %v4520
    %4853 = vst.msk [vmem:[#allocation2 + $0x10] sm:$0xff] %vm771, %v4521
    %4854 = vst.msk [vmem:[#allocation2 + $0x18] sm:$0xff] %vm771, %v4522
    %4855 = vst.msk [vmem:[#allocation2 + $0x20] sm:$0xff] %vm771, %v4523
    %4856 = vst.msk [vmem:[#allocation2 + $0x28] sm:$0xff] %vm771, %v4524
    %4857 = vst.msk [vmem:[#allocation2 + $0x30] sm:$0xff] %vm771, %v4525
    %4858 = vst.msk [vmem:[#allocation2 + $0x38] sm:$0xff] %vm771, %v4526
    %4859 = vst.msk [vmem:[#allocation2 + $0x40] sm:$0xff] %vm771, %v4527
    %4860 = vst.msk [vmem:[#allocation2 + $0x48] sm:$0xff] %vm771, %v4528
    %4861 = vst.msk [vmem:[#allocation2 + $0x50] sm:$0xff] %vm771, %v4529
    %4862 = vst.msk [vmem:[#allocation2 + $0x58] sm:$0xff] %vm771, %v4530
    %4863 = vst.msk [vmem:[#allocation2 + $0x60] sm:$0xff] %vm771, %v4531
    %4864 = vst.msk [vmem:[#allocation2 + $0x68] sm:$0xff] %vm771, %v4532
    %4865 = vst.msk [vmem:[#allocation2 + $0x70] sm:$0xff] %vm771, %v4533
    %4866 = vst.msk [vmem:[#allocation2 + $0x78] sm:$0xff] %vm771, %v4534
    %4883 = vrot.lane.b32.xlu0 %v4835, 64
    %v4884 = vpop.permute.xlu0 %4883
    %4885 = vrot.lane.b32.xlu0 %v4836, 64
    %v4886 = vpop.permute.xlu0 %4885
    %4887 = vrot.lane.b32.xlu0 %v4837, 64
    %v4888 = vpop.permute.xlu0 %4887
    %4889 = vrot.lane.b32.xlu0 %v4838, 64
    %v4890 = vpop.permute.xlu0 %4889
    %4891 = vrot.lane.b32.xlu0 %v4839, 64
    %v4892 = vpop.permute.xlu0 %4891
    %4893 = vrot.lane.b32.xlu0 %v4840, 64
    %v4894 = vpop.permute.xlu0 %4893
    %4895 = vrot.lane.b32.xlu0 %v4841, 64
    %v4896 = vpop.permute.xlu0 %4895
    %4897 = vrot.lane.b32.xlu0 %v4842, 64
    %v4898 = vpop.permute.xlu0 %4897
    %4899 = vrot.lane.b32.xlu0 %v4843, 64
    %v4900 = vpop.permute.xlu0 %4899
    %4901 = vrot.lane.b32.xlu0 %v4844, 64
    %v4902 = vpop.permute.xlu0 %4901
    %4903 = vrot.lane.b32.xlu0 %v4845, 64
    %v4904 = vpop.permute.xlu0 %4903
    %4905 = vrot.lane.b32.xlu0 %v4846, 64
    %v4906 = vpop.permute.xlu0 %4905
    %4907 = vrot.lane.b32.xlu0 %v4847, 64
    %v4908 = vpop.permute.xlu0 %4907
    %4909 = vrot.lane.b32.xlu0 %v4848, 64
    %v4910 = vpop.permute.xlu0 %4909
    %4911 = vrot.lane.b32.xlu0 %v4849, 64
    %v4912 = vpop.permute.xlu0 %4911
    %4913 = vrot.lane.b32.xlu0 %v4850, 64
    %v4914 = vpop.permute.xlu0 %4913
    %vm4931 = vcmask 1048064
    %4932 = vst.msk [vmem:[#allocation2] sm:$0xff] %vm4931, %v4884
    %4933 = vst.msk [vmem:[#allocation2 + $0x8] sm:$0xff] %vm4931, %v4886
    %4934 = vst.msk [vmem:[#allocation2 + $0x10] sm:$0xff] %vm4931, %v4888
    %4935 = vst.msk [vmem:[#allocation2 + $0x18] sm:$0xff] %vm4931, %v4890
    %4936 = vst.msk [vmem:[#allocation2 + $0x20] sm:$0xff] %vm4931, %v4892
    %4937 = vst.msk [vmem:[#allocation2 + $0x28] sm:$0xff] %vm4931, %v4894
    %4938 = vst.msk [vmem:[#allocation2 + $0x30] sm:$0xff] %vm4931, %v4896
    %4939 = vst.msk [vmem:[#allocation2 + $0x38] sm:$0xff] %vm4931, %v4898
    %4940 = vst.msk [vmem:[#allocation2 + $0x40] sm:$0xff] %vm4931, %v4900
    %4941 = vst.msk [vmem:[#allocation2 + $0x48] sm:$0xff] %vm4931, %v4902
    %4942 = vst.msk [vmem:[#allocation2 + $0x50] sm:$0xff] %vm4931, %v4904
    %4943 = vst.msk [vmem:[#allocation2 + $0x58] sm:$0xff] %vm4931, %v4906
    %4944 = vst.msk [vmem:[#allocation2 + $0x60] sm:$0xff] %vm4931, %v4908
    %4945 = vst.msk [vmem:[#allocation2 + $0x68] sm:$0xff] %vm4931, %v4910
    %4946 = vst.msk [vmem:[#allocation2 + $0x70] sm:$0xff] %vm4931, %v4912
    %4947 = vst.msk [vmem:[#allocation2 + $0x78] sm:$0xff] %vm4931, %v4914
    // Predicated region
    $region70: #{gdas_reduction_cell.1} parent=1 // pred_check
      _
    $region71: #{gdas_reduction_cell.1} parent=1 // pred_check_branch
      %4949 = sbr.rel (0) target = $region73
    $region72: #{gdas_reduction_cell.1} parent=1 // pred_region
      %s4951 = ssub.s32 2048, 2048
      %4952 = vsyncadd [#allocation3], %s4951
      %s4953 = sshll.u32 [#allocation2], 4
      %s4954 = int_to_ptr.vmem [resolvable:$true] %s4953
      %4959 = dma.vmem_to_hbm [thread:$0]  %s4954, 2048, %s17, [#allocation3], 128, 128, 8
    $region73: #{gdas_reduction_cell.1} parent=1 // pred_fallthru
      _
    // Predicated region
    $region74: #{gdas_reduction_cell.1} parent=1 // pred_check
      _
    $region75: #{gdas_reduction_cell.1} parent=1 // pred_check_branch
      %4961 = sbr.rel (0) target = $region77
    $region76: #{gdas_reduction_cell.1} parent=1 // pred_region
      %4962 = dma.done [#allocation3], 2048
    $region77: #{gdas_reduction_cell.1} parent=1 // pred_fallthru
      _
    %4963 = vsyncpa [#allocation3], 1

</llo_original>
